<compile_context>
chip_gen: v5e
topology: v5e:2x2
jax: 0.10.0
libtpu: 0.0.40
codegen_flags: <defaults>
</compile_context>

<pallas_src>
import jax
import jax.numpy as jnp
from jax.experimental import pallas as pl


# ----------------------------------------------------------------------------
# Fused kernel
# ----------------------------------------------------------------------------
def fused_mlstm_fcn_kernel(
        len_ref, xtb_ref, xc1_ref,                     # lengths, x (T,B,C), conv1 im2col
        wih_ref, whh_ref, bl_ref,                      # LSTM params
        c1w_ref, c1b_ref, c2w_ref, c2b_ref, c3w_ref, c3b_ref,   # convs (BN folded)
        s1w1_ref, s1w2_ref, s2w1_ref, s2w2_ref,        # SE layers
        fwl_ref, fwc_ref, fb_ref,                      # final Linear (split)
        o_ref):                                        # (B, n_classes) output
    T, B, Cin = xtb_ref.shape
    H = whh_ref.shape[0]
    H4 = 4 * H

    # ------------------------- LSTM branch ----------------------------------
    # Hoisted input projection: one matmul covering all timesteps, kept as a
    # VALUE (only ~T padded vregs; no VMEM scratch round trip).
    gx = jax.lax.dot_general(
        xtb_ref[...], wih_ref[...],
        dimension_numbers=(((2,), (0,)), ((), ())),
        preferred_element_type=jnp.float32) + bl_ref[...]       # (T, B, 4H)
    # Pre-extract per-step gate inputs (static slices, off the critical path).
    gxs = [gx[t] for t in range(T)]

    whh = whh_ref[...]                                          # (H, 4H), hoisted

    # pack_padded_sequence semantics: steps past batch_tlength do not update
    # (h, c).  Mask hoisted: one iota/compare total, static slices per step.
    t_idx = jax.lax.broadcasted_iota(jnp.int32, (T, B, H), 0)
    upd_all = t_idx < len_ref[...][None, :, :]                  # (T, B, H) bool

    # Lane-pattern vectors so a single full-width sigmoid yields all gates:
    # i/f/o blocks -> sigmoid(x); g block -> 2*sigmoid(2x)-1 == tanh(x).
    lane = jax.lax.broadcasted_iota(jnp.int32, (B, H4), 1)
    g_block = (lane >= 2 * H) & (lane < 3 * H)
    pre_scale = jnp.where(g_block, jnp.float32(2.0), jnp.float32(1.0))
    post_mul = pre_scale
    post_add = jnp.where(g_block, jnp.float32(-1.0), jnp.float32(0.0))

    h = jnp.zeros((B, H), jnp.float32)
    c = jnp.zeros((B, H), jnp.float32)
    for t in range(T):          # T is small & static: full unroll
        gates = gxs[t] + jnp.dot(h, whh, preferred_element_type=jnp.float32)
        act = jax.nn.sigmoid(gates * pre_scale) * post_mul + post_add
        # PyTorch gate order: i, f, g, o (in-vreg lane extracts; XLU is idle)
        i_g = act[:, 0:H]
        f_g = act[:, H:2 * H]
        g_g = act[:, 2 * H:3 * H]         # == tanh of the g pre-activation
        o_g = act[:, 3 * H:4 * H]
        c_new = f_g * c + i_g * g_g
        h_new = o_g * jnp.tanh(c_new)
        upd = upd_all[t]
        h = jnp.where(upd, h_new, h)
        c = jnp.where(upd, c_new, c)
    h_last = h

    # ------------------------- FCN branch ------------------------------------
    # Eval-mode BatchNorm (bn1 reused 3x, as in the reference) is pre-folded
    # into the conv weights/biases in the wrapper: kernel does matmul + ReLU.
    def conv_taps_relu(x, w_ref, b_ref):
        # K accumulated lane-aligned (B,Tout,C)@(C,C) matmuls: MXU is idle so
        # the extra pushes are free and the wide lane-concat relayout is avoided.
        k = w_ref.shape[0]
        t_out = x.shape[1] - k + 1
        w = w_ref[...]
        acc = jax.lax.dot_general(
            x[:, 0:t_out, :], w[0],
            dimension_numbers=(((2,), (0,)), ((), ())),
            preferred_element_type=jnp.float32)
        for j in range(1, k):
            acc = acc + jax.lax.dot_general(
                x[:, j:j + t_out, :], w[j],
                dimension_numbers=(((2,), (0,)), ((), ())),
                preferred_element_type=jnp.float32)
        return jnp.maximum(acc + b_ref[...], 0.0)

    def se(x, w1_ref, w2_ref):
        s = jnp.mean(x, axis=1)                                 # (B, C)
        z = jnp.maximum(
            jnp.dot(s, w1_ref[...], preferred_element_type=jnp.float32), 0.0)
        g = jax.nn.sigmoid(
            jnp.dot(z, w2_ref[...], preferred_element_type=jnp.float32))
        return x * g[:, None, :]

    # conv1: im2col was precomputed in the wrapper -> a single matmul here.
    a = jnp.maximum(
        jax.lax.dot_general(
            xc1_ref[...], c1w_ref[...],
            dimension_numbers=(((2,), (0,)), ((), ())),
            preferred_element_type=jnp.float32) + c1b_ref[...], 0.0)
    a = se(a, s1w1_ref, s1w2_ref)
    a = conv_taps_relu(a, c2w_ref, c2b_ref)
    a = se(a, s2w1_ref, s2w2_ref)
    a = conv_taps_relu(a, c3w_ref, c3b_ref)

    # ------------------------- Head ------------------------------------------
    xm = jnp.mean(a, axis=1)                                    # (B, C)
    logits = (jnp.dot(h_last, fwl_ref[...], preferred_element_type=jnp.float32)
              + jnp.dot(xm, fwc_ref[...], preferred_element_type=jnp.float32)
              + fb_ref[...])                                    # (B, n_cls)
    m = jnp.max(logits, axis=1, keepdims=True)
    z = logits - m
    lse = jnp.log(jnp.sum(jnp.exp(z), axis=1, keepdims=True))
    o_ref[...] = (z - lse).astype(o_ref.dtype)


# ----------------------------------------------------------------------------
# Wrapper: single fused pallas_call
# ----------------------------------------------------------------------------
@jax.jit
def mlstm_fcn_forward(x, batch_tlength, params):
    B, T, Cin = x.shape
    H = params["w_hh"].shape[0]
    C = params["conv1_w"].shape[2]
    K1 = params["conv1_w"].shape[0]
    K2 = params["conv2_w"].shape[0]
    K3 = params["conv3_w"].shape[0]
    n_cls = params["fc_w_lstm"].shape[1]
    Cr = params["se1_w1"].shape[1]

    x_tb = jnp.transpose(x, (1, 0, 2))                  # time-major for LSTM
    len2d = batch_tlength.astype(jnp.int32).reshape(B, 1)

    # conv1 im2col precomputed outside the kernel (its input is the kernel's
    # own input, not an intermediate): (B, Tout1, K1*Cin).
    t1 = T - K1 + 1
    t2 = t1 - K2 + 1
    t3 = t2 - K3 + 1
    x_c1 = jnp.concatenate([x[:, j:j + t1, :] for j in range(K1)], axis=-1)

    # Fold eval-mode BatchNorm into the conv weights/biases (bn1 reused for
    # all three convs, as the reference forward does): y*scale + shift.
    eps = 1e-5
    scale = params["bn1_g"] * jax.lax.rsqrt(params["bn1_var"] + eps)   # (1, C)
    shift = params["bn1_b"] - params["bn1_mu"] * scale                 # (1, C)
    c1w = (params["conv1_w"] * scale).reshape(K1 * Cin, C)   # im2col-flattened
    c2w = params["conv2_w"] * scale                          # (K2, C, C)
    c3w = params["conv3_w"] * scale                          # (K3, C, C)
    c1b = params["conv1_b"] * scale + shift
    c2b = params["conv2_b"] * scale + shift
    c3b = params["conv3_b"] * scale + shift

    args = (len2d, x_tb, x_c1,
            params["w_ih"], params["w_hh"], params["b_lstm"],
            c1w, c1b, c2w, c2b, c3w, c3b,
            params["se1_w1"], params["se1_w2"],
            params["se2_w1"], params["se2_w2"],
            params["fc_w_lstm"], params["fc_w_conv"], params["fc_b"])

    # Rough cost hint so XLA can schedule surrounding graph work concurrently
    # with this short, latency-bound custom call.
    flops = (2 * T * B * Cin * 4 * H           # LSTM input projection
             + 2 * T * B * H * 4 * H           # recurrence matmuls
             + 16 * T * B * H                  # gate elementwise (rough)
             + 2 * B * t1 * (K1 * Cin) * C     # conv1 (im2col matmul)
             + 2 * B * t2 * K2 * C * C         # conv2
             + 2 * B * t3 * K3 * C * C         # conv3
             + 2 * 2 * 2 * B * C * Cr          # SE fc layers
             + 2 * B * (H + C) * n_cls)        # head
    transcendentals = T * B * 5 * H + 4 * B * C + B * n_cls
    bytes_accessed = (sum(int(a.size) * a.dtype.itemsize for a in args)
                      + B * n_cls * 4)

    return pl.pallas_call(
        fused_mlstm_fcn_kernel,
        out_shape=jax.ShapeDtypeStruct((B, n_cls), jnp.float32),
        cost_estimate=pl.CostEstimate(
            flops=int(flops),
            transcendentals=int(transcendentals),
            bytes_accessed=int(bytes_accessed)),
    )(*args)


# ----------------------------------------------------------------------------
# Deterministic parameter construction
# ----------------------------------------------------------------------------
def init_params(key, input_size, lstm_hidden, conv_size, k1, k2, k3,
                n_classes, reduction=16):
    keys = jax.random.split(key, 16)

    def rnd(k, shape, scale=0.1):
        return jax.random.normal(k, shape, dtype=jnp.float32) * scale

    C = conv_size
    Cr = max(C // reduction, 1)
    return {
        # LSTM (PyTorch gate order i,f,g,o; b = b_ih + b_hh folded)
        "w_ih": rnd(keys[0], (input_size, 4 * lstm_hidden)),
        "w_hh": rnd(keys[1], (lstm_hidden, 4 * lstm_hidden)),
        "b_lstm": rnd(keys[2], (1, 4 * lstm_hidden)),
        # Convs (weights stored as (K, Cin, Cout))
        "conv1_w": rnd(keys[3], (k1, input_size, C)),
        "conv1_b": rnd(keys[4], (1, C)),
        "conv2_w": rnd(keys[5], (k2, C, C)),
        "conv2_b": rnd(keys[6], (1, C)),
        "conv3_w": rnd(keys[7], (k3, C, C)),
        "conv3_b": rnd(keys[8], (1, C)),
        # BatchNorm1d (fresh module, eval mode defaults) — folded in wrapper
        "bn1_g": jnp.ones((1, C), jnp.float32),
        "bn1_b": jnp.zeros((1, C), jnp.float32),
        "bn1_mu": jnp.zeros((1, C), jnp.float32),
        "bn1_var": jnp.ones((1, C), jnp.float32),
        # SE layers (bias-free Linear layers)
        "se1_w1": rnd(keys[9], (C, Cr)),
        "se1_w2": rnd(keys[10], (Cr, C)),
        "se2_w1": rnd(keys[11], (C, Cr)),
        "se2_w2": rnd(keys[12], (Cr, C)),
        # Final Linear over [lstm_hidden || conv_size]
        "fc_w_lstm": rnd(keys[13], (lstm_hidden, n_classes)),
        "fc_w_conv": rnd(keys[14], (C, n_classes)),
        "fc_b": rnd(keys[15], (1, n_classes)),
    }


if __name__ == "__main__":
    # Small shapes consistent with the module's forward:
    # x: (batch, time, eeg_channels)
    B, T, CIN = 2, 16, 4
    LSTM_H = 32
    CONV = 32          # conv1_size = conv2_size = conv3_size (see notes)
    K1, K2, K3 = 8, 5, 3
    N_CLASSES = 5

    root = jax.random.PRNGKey(0)
    k_x, k_p = jax.random.split(root)

    x = jax.random.normal(k_x, (B, T, CIN), dtype=jnp.float32)
    batch_tlength = jnp.array([16, 12], dtype=jnp.int32)

    params = init_params(k_p, CIN, LSTM_H, CONV, K1, K2, K3, N_CLASSES)

    out = mlstm_fcn_forward(x, batch_tlength, params)
    out = jax.block_until_ready(out)

    assert out.shape == (B, N_CLASSES)
    assert bool(jnp.all(jnp.isfinite(out)))
    # log_softmax rows must sum to ~1 in prob space
    assert bool(jnp.allclose(jnp.sum(jnp.exp(out), axis=1), 1.0, atol=1e-4))
    print("KERNEL_OK")
</pallas_src>

<mosaic_0001>
module attributes {stable_mosaic.version = 11 : i64} {
  func.func @fused_mlstm_fcn_kernel(%arg0: memref<2x1xi32, #tpu.memory_space<vmem>>, %arg1: memref<16x2x4xf32, #tpu.memory_space<vmem>>, %arg2: memref<2x9x32xf32, #tpu.memory_space<vmem>>, %arg3: memref<4x128xf32, #tpu.memory_space<vmem>>, %arg4: memref<32x128xf32, #tpu.memory_space<vmem>>, %arg5: memref<1x128xf32, #tpu.memory_space<vmem>>, %arg6: memref<32x32xf32, #tpu.memory_space<vmem>>, %arg7: memref<1x32xf32, #tpu.memory_space<vmem>>, %arg8: memref<5x32x32xf32, #tpu.memory_space<vmem>>, %arg9: memref<1x32xf32, #tpu.memory_space<vmem>>, %arg10: memref<3x32x32xf32, #tpu.memory_space<vmem>>, %arg11: memref<1x32xf32, #tpu.memory_space<vmem>>, %arg12: memref<32x2xf32, #tpu.memory_space<vmem>>, %arg13: memref<2x32xf32, #tpu.memory_space<vmem>>, %arg14: memref<32x2xf32, #tpu.memory_space<vmem>>, %arg15: memref<2x32xf32, #tpu.memory_space<vmem>>, %arg16: memref<32x5xf32, #tpu.memory_space<vmem>>, %arg17: memref<32x5xf32, #tpu.memory_space<vmem>>, %arg18: memref<1x5xf32, #tpu.memory_space<vmem>>, %arg19: memref<2x5xf32, #tpu.memory_space<vmem>>) attributes {dimension_semantics = [], scalar_prefetch = 0 : i64, scratch_operands = 0 : i64, tpu.core_type = #tpu.core_type<tc>} {
    %c0 = arith.constant 0 : index
    %c0_0 = arith.constant 0 : index
    %c0_1 = arith.constant 0 : index
    %0 = vector.load %arg1[%c0, %c0_0, %c0_1] : memref<16x2x4xf32, #tpu.memory_space<vmem>>, vector<16x2x4xf32>
    %c0_2 = arith.constant 0 : index
    %c0_3 = arith.constant 0 : index
    %1 = vector.load %arg3[%c0_2, %c0_3] : memref<4x128xf32, #tpu.memory_space<vmem>>, vector<4x128xf32>
    %cst = arith.constant dense<0.000000e+00> : vector<16x2x128xf32>
    %2 = tpu.matmul %0, %1, %cst {dimension_numbers = #tpu.dot_dimension_numbers<[2], [0], [0, 1], [1], [0, 0, 0, 1, 1, 1], [], []>} : vector<16x2x4xf32>, vector<4x128xf32>, vector<16x2x128xf32> -> vector<16x2x128xf32>
    %c0_4 = arith.constant 0 : index
    %c0_5 = arith.constant 0 : index
    %3 = vector.load %arg5[%c0_4, %c0_5] : memref<1x128xf32, #tpu.memory_space<vmem>>, vector<1x128xf32>
    %4 = vector.shape_cast %3 : vector<1x128xf32> to vector<1x1x128xf32>
    %5 = vector.broadcast %4 : vector<1x1x128xf32> to vector<16x2x128xf32>
    %6 = arith.addf %2, %5 : vector<16x2x128xf32>
    %7 = vector.extract_strided_slice %6 {offsets = [0, 0, 0], sizes = [1, 2, 128], strides = [1, 1, 1]} : vector<16x2x128xf32> to vector<1x2x128xf32>
    %8 = vector.shape_cast %7 : vector<1x2x128xf32> to vector<2x128xf32>
    %9 = vector.extract_strided_slice %6 {offsets = [1, 0, 0], sizes = [1, 2, 128], strides = [1, 1, 1]} : vector<16x2x128xf32> to vector<1x2x128xf32>
    %10 = vector.shape_cast %9 : vector<1x2x128xf32> to vector<2x128xf32>
    %11 = vector.extract_strided_slice %6 {offsets = [2, 0, 0], sizes = [1, 2, 128], strides = [1, 1, 1]} : vector<16x2x128xf32> to vector<1x2x128xf32>
    %12 = vector.shape_cast %11 : vector<1x2x128xf32> to vector<2x128xf32>
    %13 = vector.extract_strided_slice %6 {offsets = [3, 0, 0], sizes = [1, 2, 128], strides = [1, 1, 1]} : vector<16x2x128xf32> to vector<1x2x128xf32>
    %14 = vector.shape_cast %13 : vector<1x2x128xf32> to vector<2x128xf32>
    %15 = vector.extract_strided_slice %6 {offsets = [4, 0, 0], sizes = [1, 2, 128], strides = [1, 1, 1]} : vector<16x2x128xf32> to vector<1x2x128xf32>
    %16 = vector.shape_cast %15 : vector<1x2x128xf32> to vector<2x128xf32>
    %17 = vector.extract_strided_slice %6 {offsets = [5, 0, 0], sizes = [1, 2, 128], strides = [1, 1, 1]} : vector<16x2x128xf32> to vector<1x2x128xf32>
    %18 = vector.shape_cast %17 : vector<1x2x128xf32> to vector<2x128xf32>
    %19 = vector.extract_strided_slice %6 {offsets = [6, 0, 0], sizes = [1, 2, 128], strides = [1, 1, 1]} : vector<16x2x128xf32> to vector<1x2x128xf32>
    %20 = vector.shape_cast %19 : vector<1x2x128xf32> to vector<2x128xf32>
    %21 = vector.extract_strided_slice %6 {offsets = [7, 0, 0], sizes = [1, 2, 128], strides = [1, 1, 1]} : vector<16x2x128xf32> to vector<1x2x128xf32>
    %22 = vector.shape_cast %21 : vector<1x2x128xf32> to vector<2x128xf32>
    %23 = vector.extract_strided_slice %6 {offsets = [8, 0, 0], sizes = [1, 2, 128], strides = [1, 1, 1]} : vector<16x2x128xf32> to vector<1x2x128xf32>
    %24 = vector.shape_cast %23 : vector<1x2x128xf32> to vector<2x128xf32>
    %25 = vector.extract_strided_slice %6 {offsets = [9, 0, 0], sizes = [1, 2, 128], strides = [1, 1, 1]} : vector<16x2x128xf32> to vector<1x2x128xf32>
    %26 = vector.shape_cast %25 : vector<1x2x128xf32> to vector<2x128xf32>
    %27 = vector.extract_strided_slice %6 {offsets = [10, 0, 0], sizes = [1, 2, 128], strides = [1, 1, 1]} : vector<16x2x128xf32> to vector<1x2x128xf32>
    %28 = vector.shape_cast %27 : vector<1x2x128xf32> to vector<2x128xf32>
    %29 = vector.extract_strided_slice %6 {offsets = [11, 0, 0], sizes = [1, 2, 128], strides = [1, 1, 1]} : vector<16x2x128xf32> to vector<1x2x128xf32>
    %30 = vector.shape_cast %29 : vector<1x2x128xf32> to vector<2x128xf32>
    %31 = vector.extract_strided_slice %6 {offsets = [12, 0, 0], sizes = [1, 2, 128], strides = [1, 1, 1]} : vector<16x2x128xf32> to vector<1x2x128xf32>
    %32 = vector.shape_cast %31 : vector<1x2x128xf32> to vector<2x128xf32>
    %33 = vector.extract_strided_slice %6 {offsets = [13, 0, 0], sizes = [1, 2, 128], strides = [1, 1, 1]} : vector<16x2x128xf32> to vector<1x2x128xf32>
    %34 = vector.shape_cast %33 : vector<1x2x128xf32> to vector<2x128xf32>
    %35 = vector.extract_strided_slice %6 {offsets = [14, 0, 0], sizes = [1, 2, 128], strides = [1, 1, 1]} : vector<16x2x128xf32> to vector<1x2x128xf32>
    %36 = vector.shape_cast %35 : vector<1x2x128xf32> to vector<2x128xf32>
    %37 = vector.extract_strided_slice %6 {offsets = [15, 0, 0], sizes = [1, 2, 128], strides = [1, 1, 1]} : vector<16x2x128xf32> to vector<1x2x128xf32>
    %38 = vector.shape_cast %37 : vector<1x2x128xf32> to vector<2x128xf32>
    %c0_6 = arith.constant 0 : index
    %c0_7 = arith.constant 0 : index
    %39 = vector.load %arg4[%c0_6, %c0_7] : memref<32x128xf32, #tpu.memory_space<vmem>>, vector<32x128xf32>
    %40 = tpu.iota {dimensions = array<i32: 0>} : vector<16x2x32xi32>
    %c0_8 = arith.constant 0 : index
    %c0_9 = arith.constant 0 : index
    %41 = vector.load %arg0[%c0_8, %c0_9] : memref<2x1xi32, #tpu.memory_space<vmem>>, vector<2x1xi32>
    %42 = vector.shape_cast %41 : vector<2x1xi32> to vector<1x2x1xi32>
    %43 = vector.broadcast %42 : vector<1x2x1xi32> to vector<16x2x32xi32>
    %44 = arith.cmpi slt, %40, %43 : vector<16x2x32xi32>
    %45 = tpu.iota {dimensions = array<i32: 1>} : vector<2x128xi32>
    %c64_i32 = arith.constant 64 : i32
    %46 = vector.broadcast %c64_i32 : i32 to vector<2x128xi32>
    %47 = arith.cmpi sge, %45, %46 : vector<2x128xi32>
    %c96_i32 = arith.constant 96 : i32
    %48 = vector.broadcast %c96_i32 : i32 to vector<2x128xi32>
    %49 = arith.cmpi slt, %45, %48 : vector<2x128xi32>
    %50 = arith.andi %47, %49 : vector<2x128xi1>
    %cst_10 = arith.constant 2.000000e+00 : f32
    %cst_11 = arith.constant 1.000000e+00 : f32
    %51 = vector.broadcast %cst_10 : f32 to vector<2x128xf32>
    %52 = vector.broadcast %cst_11 : f32 to vector<2x128xf32>
    %53 = arith.select %50, %51, %52 : vector<2x128xi1>, vector<2x128xf32>
    %cst_12 = arith.constant -1.000000e+00 : f32
    %cst_13 = arith.constant 0.000000e+00 : f32
    %54 = vector.broadcast %cst_12 : f32 to vector<2x128xf32>
    %55 = vector.broadcast %cst_13 : f32 to vector<2x128xf32>
    %56 = arith.select %50, %54, %55 : vector<2x128xi1>, vector<2x128xf32>
    %cst_14 = arith.constant 0.000000e+00 : f32
    %57 = vector.broadcast %cst_14 : f32 to vector<2x32xf32>
    %cst_15 = arith.constant 0.000000e+00 : f32
    %58 = vector.broadcast %cst_15 : f32 to vector<2x32xf32>
    %cst_16 = arith.constant dense<0.000000e+00> : vector<2x128xf32>
    %59 = tpu.matmul %57, %39, %cst_16 {dimension_numbers = #tpu.dot_dimension_numbers<[1], [0], [0], [1], [0, 0, 1, 1], [], []>} : vector<2x32xf32>, vector<32x128xf32>, vector<2x128xf32> -> vector<2x128xf32>
    %60 = arith.addf %8, %59 : vector<2x128xf32>
    %61 = arith.mulf %60, %53 : vector<2x128xf32>
    %62 = arith.negf %61 : vector<2x128xf32>
    %63 = math.exp %62 : vector<2x128xf32>
    %cst_17 = arith.constant 1.000000e+00 : f32
    %64 = vector.broadcast %cst_17 : f32 to vector<2x128xf32>
    %65 = arith.addf %64, %63 : vector<2x128xf32>
    %66 = arith.divf %64, %65 : vector<2x128xf32>
    %67 = arith.mulf %66, %53 : vector<2x128xf32>
    %68 = arith.addf %67, %56 : vector<2x128xf32>
    %69 = vector.extract_strided_slice %68 {offsets = [0, 0], sizes = [2, 32], strides = [1, 1]} : vector<2x128xf32> to vector<2x32xf32>
    %70 = vector.extract_strided_slice %68 {offsets = [0, 32], sizes = [2, 32], strides = [1, 1]} : vector<2x128xf32> to vector<2x32xf32>
    %71 = vector.extract_strided_slice %68 {offsets = [0, 64], sizes = [2, 32], strides = [1, 1]} : vector<2x128xf32> to vector<2x32xf32>
    %72 = vector.extract_strided_slice %68 {offsets = [0, 96], sizes = [2, 32], strides = [1, 1]} : vector<2x128xf32> to vector<2x32xf32>
    %73 = arith.mulf %70, %58 : vector<2x32xf32>
    %74 = arith.mulf %69, %71 : vector<2x32xf32>
    %75 = arith.addf %73, %74 : vector<2x32xf32>
    %76 = math.tanh %75 : vector<2x32xf32>
    %77 = arith.mulf %72, %76 : vector<2x32xf32>
    %78 = vector.extract_strided_slice %44 {offsets = [0, 0, 0], sizes = [1, 2, 32], strides = [1, 1, 1]} : vector<16x2x32xi1> to vector<1x2x32xi1>
    %79 = vector.shape_cast %78 : vector<1x2x32xi1> to vector<2x32xi1>
    %80 = arith.select %79, %77, %57 : vector<2x32xi1>, vector<2x32xf32>
    %81 = arith.select %79, %75, %58 : vector<2x32xi1>, vector<2x32xf32>
    %cst_18 = arith.constant dense<0.000000e+00> : vector<2x128xf32>
    %82 = tpu.matmul %80, %39, %cst_18 {dimension_numbers = #tpu.dot_dimension_numbers<[1], [0], [0], [1], [0, 0, 1, 1], [], []>} : vector<2x32xf32>, vector<32x128xf32>, vector<2x128xf32> -> vector<2x128xf32>
    %83 = arith.addf %10, %82 : vector<2x128xf32>
    %84 = arith.mulf %83, %53 : vector<2x128xf32>
    %85 = arith.negf %84 : vector<2x128xf32>
    %86 = math.exp %85 : vector<2x128xf32>
    %cst_19 = arith.constant 1.000000e+00 : f32
    %87 = vector.broadcast %cst_19 : f32 to vector<2x128xf32>
    %88 = arith.addf %87, %86 : vector<2x128xf32>
    %89 = arith.divf %87, %88 : vector<2x128xf32>
    %90 = arith.mulf %89, %53 : vector<2x128xf32>
    %91 = arith.addf %90, %56 : vector<2x128xf32>
    %92 = vector.extract_strided_slice %91 {offsets = [0, 0], sizes = [2, 32], strides = [1, 1]} : vector<2x128xf32> to vector<2x32xf32>
    %93 = vector.extract_strided_slice %91 {offsets = [0, 32], sizes = [2, 32], strides = [1, 1]} : vector<2x128xf32> to vector<2x32xf32>
    %94 = vector.extract_strided_slice %91 {offsets = [0, 64], sizes = [2, 32], strides = [1, 1]} : vector<2x128xf32> to vector<2x32xf32>
    %95 = vector.extract_strided_slice %91 {offsets = [0, 96], sizes = [2, 32], strides = [1, 1]} : vector<2x128xf32> to vector<2x32xf32>
    %96 = arith.mulf %93, %81 : vector<2x32xf32>
    %97 = arith.mulf %92, %94 : vector<2x32xf32>
    %98 = arith.addf %96, %97 : vector<2x32xf32>
    %99 = math.tanh %98 : vector<2x32xf32>
    %100 = arith.mulf %95, %99 : vector<2x32xf32>
    %101 = vector.extract_strided_slice %44 {offsets = [1, 0, 0], sizes = [1, 2, 32], strides = [1, 1, 1]} : vector<16x2x32xi1> to vector<1x2x32xi1>
    %102 = vector.shape_cast %101 : vector<1x2x32xi1> to vector<2x32xi1>
    %103 = arith.select %102, %100, %80 : vector<2x32xi1>, vector<2x32xf32>
    %104 = arith.select %102, %98, %81 : vector<2x32xi1>, vector<2x32xf32>
    %cst_20 = arith.constant dense<0.000000e+00> : vector<2x128xf32>
    %105 = tpu.matmul %103, %39, %cst_20 {dimension_numbers = #tpu.dot_dimension_numbers<[1], [0], [0], [1], [0, 0, 1, 1], [], []>} : vector<2x32xf32>, vector<32x128xf32>, vector<2x128xf32> -> vector<2x128xf32>
    %106 = arith.addf %12, %105 : vector<2x128xf32>
    %107 = arith.mulf %106, %53 : vector<2x128xf32>
    %108 = arith.negf %107 : vector<2x128xf32>
    %109 = math.exp %108 : vector<2x128xf32>
    %cst_21 = arith.constant 1.000000e+00 : f32
    %110 = vector.broadcast %cst_21 : f32 to vector<2x128xf32>
    %111 = arith.addf %110, %109 : vector<2x128xf32>
    %112 = arith.divf %110, %111 : vector<2x128xf32>
    %113 = arith.mulf %112, %53 : vector<2x128xf32>
    %114 = arith.addf %113, %56 : vector<2x128xf32>
    %115 = vector.extract_strided_slice %114 {offsets = [0, 0], sizes = [2, 32], strides = [1, 1]} : vector<2x128xf32> to vector<2x32xf32>
    %116 = vector.extract_strided_slice %114 {offsets = [0, 32], sizes = [2, 32], strides = [1, 1]} : vector<2x128xf32> to vector<2x32xf32>
    %117 = vector.extract_strided_slice %114 {offsets = [0, 64], sizes = [2, 32], strides = [1, 1]} : vector<2x128xf32> to vector<2x32xf32>
    %118 = vector.extract_strided_slice %114 {offsets = [0, 96], sizes = [2, 32], strides = [1, 1]} : vector<2x128xf32> to vector<2x32xf32>
    %119 = arith.mulf %116, %104 : vector<2x32xf32>
    %120 = arith.mulf %115, %117 : vector<2x32xf32>
    %121 = arith.addf %119, %120 : vector<2x32xf32>
    %122 = math.tanh %121 : vector<2x32xf32>
    %123 = arith.mulf %118, %122 : vector<2x32xf32>
    %124 = vector.extract_strided_slice %44 {offsets = [2, 0, 0], sizes = [1, 2, 32], strides = [1, 1, 1]} : vector<16x2x32xi1> to vector<1x2x32xi1>
    %125 = vector.shape_cast %124 : vector<1x2x32xi1> to vector<2x32xi1>
    %126 = arith.select %125, %123, %103 : vector<2x32xi1>, vector<2x32xf32>
    %127 = arith.select %125, %121, %104 : vector<2x32xi1>, vector<2x32xf32>
    %cst_22 = arith.constant dense<0.000000e+00> : vector<2x128xf32>
    %128 = tpu.matmul %126, %39, %cst_22 {dimension_numbers = #tpu.dot_dimension_numbers<[1], [0], [0], [1], [0, 0, 1, 1], [], []>} : vector<2x32xf32>, vector<32x128xf32>, vector<2x128xf32> -> vector<2x128xf32>
    %129 = arith.addf %14, %128 : vector<2x128xf32>
    %130 = arith.mulf %129, %53 : vector<2x128xf32>
    %131 = arith.negf %130 : vector<2x128xf32>
    %132 = math.exp %131 : vector<2x128xf32>
    %cst_23 = arith.constant 1.000000e+00 : f32
    %133 = vector.broadcast %cst_23 : f32 to vector<2x128xf32>
    %134 = arith.addf %133, %132 : vector<2x128xf32>
    %135 = arith.divf %133, %134 : vector<2x128xf32>
    %136 = arith.mulf %135, %53 : vector<2x128xf32>
    %137 = arith.addf %136, %56 : vector<2x128xf32>
    %138 = vector.extract_strided_slice %137 {offsets = [0, 0], sizes = [2, 32], strides = [1, 1]} : vector<2x128xf32> to vector<2x32xf32>
    %139 = vector.extract_strided_slice %137 {offsets = [0, 32], sizes = [2, 32], strides = [1, 1]} : vector<2x128xf32> to vector<2x32xf32>
    %140 = vector.extract_strided_slice %137 {offsets = [0, 64], sizes = [2, 32], strides = [1, 1]} : vector<2x128xf32> to vector<2x32xf32>
    %141 = vector.extract_strided_slice %137 {offsets = [0, 96], sizes = [2, 32], strides = [1, 1]} : vector<2x128xf32> to vector<2x32xf32>
    %142 = arith.mulf %139, %127 : vector<2x32xf32>
    %143 = arith.mulf %138, %140 : vector<2x32xf32>
    %144 = arith.addf %142, %143 : vector<2x32xf32>
    %145 = math.tanh %144 : vector<2x32xf32>
    %146 = arith.mulf %141, %145 : vector<2x32xf32>
    %147 = vector.extract_strided_slice %44 {offsets = [3, 0, 0], sizes = [1, 2, 32], strides = [1, 1, 1]} : vector<16x2x32xi1> to vector<1x2x32xi1>
    %148 = vector.shape_cast %147 : vector<1x2x32xi1> to vector<2x32xi1>
    %149 = arith.select %148, %146, %126 : vector<2x32xi1>, vector<2x32xf32>
    %150 = arith.select %148, %144, %127 : vector<2x32xi1>, vector<2x32xf32>
    %cst_24 = arith.constant dense<0.000000e+00> : vector<2x128xf32>
    %151 = tpu.matmul %149, %39, %cst_24 {dimension_numbers = #tpu.dot_dimension_numbers<[1], [0], [0], [1], [0, 0, 1, 1], [], []>} : vector<2x32xf32>, vector<32x128xf32>, vector<2x128xf32> -> vector<2x128xf32>
    %152 = arith.addf %16, %151 : vector<2x128xf32>
    %153 = arith.mulf %152, %53 : vector<2x128xf32>
    %154 = arith.negf %153 : vector<2x128xf32>
    %155 = math.exp %154 : vector<2x128xf32>
    %cst_25 = arith.constant 1.000000e+00 : f32
    %156 = vector.broadcast %cst_25 : f32 to vector<2x128xf32>
    %157 = arith.addf %156, %155 : vector<2x128xf32>
    %158 = arith.divf %156, %157 : vector<2x128xf32>
    %159 = arith.mulf %158, %53 : vector<2x128xf32>
    %160 = arith.addf %159, %56 : vector<2x128xf32>
    %161 = vector.extract_strided_slice %160 {offsets = [0, 0], sizes = [2, 32], strides = [1, 1]} : vector<2x128xf32> to vector<2x32xf32>
    %162 = vector.extract_strided_slice %160 {offsets = [0, 32], sizes = [2, 32], strides = [1, 1]} : vector<2x128xf32> to vector<2x32xf32>
    %163 = vector.extract_strided_slice %160 {offsets = [0, 64], sizes = [2, 32], strides = [1, 1]} : vector<2x128xf32> to vector<2x32xf32>
    %164 = vector.extract_strided_slice %160 {offsets = [0, 96], sizes = [2, 32], strides = [1, 1]} : vector<2x128xf32> to vector<2x32xf32>
    %165 = arith.mulf %162, %150 : vector<2x32xf32>
    %166 = arith.mulf %161, %163 : vector<2x32xf32>
    %167 = arith.addf %165, %166 : vector<2x32xf32>
    %168 = math.tanh %167 : vector<2x32xf32>
    %169 = arith.mulf %164, %168 : vector<2x32xf32>
    %170 = vector.extract_strided_slice %44 {offsets = [4, 0, 0], sizes = [1, 2, 32], strides = [1, 1, 1]} : vector<16x2x32xi1> to vector<1x2x32xi1>
    %171 = vector.shape_cast %170 : vector<1x2x32xi1> to vector<2x32xi1>
    %172 = arith.select %171, %169, %149 : vector<2x32xi1>, vector<2x32xf32>
    %173 = arith.select %171, %167, %150 : vector<2x32xi1>, vector<2x32xf32>
    %cst_26 = arith.constant dense<0.000000e+00> : vector<2x128xf32>
    %174 = tpu.matmul %172, %39, %cst_26 {dimension_numbers = #tpu.dot_dimension_numbers<[1], [0], [0], [1], [0, 0, 1, 1], [], []>} : vector<2x32xf32>, vector<32x128xf32>, vector<2x128xf32> -> vector<2x128xf32>
    %175 = arith.addf %18, %174 : vector<2x128xf32>
    %176 = arith.mulf %175, %53 : vector<2x128xf32>
    %177 = arith.negf %176 : vector<2x128xf32>
    %178 = math.exp %177 : vector<2x128xf32>
    %cst_27 = arith.constant 1.000000e+00 : f32
    %179 = vector.broadcast %cst_27 : f32 to vector<2x128xf32>
    %180 = arith.addf %179, %178 : vector<2x128xf32>
    %181 = arith.divf %179, %180 : vector<2x128xf32>
    %182 = arith.mulf %181, %53 : vector<2x128xf32>
    %183 = arith.addf %182, %56 : vector<2x128xf32>
    %184 = vector.extract_strided_slice %183 {offsets = [0, 0], sizes = [2, 32], strides = [1, 1]} : vector<2x128xf32> to vector<2x32xf32>
    %185 = vector.extract_strided_slice %183 {offsets = [0, 32], sizes = [2, 32], strides = [1, 1]} : vector<2x128xf32> to vector<2x32xf32>
    %186 = vector.extract_strided_slice %183 {offsets = [0, 64], sizes = [2, 32], strides = [1, 1]} : vector<2x128xf32> to vector<2x32xf32>
    %187 = vector.extract_strided_slice %183 {offsets = [0, 96], sizes = [2, 32], strides = [1, 1]} : vector<2x128xf32> to vector<2x32xf32>
    %188 = arith.mulf %185, %173 : vector<2x32xf32>
    %189 = arith.mulf %184, %186 : vector<2x32xf32>
    %190 = arith.addf %188, %189 : vector<2x32xf32>
    %191 = math.tanh %190 : vector<2x32xf32>
    %192 = arith.mulf %187, %191 : vector<2x32xf32>
    %193 = vector.extract_strided_slice %44 {offsets = [5, 0, 0], sizes = [1, 2, 32], strides = [1, 1, 1]} : vector<16x2x32xi1> to vector<1x2x32xi1>
    %194 = vector.shape_cast %193 : vector<1x2x32xi1> to vector<2x32xi1>
    %195 = arith.select %194, %192, %172 : vector<2x32xi1>, vector<2x32xf32>
    %196 = arith.select %194, %190, %173 : vector<2x32xi1>, vector<2x32xf32>
    %cst_28 = arith.constant dense<0.000000e+00> : vector<2x128xf32>
    %197 = tpu.matmul %195, %39, %cst_28 {dimension_numbers = #tpu.dot_dimension_numbers<[1], [0], [0], [1], [0, 0, 1, 1], [], []>} : vector<2x32xf32>, vector<32x128xf32>, vector<2x128xf32> -> vector<2x128xf32>
    %198 = arith.addf %20, %197 : vector<2x128xf32>
    %199 = arith.mulf %198, %53 : vector<2x128xf32>
    %200 = arith.negf %199 : vector<2x128xf32>
    %201 = math.exp %200 : vector<2x128xf32>
    %cst_29 = arith.constant 1.000000e+00 : f32
    %202 = vector.broadcast %cst_29 : f32 to vector<2x128xf32>
    %203 = arith.addf %202, %201 : vector<2x128xf32>
    %204 = arith.divf %202, %203 : vector<2x128xf32>
    %205 = arith.mulf %204, %53 : vector<2x128xf32>
    %206 = arith.addf %205, %56 : vector<2x128xf32>
    %207 = vector.extract_strided_slice %206 {offsets = [0, 0], sizes = [2, 32], strides = [1, 1]} : vector<2x128xf32> to vector<2x32xf32>
    %208 = vector.extract_strided_slice %206 {offsets = [0, 32], sizes = [2, 32], strides = [1, 1]} : vector<2x128xf32> to vector<2x32xf32>
    %209 = vector.extract_strided_slice %206 {offsets = [0, 64], sizes = [2, 32], strides = [1, 1]} : vector<2x128xf32> to vector<2x32xf32>
    %210 = vector.extract_strided_slice %206 {offsets = [0, 96], sizes = [2, 32], strides = [1, 1]} : vector<2x128xf32> to vector<2x32xf32>
    %211 = arith.mulf %208, %196 : vector<2x32xf32>
    %212 = arith.mulf %207, %209 : vector<2x32xf32>
    %213 = arith.addf %211, %212 : vector<2x32xf32>
    %214 = math.tanh %213 : vector<2x32xf32>
    %215 = arith.mulf %210, %214 : vector<2x32xf32>
    %216 = vector.extract_strided_slice %44 {offsets = [6, 0, 0], sizes = [1, 2, 32], strides = [1, 1, 1]} : vector<16x2x32xi1> to vector<1x2x32xi1>
    %217 = vector.shape_cast %216 : vector<1x2x32xi1> to vector<2x32xi1>
    %218 = arith.select %217, %215, %195 : vector<2x32xi1>, vector<2x32xf32>
    %219 = arith.select %217, %213, %196 : vector<2x32xi1>, vector<2x32xf32>
    %cst_30 = arith.constant dense<0.000000e+00> : vector<2x128xf32>
    %220 = tpu.matmul %218, %39, %cst_30 {dimension_numbers = #tpu.dot_dimension_numbers<[1], [0], [0], [1], [0, 0, 1, 1], [], []>} : vector<2x32xf32>, vector<32x128xf32>, vector<2x128xf32> -> vector<2x128xf32>
    %221 = arith.addf %22, %220 : vector<2x128xf32>
    %222 = arith.mulf %221, %53 : vector<2x128xf32>
    %223 = arith.negf %222 : vector<2x128xf32>
    %224 = math.exp %223 : vector<2x128xf32>
    %cst_31 = arith.constant 1.000000e+00 : f32
    %225 = vector.broadcast %cst_31 : f32 to vector<2x128xf32>
    %226 = arith.addf %225, %224 : vector<2x128xf32>
    %227 = arith.divf %225, %226 : vector<2x128xf32>
    %228 = arith.mulf %227, %53 : vector<2x128xf32>
    %229 = arith.addf %228, %56 : vector<2x128xf32>
    %230 = vector.extract_strided_slice %229 {offsets = [0, 0], sizes = [2, 32], strides = [1, 1]} : vector<2x128xf32> to vector<2x32xf32>
    %231 = vector.extract_strided_slice %229 {offsets = [0, 32], sizes = [2, 32], strides = [1, 1]} : vector<2x128xf32> to vector<2x32xf32>
    %232 = vector.extract_strided_slice %229 {offsets = [0, 64], sizes = [2, 32], strides = [1, 1]} : vector<2x128xf32> to vector<2x32xf32>
    %233 = vector.extract_strided_slice %229 {offsets = [0, 96], sizes = [2, 32], strides = [1, 1]} : vector<2x128xf32> to vector<2x32xf32>
    %234 = arith.mulf %231, %219 : vector<2x32xf32>
    %235 = arith.mulf %230, %232 : vector<2x32xf32>
    %236 = arith.addf %234, %235 : vector<2x32xf32>
    %237 = math.tanh %236 : vector<2x32xf32>
    %238 = arith.mulf %233, %237 : vector<2x32xf32>
    %239 = vector.extract_strided_slice %44 {offsets = [7, 0, 0], sizes = [1, 2, 32], strides = [1, 1, 1]} : vector<16x2x32xi1> to vector<1x2x32xi1>
    %240 = vector.shape_cast %239 : vector<1x2x32xi1> to vector<2x32xi1>
    %241 = arith.select %240, %238, %218 : vector<2x32xi1>, vector<2x32xf32>
    %242 = arith.select %240, %236, %219 : vector<2x32xi1>, vector<2x32xf32>
    %cst_32 = arith.constant dense<0.000000e+00> : vector<2x128xf32>
    %243 = tpu.matmul %241, %39, %cst_32 {dimension_numbers = #tpu.dot_dimension_numbers<[1], [0], [0], [1], [0, 0, 1, 1], [], []>} : vector<2x32xf32>, vector<32x128xf32>, vector<2x128xf32> -> vector<2x128xf32>
    %244 = arith.addf %24, %243 : vector<2x128xf32>
    %245 = arith.mulf %244, %53 : vector<2x128xf32>
    %246 = arith.negf %245 : vector<2x128xf32>
    %247 = math.exp %246 : vector<2x128xf32>
    %cst_33 = arith.constant 1.000000e+00 : f32
    %248 = vector.broadcast %cst_33 : f32 to vector<2x128xf32>
    %249 = arith.addf %248, %247 : vector<2x128xf32>
    %250 = arith.divf %248, %249 : vector<2x128xf32>
    %251 = arith.mulf %250, %53 : vector<2x128xf32>
    %252 = arith.addf %251, %56 : vector<2x128xf32>
    %253 = vector.extract_strided_slice %252 {offsets = [0, 0], sizes = [2, 32], strides = [1, 1]} : vector<2x128xf32> to vector<2x32xf32>
    %254 = vector.extract_strided_slice %252 {offsets = [0, 32], sizes = [2, 32], strides = [1, 1]} : vector<2x128xf32> to vector<2x32xf32>
    %255 = vector.extract_strided_slice %252 {offsets = [0, 64], sizes = [2, 32], strides = [1, 1]} : vector<2x128xf32> to vector<2x32xf32>
    %256 = vector.extract_strided_slice %252 {offsets = [0, 96], sizes = [2, 32], strides = [1, 1]} : vector<2x128xf32> to vector<2x32xf32>
    %257 = arith.mulf %254, %242 : vector<2x32xf32>
    %258 = arith.mulf %253, %255 : vector<2x32xf32>
    %259 = arith.addf %257, %258 : vector<2x32xf32>
    %260 = math.tanh %259 : vector<2x32xf32>
    %261 = arith.mulf %256, %260 : vector<2x32xf32>
    %262 = vector.extract_strided_slice %44 {offsets = [8, 0, 0], sizes = [1, 2, 32], strides = [1, 1, 1]} : vector<16x2x32xi1> to vector<1x2x32xi1>
    %263 = vector.shape_cast %262 : vector<1x2x32xi1> to vector<2x32xi1>
    %264 = arith.select %263, %261, %241 : vector<2x32xi1>, vector<2x32xf32>
    %265 = arith.select %263, %259, %242 : vector<2x32xi1>, vector<2x32xf32>
    %cst_34 = arith.constant dense<0.000000e+00> : vector<2x128xf32>
    %266 = tpu.matmul %264, %39, %cst_34 {dimension_numbers = #tpu.dot_dimension_numbers<[1], [0], [0], [1], [0, 0, 1, 1], [], []>} : vector<2x32xf32>, vector<32x128xf32>, vector<2x128xf32> -> vector<2x128xf32>
    %267 = arith.addf %26, %266 : vector<2x128xf32>
    %268 = arith.mulf %267, %53 : vector<2x128xf32>
    %269 = arith.negf %268 : vector<2x128xf32>
    %270 = math.exp %269 : vector<2x128xf32>
    %cst_35 = arith.constant 1.000000e+00 : f32
    %271 = vector.broadcast %cst_35 : f32 to vector<2x128xf32>
    %272 = arith.addf %271, %270 : vector<2x128xf32>
    %273 = arith.divf %271, %272 : vector<2x128xf32>
    %274 = arith.mulf %273, %53 : vector<2x128xf32>
    %275 = arith.addf %274, %56 : vector<2x128xf32>
    %276 = vector.extract_strided_slice %275 {offsets = [0, 0], sizes = [2, 32], strides = [1, 1]} : vector<2x128xf32> to vector<2x32xf32>
    %277 = vector.extract_strided_slice %275 {offsets = [0, 32], sizes = [2, 32], strides = [1, 1]} : vector<2x128xf32> to vector<2x32xf32>
    %278 = vector.extract_strided_slice %275 {offsets = [0, 64], sizes = [2, 32], strides = [1, 1]} : vector<2x128xf32> to vector<2x32xf32>
    %279 = vector.extract_strided_slice %275 {offsets = [0, 96], sizes = [2, 32], strides = [1, 1]} : vector<2x128xf32> to vector<2x32xf32>
    %280 = arith.mulf %277, %265 : vector<2x32xf32>
    %281 = arith.mulf %276, %278 : vector<2x32xf32>
    %282 = arith.addf %280, %281 : vector<2x32xf32>
    %283 = math.tanh %282 : vector<2x32xf32>
    %284 = arith.mulf %279, %283 : vector<2x32xf32>
    %285 = vector.extract_strided_slice %44 {offsets = [9, 0, 0], sizes = [1, 2, 32], strides = [1, 1, 1]} : vector<16x2x32xi1> to vector<1x2x32xi1>
    %286 = vector.shape_cast %285 : vector<1x2x32xi1> to vector<2x32xi1>
    %287 = arith.select %286, %284, %264 : vector<2x32xi1>, vector<2x32xf32>
    %288 = arith.select %286, %282, %265 : vector<2x32xi1>, vector<2x32xf32>
    %cst_36 = arith.constant dense<0.000000e+00> : vector<2x128xf32>
    %289 = tpu.matmul %287, %39, %cst_36 {dimension_numbers = #tpu.dot_dimension_numbers<[1], [0], [0], [1], [0, 0, 1, 1], [], []>} : vector<2x32xf32>, vector<32x128xf32>, vector<2x128xf32> -> vector<2x128xf32>
    %290 = arith.addf %28, %289 : vector<2x128xf32>
    %291 = arith.mulf %290, %53 : vector<2x128xf32>
    %292 = arith.negf %291 : vector<2x128xf32>
    %293 = math.exp %292 : vector<2x128xf32>
    %cst_37 = arith.constant 1.000000e+00 : f32
    %294 = vector.broadcast %cst_37 : f32 to vector<2x128xf32>
    %295 = arith.addf %294, %293 : vector<2x128xf32>
    %296 = arith.divf %294, %295 : vector<2x128xf32>
    %297 = arith.mulf %296, %53 : vector<2x128xf32>
    %298 = arith.addf %297, %56 : vector<2x128xf32>
    %299 = vector.extract_strided_slice %298 {offsets = [0, 0], sizes = [2, 32], strides = [1, 1]} : vector<2x128xf32> to vector<2x32xf32>
    %300 = vector.extract_strided_slice %298 {offsets = [0, 32], sizes = [2, 32], strides = [1, 1]} : vector<2x128xf32> to vector<2x32xf32>
    %301 = vector.extract_strided_slice %298 {offsets = [0, 64], sizes = [2, 32], strides = [1, 1]} : vector<2x128xf32> to vector<2x32xf32>
    %302 = vector.extract_strided_slice %298 {offsets = [0, 96], sizes = [2, 32], strides = [1, 1]} : vector<2x128xf32> to vector<2x32xf32>
    %303 = arith.mulf %300, %288 : vector<2x32xf32>
    %304 = arith.mulf %299, %301 : vector<2x32xf32>
    %305 = arith.addf %303, %304 : vector<2x32xf32>
    %306 = math.tanh %305 : vector<2x32xf32>
    %307 = arith.mulf %302, %306 : vector<2x32xf32>
    %308 = vector.extract_strided_slice %44 {offsets = [10, 0, 0], sizes = [1, 2, 32], strides = [1, 1, 1]} : vector<16x2x32xi1> to vector<1x2x32xi1>
    %309 = vector.shape_cast %308 : vector<1x2x32xi1> to vector<2x32xi1>
    %310 = arith.select %309, %307, %287 : vector<2x32xi1>, vector<2x32xf32>
    %311 = arith.select %309, %305, %288 : vector<2x32xi1>, vector<2x32xf32>
    %cst_38 = arith.constant dense<0.000000e+00> : vector<2x128xf32>
    %312 = tpu.matmul %310, %39, %cst_38 {dimension_numbers = #tpu.dot_dimension_numbers<[1], [0], [0], [1], [0, 0, 1, 1], [], []>} : vector<2x32xf32>, vector<32x128xf32>, vector<2x128xf32> -> vector<2x128xf32>
    %313 = arith.addf %30, %312 : vector<2x128xf32>
    %314 = arith.mulf %313, %53 : vector<2x128xf32>
    %315 = arith.negf %314 : vector<2x128xf32>
    %316 = math.exp %315 : vector<2x128xf32>
    %cst_39 = arith.constant 1.000000e+00 : f32
    %317 = vector.broadcast %cst_39 : f32 to vector<2x128xf32>
    %318 = arith.addf %317, %316 : vector<2x128xf32>
    %319 = arith.divf %317, %318 : vector<2x128xf32>
    %320 = arith.mulf %319, %53 : vector<2x128xf32>
    %321 = arith.addf %320, %56 : vector<2x128xf32>
    %322 = vector.extract_strided_slice %321 {offsets = [0, 0], sizes = [2, 32], strides = [1, 1]} : vector<2x128xf32> to vector<2x32xf32>
    %323 = vector.extract_strided_slice %321 {offsets = [0, 32], sizes = [2, 32], strides = [1, 1]} : vector<2x128xf32> to vector<2x32xf32>
    %324 = vector.extract_strided_slice %321 {offsets = [0, 64], sizes = [2, 32], strides = [1, 1]} : vector<2x128xf32> to vector<2x32xf32>
    %325 = vector.extract_strided_slice %321 {offsets = [0, 96], sizes = [2, 32], strides = [1, 1]} : vector<2x128xf32> to vector<2x32xf32>
    %326 = arith.mulf %323, %311 : vector<2x32xf32>
    %327 = arith.mulf %322, %324 : vector<2x32xf32>
    %328 = arith.addf %326, %327 : vector<2x32xf32>
    %329 = math.tanh %328 : vector<2x32xf32>
    %330 = arith.mulf %325, %329 : vector<2x32xf32>
    %331 = vector.extract_strided_slice %44 {offsets = [11, 0, 0], sizes = [1, 2, 32], strides = [1, 1, 1]} : vector<16x2x32xi1> to vector<1x2x32xi1>
    %332 = vector.shape_cast %331 : vector<1x2x32xi1> to vector<2x32xi1>
    %333 = arith.select %332, %330, %310 : vector<2x32xi1>, vector<2x32xf32>
    %334 = arith.select %332, %328, %311 : vector<2x32xi1>, vector<2x32xf32>
    %cst_40 = arith.constant dense<0.000000e+00> : vector<2x128xf32>
    %335 = tpu.matmul %333, %39, %cst_40 {dimension_numbers = #tpu.dot_dimension_numbers<[1], [0], [0], [1], [0, 0, 1, 1], [], []>} : vector<2x32xf32>, vector<32x128xf32>, vector<2x128xf32> -> vector<2x128xf32>
    %336 = arith.addf %32, %335 : vector<2x128xf32>
    %337 = arith.mulf %336, %53 : vector<2x128xf32>
    %338 = arith.negf %337 : vector<2x128xf32>
    %339 = math.exp %338 : vector<2x128xf32>
    %cst_41 = arith.constant 1.000000e+00 : f32
    %340 = vector.broadcast %cst_41 : f32 to vector<2x128xf32>
    %341 = arith.addf %340, %339 : vector<2x128xf32>
    %342 = arith.divf %340, %341 : vector<2x128xf32>
    %343 = arith.mulf %342, %53 : vector<2x128xf32>
    %344 = arith.addf %343, %56 : vector<2x128xf32>
    %345 = vector.extract_strided_slice %344 {offsets = [0, 0], sizes = [2, 32], strides = [1, 1]} : vector<2x128xf32> to vector<2x32xf32>
    %346 = vector.extract_strided_slice %344 {offsets = [0, 32], sizes = [2, 32], strides = [1, 1]} : vector<2x128xf32> to vector<2x32xf32>
    %347 = vector.extract_strided_slice %344 {offsets = [0, 64], sizes = [2, 32], strides = [1, 1]} : vector<2x128xf32> to vector<2x32xf32>
    %348 = vector.extract_strided_slice %344 {offsets = [0, 96], sizes = [2, 32], strides = [1, 1]} : vector<2x128xf32> to vector<2x32xf32>
    %349 = arith.mulf %346, %334 : vector<2x32xf32>
    %350 = arith.mulf %345, %347 : vector<2x32xf32>
    %351 = arith.addf %349, %350 : vector<2x32xf32>
    %352 = math.tanh %351 : vector<2x32xf32>
    %353 = arith.mulf %348, %352 : vector<2x32xf32>
    %354 = vector.extract_strided_slice %44 {offsets = [12, 0, 0], sizes = [1, 2, 32], strides = [1, 1, 1]} : vector<16x2x32xi1> to vector<1x2x32xi1>
    %355 = vector.shape_cast %354 : vector<1x2x32xi1> to vector<2x32xi1>
    %356 = arith.select %355, %353, %333 : vector<2x32xi1>, vector<2x32xf32>
    %357 = arith.select %355, %351, %334 : vector<2x32xi1>, vector<2x32xf32>
    %cst_42 = arith.constant dense<0.000000e+00> : vector<2x128xf32>
    %358 = tpu.matmul %356, %39, %cst_42 {dimension_numbers = #tpu.dot_dimension_numbers<[1], [0], [0], [1], [0, 0, 1, 1], [], []>} : vector<2x32xf32>, vector<32x128xf32>, vector<2x128xf32> -> vector<2x128xf32>
    %359 = arith.addf %34, %358 : vector<2x128xf32>
    %360 = arith.mulf %359, %53 : vector<2x128xf32>
    %361 = arith.negf %360 : vector<2x128xf32>
    %362 = math.exp %361 : vector<2x128xf32>
    %cst_43 = arith.constant 1.000000e+00 : f32
    %363 = vector.broadcast %cst_43 : f32 to vector<2x128xf32>
    %364 = arith.addf %363, %362 : vector<2x128xf32>
    %365 = arith.divf %363, %364 : vector<2x128xf32>
    %366 = arith.mulf %365, %53 : vector<2x128xf32>
    %367 = arith.addf %366, %56 : vector<2x128xf32>
    %368 = vector.extract_strided_slice %367 {offsets = [0, 0], sizes = [2, 32], strides = [1, 1]} : vector<2x128xf32> to vector<2x32xf32>
    %369 = vector.extract_strided_slice %367 {offsets = [0, 32], sizes = [2, 32], strides = [1, 1]} : vector<2x128xf32> to vector<2x32xf32>
    %370 = vector.extract_strided_slice %367 {offsets = [0, 64], sizes = [2, 32], strides = [1, 1]} : vector<2x128xf32> to vector<2x32xf32>
    %371 = vector.extract_strided_slice %367 {offsets = [0, 96], sizes = [2, 32], strides = [1, 1]} : vector<2x128xf32> to vector<2x32xf32>
    %372 = arith.mulf %369, %357 : vector<2x32xf32>
    %373 = arith.mulf %368, %370 : vector<2x32xf32>
    %374 = arith.addf %372, %373 : vector<2x32xf32>
    %375 = math.tanh %374 : vector<2x32xf32>
    %376 = arith.mulf %371, %375 : vector<2x32xf32>
    %377 = vector.extract_strided_slice %44 {offsets = [13, 0, 0], sizes = [1, 2, 32], strides = [1, 1, 1]} : vector<16x2x32xi1> to vector<1x2x32xi1>
    %378 = vector.shape_cast %377 : vector<1x2x32xi1> to vector<2x32xi1>
    %379 = arith.select %378, %376, %356 : vector<2x32xi1>, vector<2x32xf32>
    %380 = arith.select %378, %374, %357 : vector<2x32xi1>, vector<2x32xf32>
    %cst_44 = arith.constant dense<0.000000e+00> : vector<2x128xf32>
    %381 = tpu.matmul %379, %39, %cst_44 {dimension_numbers = #tpu.dot_dimension_numbers<[1], [0], [0], [1], [0, 0, 1, 1], [], []>} : vector<2x32xf32>, vector<32x128xf32>, vector<2x128xf32> -> vector<2x128xf32>
    %382 = arith.addf %36, %381 : vector<2x128xf32>
    %383 = arith.mulf %382, %53 : vector<2x128xf32>
    %384 = arith.negf %383 : vector<2x128xf32>
    %385 = math.exp %384 : vector<2x128xf32>
    %cst_45 = arith.constant 1.000000e+00 : f32
    %386 = vector.broadcast %cst_45 : f32 to vector<2x128xf32>
    %387 = arith.addf %386, %385 : vector<2x128xf32>
    %388 = arith.divf %386, %387 : vector<2x128xf32>
    %389 = arith.mulf %388, %53 : vector<2x128xf32>
    %390 = arith.addf %389, %56 : vector<2x128xf32>
    %391 = vector.extract_strided_slice %390 {offsets = [0, 0], sizes = [2, 32], strides = [1, 1]} : vector<2x128xf32> to vector<2x32xf32>
    %392 = vector.extract_strided_slice %390 {offsets = [0, 32], sizes = [2, 32], strides = [1, 1]} : vector<2x128xf32> to vector<2x32xf32>
    %393 = vector.extract_strided_slice %390 {offsets = [0, 64], sizes = [2, 32], strides = [1, 1]} : vector<2x128xf32> to vector<2x32xf32>
    %394 = vector.extract_strided_slice %390 {offsets = [0, 96], sizes = [2, 32], strides = [1, 1]} : vector<2x128xf32> to vector<2x32xf32>
    %395 = arith.mulf %392, %380 : vector<2x32xf32>
    %396 = arith.mulf %391, %393 : vector<2x32xf32>
    %397 = arith.addf %395, %396 : vector<2x32xf32>
    %398 = math.tanh %397 : vector<2x32xf32>
    %399 = arith.mulf %394, %398 : vector<2x32xf32>
    %400 = vector.extract_strided_slice %44 {offsets = [14, 0, 0], sizes = [1, 2, 32], strides = [1, 1, 1]} : vector<16x2x32xi1> to vector<1x2x32xi1>
    %401 = vector.shape_cast %400 : vector<1x2x32xi1> to vector<2x32xi1>
    %402 = arith.select %401, %399, %379 : vector<2x32xi1>, vector<2x32xf32>
    %403 = arith.select %401, %397, %380 : vector<2x32xi1>, vector<2x32xf32>
    %cst_46 = arith.constant dense<0.000000e+00> : vector<2x128xf32>
    %404 = tpu.matmul %402, %39, %cst_46 {dimension_numbers = #tpu.dot_dimension_numbers<[1], [0], [0], [1], [0, 0, 1, 1], [], []>} : vector<2x32xf32>, vector<32x128xf32>, vector<2x128xf32> -> vector<2x128xf32>
    %405 = arith.addf %38, %404 : vector<2x128xf32>
    %406 = arith.mulf %405, %53 : vector<2x128xf32>
    %407 = arith.negf %406 : vector<2x128xf32>
    %408 = math.exp %407 : vector<2x128xf32>
    %cst_47 = arith.constant 1.000000e+00 : f32
    %409 = vector.broadcast %cst_47 : f32 to vector<2x128xf32>
    %410 = arith.addf %409, %408 : vector<2x128xf32>
    %411 = arith.divf %409, %410 : vector<2x128xf32>
    %412 = arith.mulf %411, %53 : vector<2x128xf32>
    %413 = arith.addf %412, %56 : vector<2x128xf32>
    %414 = vector.extract_strided_slice %413 {offsets = [0, 0], sizes = [2, 32], strides = [1, 1]} : vector<2x128xf32> to vector<2x32xf32>
    %415 = vector.extract_strided_slice %413 {offsets = [0, 32], sizes = [2, 32], strides = [1, 1]} : vector<2x128xf32> to vector<2x32xf32>
    %416 = vector.extract_strided_slice %413 {offsets = [0, 64], sizes = [2, 32], strides = [1, 1]} : vector<2x128xf32> to vector<2x32xf32>
    %417 = vector.extract_strided_slice %413 {offsets = [0, 96], sizes = [2, 32], strides = [1, 1]} : vector<2x128xf32> to vector<2x32xf32>
    %418 = arith.mulf %415, %403 : vector<2x32xf32>
    %419 = arith.mulf %414, %416 : vector<2x32xf32>
    %420 = arith.addf %418, %419 : vector<2x32xf32>
    %421 = math.tanh %420 : vector<2x32xf32>
    %422 = arith.mulf %417, %421 : vector<2x32xf32>
    %423 = vector.extract_strided_slice %44 {offsets = [15, 0, 0], sizes = [1, 2, 32], strides = [1, 1, 1]} : vector<16x2x32xi1> to vector<1x2x32xi1>
    %424 = vector.shape_cast %423 : vector<1x2x32xi1> to vector<2x32xi1>
    %425 = arith.select %424, %422, %402 : vector<2x32xi1>, vector<2x32xf32>
    %c0_48 = arith.constant 0 : index
    %c0_49 = arith.constant 0 : index
    %c0_50 = arith.constant 0 : index
    %426 = vector.load %arg2[%c0_48, %c0_49, %c0_50] : memref<2x9x32xf32, #tpu.memory_space<vmem>>, vector<2x9x32xf32>
    %c0_51 = arith.constant 0 : index
    %c0_52 = arith.constant 0 : index
    %427 = vector.load %arg6[%c0_51, %c0_52] : memref<32x32xf32, #tpu.memory_space<vmem>>, vector<32x32xf32>
    %cst_53 = arith.constant dense<0.000000e+00> : vector<2x9x32xf32>
    %428 = tpu.matmul %426, %427, %cst_53 {dimension_numbers = #tpu.dot_dimension_numbers<[2], [0], [0, 1], [1], [0, 0, 0, 1, 1, 1], [], []>} : vector<2x9x32xf32>, vector<32x32xf32>, vector<2x9x32xf32> -> vector<2x9x32xf32>
    %c0_54 = arith.constant 0 : index
    %c0_55 = arith.constant 0 : index
    %429 = vector.load %arg7[%c0_54, %c0_55] : memref<1x32xf32, #tpu.memory_space<vmem>>, vector<1x32xf32>
    %430 = vector.shape_cast %429 : vector<1x32xf32> to vector<1x1x32xf32>
    %431 = vector.broadcast %430 : vector<1x1x32xf32> to vector<2x9x32xf32>
    %432 = arith.addf %428, %431 : vector<2x9x32xf32>
    %cst_56 = arith.constant 0.000000e+00 : f32
    %433 = vector.broadcast %cst_56 : f32 to vector<2x9x32xf32>
    %434 = arith.maximumf %432, %433 : vector<2x9x32xf32>
    %cst_57 = arith.constant dense<0.000000e+00> : vector<2x32xf32>
    %435 = vector.multi_reduction <add>, %434, %cst_57 [1] : vector<2x9x32xf32> to vector<2x32xf32>
    %cst_58 = arith.constant 9.000000e+00 : f32
    %436 = vector.broadcast %cst_58 : f32 to vector<2x32xf32>
    %437 = arith.divf %435, %436 : vector<2x32xf32>
    %c0_59 = arith.constant 0 : index
    %c0_60 = arith.constant 0 : index
    %438 = vector.load %arg12[%c0_59, %c0_60] : memref<32x2xf32, #tpu.memory_space<vmem>>, vector<32x2xf32>
    %cst_61 = arith.constant dense<0.000000e+00> : vector<2x2xf32>
    %439 = tpu.matmul %437, %438, %cst_61 {dimension_numbers = #tpu.dot_dimension_numbers<[1], [0], [0], [1], [0, 0, 1, 1], [], []>} : vector<2x32xf32>, vector<32x2xf32>, vector<2x2xf32> -> vector<2x2xf32>
    %cst_62 = arith.constant 0.000000e+00 : f32
    %440 = vector.broadcast %cst_62 : f32 to vector<2x2xf32>
    %441 = arith.maximumf %439, %440 : vector<2x2xf32>
    %c0_63 = arith.constant 0 : index
    %c0_64 = arith.constant 0 : index
    %442 = vector.load %arg13[%c0_63, %c0_64] : memref<2x32xf32, #tpu.memory_space<vmem>>, vector<2x32xf32>
    %cst_65 = arith.constant dense<0.000000e+00> : vector<2x32xf32>
    %443 = tpu.matmul %441, %442, %cst_65 {dimension_numbers = #tpu.dot_dimension_numbers<[1], [0], [0], [1], [0, 0, 1, 1], [], []>} : vector<2x2xf32>, vector<2x32xf32>, vector<2x32xf32> -> vector<2x32xf32>
    %444 = arith.negf %443 : vector<2x32xf32>
    %445 = math.exp %444 : vector<2x32xf32>
    %cst_66 = arith.constant 1.000000e+00 : f32
    %446 = vector.broadcast %cst_66 : f32 to vector<2x32xf32>
    %447 = arith.addf %446, %445 : vector<2x32xf32>
    %448 = arith.divf %446, %447 : vector<2x32xf32>
    %449 = vector.shape_cast %448 : vector<2x32xf32> to vector<2x1x32xf32>
    %450 = vector.broadcast %449 : vector<2x1x32xf32> to vector<2x9x32xf32>
    %451 = arith.mulf %434, %450 : vector<2x9x32xf32>
    %c0_67 = arith.constant 0 : index
    %c0_68 = arith.constant 0 : index
    %c0_69 = arith.constant 0 : index
    %452 = vector.load %arg8[%c0_67, %c0_68, %c0_69] : memref<5x32x32xf32, #tpu.memory_space<vmem>>, vector<5x32x32xf32>
    %453 = vector.extract_strided_slice %451 {offsets = [0, 0, 0], sizes = [2, 5, 32], strides = [1, 1, 1]} : vector<2x9x32xf32> to vector<2x5x32xf32>
    %454 = vector.extract_strided_slice %452 {offsets = [0, 0, 0], sizes = [1, 32, 32], strides = [1, 1, 1]} : vector<5x32x32xf32> to vector<1x32x32xf32>
    %455 = vector.shape_cast %454 : vector<1x32x32xf32> to vector<32x32xf32>
    %cst_70 = arith.constant dense<0.000000e+00> : vector<2x5x32xf32>
    %456 = tpu.matmul %453, %455, %cst_70 {dimension_numbers = #tpu.dot_dimension_numbers<[2], [0], [0, 1], [1], [0, 0, 0, 1, 1, 1], [], []>} : vector<2x5x32xf32>, vector<32x32xf32>, vector<2x5x32xf32> -> vector<2x5x32xf32>
    %457 = vector.extract_strided_slice %451 {offsets = [0, 1, 0], sizes = [2, 5, 32], strides = [1, 1, 1]} : vector<2x9x32xf32> to vector<2x5x32xf32>
    %458 = vector.extract_strided_slice %452 {offsets = [1, 0, 0], sizes = [1, 32, 32], strides = [1, 1, 1]} : vector<5x32x32xf32> to vector<1x32x32xf32>
    %459 = vector.shape_cast %458 : vector<1x32x32xf32> to vector<32x32xf32>
    %cst_71 = arith.constant dense<0.000000e+00> : vector<2x5x32xf32>
    %460 = tpu.matmul %457, %459, %cst_71 {dimension_numbers = #tpu.dot_dimension_numbers<[2], [0], [0, 1], [1], [0, 0, 0, 1, 1, 1], [], []>} : vector<2x5x32xf32>, vector<32x32xf32>, vector<2x5x32xf32> -> vector<2x5x32xf32>
    %461 = arith.addf %456, %460 : vector<2x5x32xf32>
    %462 = vector.extract_strided_slice %451 {offsets = [0, 2, 0], sizes = [2, 5, 32], strides = [1, 1, 1]} : vector<2x9x32xf32> to vector<2x5x32xf32>
    %463 = vector.extract_strided_slice %452 {offsets = [2, 0, 0], sizes = [1, 32, 32], strides = [1, 1, 1]} : vector<5x32x32xf32> to vector<1x32x32xf32>
    %464 = vector.shape_cast %463 : vector<1x32x32xf32> to vector<32x32xf32>
    %cst_72 = arith.constant dense<0.000000e+00> : vector<2x5x32xf32>
    %465 = tpu.matmul %462, %464, %cst_72 {dimension_numbers = #tpu.dot_dimension_numbers<[2], [0], [0, 1], [1], [0, 0, 0, 1, 1, 1], [], []>} : vector<2x5x32xf32>, vector<32x32xf32>, vector<2x5x32xf32> -> vector<2x5x32xf32>
    %466 = arith.addf %461, %465 : vector<2x5x32xf32>
    %467 = vector.extract_strided_slice %451 {offsets = [0, 3, 0], sizes = [2, 5, 32], strides = [1, 1, 1]} : vector<2x9x32xf32> to vector<2x5x32xf32>
    %468 = vector.extract_strided_slice %452 {offsets = [3, 0, 0], sizes = [1, 32, 32], strides = [1, 1, 1]} : vector<5x32x32xf32> to vector<1x32x32xf32>
    %469 = vector.shape_cast %468 : vector<1x32x32xf32> to vector<32x32xf32>
    %cst_73 = arith.constant dense<0.000000e+00> : vector<2x5x32xf32>
    %470 = tpu.matmul %467, %469, %cst_73 {dimension_numbers = #tpu.dot_dimension_numbers<[2], [0], [0, 1], [1], [0, 0, 0, 1, 1, 1], [], []>} : vector<2x5x32xf32>, vector<32x32xf32>, vector<2x5x32xf32> -> vector<2x5x32xf32>
    %471 = arith.addf %466, %470 : vector<2x5x32xf32>
    %472 = vector.extract_strided_slice %451 {offsets = [0, 4, 0], sizes = [2, 5, 32], strides = [1, 1, 1]} : vector<2x9x32xf32> to vector<2x5x32xf32>
    %473 = vector.extract_strided_slice %452 {offsets = [4, 0, 0], sizes = [1, 32, 32], strides = [1, 1, 1]} : vector<5x32x32xf32> to vector<1x32x32xf32>
    %474 = vector.shape_cast %473 : vector<1x32x32xf32> to vector<32x32xf32>
    %cst_74 = arith.constant dense<0.000000e+00> : vector<2x5x32xf32>
    %475 = tpu.matmul %472, %474, %cst_74 {dimension_numbers = #tpu.dot_dimension_numbers<[2], [0], [0, 1], [1], [0, 0, 0, 1, 1, 1], [], []>} : vector<2x5x32xf32>, vector<32x32xf32>, vector<2x5x32xf32> -> vector<2x5x32xf32>
    %476 = arith.addf %471, %475 : vector<2x5x32xf32>
    %c0_75 = arith.constant 0 : index
    %c0_76 = arith.constant 0 : index
    %477 = vector.load %arg9[%c0_75, %c0_76] : memref<1x32xf32, #tpu.memory_space<vmem>>, vector<1x32xf32>
    %478 = vector.shape_cast %477 : vector<1x32xf32> to vector<1x1x32xf32>
    %479 = vector.broadcast %478 : vector<1x1x32xf32> to vector<2x5x32xf32>
    %480 = arith.addf %476, %479 : vector<2x5x32xf32>
    %cst_77 = arith.constant 0.000000e+00 : f32
    %481 = vector.broadcast %cst_77 : f32 to vector<2x5x32xf32>
    %482 = arith.maximumf %480, %481 : vector<2x5x32xf32>
    %cst_78 = arith.constant dense<0.000000e+00> : vector<2x32xf32>
    %483 = vector.multi_reduction <add>, %482, %cst_78 [1] : vector<2x5x32xf32> to vector<2x32xf32>
    %cst_79 = arith.constant 5.000000e+00 : f32
    %484 = vector.broadcast %cst_79 : f32 to vector<2x32xf32>
    %485 = arith.divf %483, %484 : vector<2x32xf32>
    %c0_80 = arith.constant 0 : index
    %c0_81 = arith.constant 0 : index
    %486 = vector.load %arg14[%c0_80, %c0_81] : memref<32x2xf32, #tpu.memory_space<vmem>>, vector<32x2xf32>
    %cst_82 = arith.constant dense<0.000000e+00> : vector<2x2xf32>
    %487 = tpu.matmul %485, %486, %cst_82 {dimension_numbers = #tpu.dot_dimension_numbers<[1], [0], [0], [1], [0, 0, 1, 1], [], []>} : vector<2x32xf32>, vector<32x2xf32>, vector<2x2xf32> -> vector<2x2xf32>
    %cst_83 = arith.constant 0.000000e+00 : f32
    %488 = vector.broadcast %cst_83 : f32 to vector<2x2xf32>
    %489 = arith.maximumf %487, %488 : vector<2x2xf32>
    %c0_84 = arith.constant 0 : index
    %c0_85 = arith.constant 0 : index
    %490 = vector.load %arg15[%c0_84, %c0_85] : memref<2x32xf32, #tpu.memory_space<vmem>>, vector<2x32xf32>
    %cst_86 = arith.constant dense<0.000000e+00> : vector<2x32xf32>
    %491 = tpu.matmul %489, %490, %cst_86 {dimension_numbers = #tpu.dot_dimension_numbers<[1], [0], [0], [1], [0, 0, 1, 1], [], []>} : vector<2x2xf32>, vector<2x32xf32>, vector<2x32xf32> -> vector<2x32xf32>
    %492 = arith.negf %491 : vector<2x32xf32>
    %493 = math.exp %492 : vector<2x32xf32>
    %cst_87 = arith.constant 1.000000e+00 : f32
    %494 = vector.broadcast %cst_87 : f32 to vector<2x32xf32>
    %495 = arith.addf %494, %493 : vector<2x32xf32>
    %496 = arith.divf %494, %495 : vector<2x32xf32>
    %497 = vector.shape_cast %496 : vector<2x32xf32> to vector<2x1x32xf32>
    %498 = vector.broadcast %497 : vector<2x1x32xf32> to vector<2x5x32xf32>
    %499 = arith.mulf %482, %498 : vector<2x5x32xf32>
    %c0_88 = arith.constant 0 : index
    %c0_89 = arith.constant 0 : index
    %c0_90 = arith.constant 0 : index
    %500 = vector.load %arg10[%c0_88, %c0_89, %c0_90] : memref<3x32x32xf32, #tpu.memory_space<vmem>>, vector<3x32x32xf32>
    %501 = vector.extract_strided_slice %499 {offsets = [0, 0, 0], sizes = [2, 3, 32], strides = [1, 1, 1]} : vector<2x5x32xf32> to vector<2x3x32xf32>
    %502 = vector.extract_strided_slice %500 {offsets = [0, 0, 0], sizes = [1, 32, 32], strides = [1, 1, 1]} : vector<3x32x32xf32> to vector<1x32x32xf32>
    %503 = vector.shape_cast %502 : vector<1x32x32xf32> to vector<32x32xf32>
    %cst_91 = arith.constant dense<0.000000e+00> : vector<2x3x32xf32>
    %504 = tpu.matmul %501, %503, %cst_91 {dimension_numbers = #tpu.dot_dimension_numbers<[2], [0], [0, 1], [1], [0, 0, 0, 1, 1, 1], [], []>} : vector<2x3x32xf32>, vector<32x32xf32>, vector<2x3x32xf32> -> vector<2x3x32xf32>
    %505 = vector.extract_strided_slice %499 {offsets = [0, 1, 0], sizes = [2, 3, 32], strides = [1, 1, 1]} : vector<2x5x32xf32> to vector<2x3x32xf32>
    %506 = vector.extract_strided_slice %500 {offsets = [1, 0, 0], sizes = [1, 32, 32], strides = [1, 1, 1]} : vector<3x32x32xf32> to vector<1x32x32xf32>
    %507 = vector.shape_cast %506 : vector<1x32x32xf32> to vector<32x32xf32>
    %cst_92 = arith.constant dense<0.000000e+00> : vector<2x3x32xf32>
    %508 = tpu.matmul %505, %507, %cst_92 {dimension_numbers = #tpu.dot_dimension_numbers<[2], [0], [0, 1], [1], [0, 0, 0, 1, 1, 1], [], []>} : vector<2x3x32xf32>, vector<32x32xf32>, vector<2x3x32xf32> -> vector<2x3x32xf32>
    %509 = arith.addf %504, %508 : vector<2x3x32xf32>
    %510 = vector.extract_strided_slice %499 {offsets = [0, 2, 0], sizes = [2, 3, 32], strides = [1, 1, 1]} : vector<2x5x32xf32> to vector<2x3x32xf32>
    %511 = vector.extract_strided_slice %500 {offsets = [2, 0, 0], sizes = [1, 32, 32], strides = [1, 1, 1]} : vector<3x32x32xf32> to vector<1x32x32xf32>
    %512 = vector.shape_cast %511 : vector<1x32x32xf32> to vector<32x32xf32>
    %cst_93 = arith.constant dense<0.000000e+00> : vector<2x3x32xf32>
    %513 = tpu.matmul %510, %512, %cst_93 {dimension_numbers = #tpu.dot_dimension_numbers<[2], [0], [0, 1], [1], [0, 0, 0, 1, 1, 1], [], []>} : vector<2x3x32xf32>, vector<32x32xf32>, vector<2x3x32xf32> -> vector<2x3x32xf32>
    %514 = arith.addf %509, %513 : vector<2x3x32xf32>
    %c0_94 = arith.constant 0 : index
    %c0_95 = arith.constant 0 : index
    %515 = vector.load %arg11[%c0_94, %c0_95] : memref<1x32xf32, #tpu.memory_space<vmem>>, vector<1x32xf32>
    %516 = vector.shape_cast %515 : vector<1x32xf32> to vector<1x1x32xf32>
    %517 = vector.broadcast %516 : vector<1x1x32xf32> to vector<2x3x32xf32>
    %518 = arith.addf %514, %517 : vector<2x3x32xf32>
    %cst_96 = arith.constant 0.000000e+00 : f32
    %519 = vector.broadcast %cst_96 : f32 to vector<2x3x32xf32>
    %520 = arith.maximumf %518, %519 : vector<2x3x32xf32>
    %cst_97 = arith.constant dense<0.000000e+00> : vector<2x32xf32>
    %521 = vector.multi_reduction <add>, %520, %cst_97 [1] : vector<2x3x32xf32> to vector<2x32xf32>
    %cst_98 = arith.constant 3.000000e+00 : f32
    %522 = vector.broadcast %cst_98 : f32 to vector<2x32xf32>
    %523 = arith.divf %521, %522 : vector<2x32xf32>
    %c0_99 = arith.constant 0 : index
    %c0_100 = arith.constant 0 : index
    %524 = vector.load %arg16[%c0_99, %c0_100] : memref<32x5xf32, #tpu.memory_space<vmem>>, vector<32x5xf32>
    %cst_101 = arith.constant dense<0.000000e+00> : vector<2x5xf32>
    %525 = tpu.matmul %425, %524, %cst_101 {dimension_numbers = #tpu.dot_dimension_numbers<[1], [0], [0], [1], [0, 0, 1, 1], [], []>} : vector<2x32xf32>, vector<32x5xf32>, vector<2x5xf32> -> vector<2x5xf32>
    %c0_102 = arith.constant 0 : index
    %c0_103 = arith.constant 0 : index
    %526 = vector.load %arg17[%c0_102, %c0_103] : memref<32x5xf32, #tpu.memory_space<vmem>>, vector<32x5xf32>
    %cst_104 = arith.constant dense<0.000000e+00> : vector<2x5xf32>
    %527 = tpu.matmul %523, %526, %cst_104 {dimension_numbers = #tpu.dot_dimension_numbers<[1], [0], [0], [1], [0, 0, 1, 1], [], []>} : vector<2x32xf32>, vector<32x5xf32>, vector<2x5xf32> -> vector<2x5xf32>
    %528 = arith.addf %525, %527 : vector<2x5xf32>
    %c0_105 = arith.constant 0 : index
    %c0_106 = arith.constant 0 : index
    %529 = vector.load %arg18[%c0_105, %c0_106] : memref<1x5xf32, #tpu.memory_space<vmem>>, vector<1x5xf32>
    %530 = vector.broadcast %529 : vector<1x5xf32> to vector<2x5xf32>
    %531 = arith.addf %528, %530 : vector<2x5xf32>
    %cst_107 = arith.constant dense<0xFF800000> : vector<2xf32>
    %532 = vector.multi_reduction <maximumf>, %531, %cst_107 [1] : vector<2x5xf32> to vector<2xf32>
    %533 = vector.shape_cast %532 : vector<2xf32> to vector<2x1xf32>
    %534 = vector.broadcast %533 : vector<2x1xf32> to vector<2x5xf32>
    %535 = arith.subf %531, %534 : vector<2x5xf32>
    %536 = math.exp %535 : vector<2x5xf32>
    %cst_108 = arith.constant dense<0.000000e+00> : vector<2xf32>
    %537 = vector.multi_reduction <add>, %536, %cst_108 [1] : vector<2x5xf32> to vector<2xf32>
    %538 = vector.shape_cast %537 : vector<2xf32> to vector<2x1xf32>
    %539 = math.log %538 : vector<2x1xf32>
    %540 = vector.broadcast %539 : vector<2x1xf32> to vector<2x5xf32>
    %541 = arith.subf %535, %540 : vector<2x5xf32>
    %c0_109 = arith.constant 0 : index
    %c0_110 = arith.constant 0 : index
    %542 = vector.load %arg19[%c0_109, %c0_110] : memref<2x5xf32, #tpu.memory_space<vmem>>, vector<2x5xf32>
    tpu.vector_store %arg19[%c0_109, %c0_110], %541 {strides = array<i32>} : memref<2x5xf32, #tpu.memory_space<vmem>>, vector<2x5xf32>,
    return
  }
}

</mosaic_0001>

<llo_original>
// kernel: mlstm_fcn_forward.1
$region0: #{mlstm_fcn_forward.1}
  #allocation0 [shape = 'u32[]', space=smem, size = 0x4, offset = 0x4, fixed_abs, tag = 'smem constant byte address 0x4 - core index']
  #allocation1 [shape = 'u32[72,128]{1,0:T(1,128)}', space=vmem, size = 0x9000, scoped, tag = 'internal scratch']
  %s0 = inlined_call_operand.vmem [shape: s32[2,1], index: 0, kind: input, shape index: {}]
  %s1 = inlined_call_operand.vmem [shape: f32[16,2,4], index: 1, kind: input, shape index: {}]
  %s2 = inlined_call_operand.vmem [shape: f32[2,9,32], index: 2, kind: input, shape index: {}]
  %s3 = inlined_call_operand.vmem [shape: f32[4,128], index: 3, kind: input, shape index: {}]
  %s4 = inlined_call_operand.vmem [shape: f32[32,128], index: 4, kind: input, shape index: {}]
  %s5 = inlined_call_operand.vmem [shape: f32[1,128], index: 5, kind: input, shape index: {}]
  %s6 = inlined_call_operand.vmem [shape: f32[32,32], index: 6, kind: input, shape index: {}]
  %s7 = inlined_call_operand.vmem [shape: f32[1,32], index: 7, kind: input, shape index: {}]
  %s8 = inlined_call_operand.vmem [shape: f32[5,32,32], index: 8, kind: input, shape index: {}]
  %s9 = inlined_call_operand.vmem [shape: f32[1,32], index: 9, kind: input, shape index: {}]
  %s10 = inlined_call_operand.vmem [shape: f32[3,32,32], index: 10, kind: input, shape index: {}]
  %s11 = inlined_call_operand.vmem [shape: f32[1,32], index: 11, kind: input, shape index: {}]
  %s12 = inlined_call_operand.vmem [shape: f32[32,2], index: 12, kind: input, shape index: {}]
  %s13 = inlined_call_operand.vmem [shape: f32[2,32], index: 13, kind: input, shape index: {}]
  %s14 = inlined_call_operand.vmem [shape: f32[32,2], index: 14, kind: input, shape index: {}]
  %s15 = inlined_call_operand.vmem [shape: f32[2,32], index: 15, kind: input, shape index: {}]
  %s16 = inlined_call_operand.vmem [shape: f32[32,5], index: 16, kind: input, shape index: {}]
  %s17 = inlined_call_operand.vmem [shape: f32[32,5], index: 17, kind: input, shape index: {}]
  %s18 = inlined_call_operand.vmem [shape: f32[1,5], index: 18, kind: input, shape index: {}]
  %s19 = inlined_call_operand.hbm [shape: f32[2,5], index: 19, kind: output, shape index: {}]
  %s20 = sld [smem:[#allocation0]]
  $region86: #{mlstm_fcn_forward.1} parent=0
    _
  %s22 = ssub.s32 1, %s20
  %s23 = scalar_select 0, %s22, %s20
  $region1: #{mlstm_fcn_forward.1} parent=0
    #allocation2 [shape = 'u8[1024]{0}', space=vmem, size = 0x400, scoped, tag = 'output window, operand 0, single buffered']
    #allocation3 [shape = 's32[1]{0}', space=sflag, size = 0x4, scoped, tag = 'scoped memory for mlstm_fcn_forward.1']
    %24 = vsyncpa [#allocation3], 0
    // Predicated region
    $region2: #{mlstm_fcn_forward.1} parent=1 // pred_check
      _
    $region3: #{mlstm_fcn_forward.1} parent=1 // pred_check_branch
      %26 = sbr.rel (0) target = $region5
    $region4: #{mlstm_fcn_forward.1} parent=1 // pred_region
      _
    $region5: #{mlstm_fcn_forward.1} parent=1 // pred_fallthru
      _
    // Predicated region
    $region6: #{mlstm_fcn_forward.1} parent=1 // pred_check
      _
    $region7: #{mlstm_fcn_forward.1} parent=1 // pred_check_branch
      %28 = sbr.rel (0) target = $region9
    $region8: #{mlstm_fcn_forward.1} parent=1 // pred_region
      _
    $region9: #{mlstm_fcn_forward.1} parent=1 // pred_fallthru
      _
    // Predicated region
    $region10: #{mlstm_fcn_forward.1} parent=1 // pred_check
      _
    $region11: #{mlstm_fcn_forward.1} parent=1 // pred_check_branch
      %30 = sbr.rel (0) target = $region13
    $region12: #{mlstm_fcn_forward.1} parent=1 // pred_region
      _
    $region13: #{mlstm_fcn_forward.1} parent=1 // pred_fallthru
      _
    // Predicated region
    $region14: #{mlstm_fcn_forward.1} parent=1 // pred_check
      _
    $region15: #{mlstm_fcn_forward.1} parent=1 // pred_check_branch
      %32 = sbr.rel (0) target = $region17
    $region16: #{mlstm_fcn_forward.1} parent=1 // pred_region
      _
    $region17: #{mlstm_fcn_forward.1} parent=1 // pred_fallthru
      _
    // Predicated region
    $region18: #{mlstm_fcn_forward.1} parent=1 // pred_check
      _
    $region19: #{mlstm_fcn_forward.1} parent=1 // pred_check_branch
      %34 = sbr.rel (0) target = $region21
    $region20: #{mlstm_fcn_forward.1} parent=1 // pred_region
      _
    $region21: #{mlstm_fcn_forward.1} parent=1 // pred_fallthru
      _
    // Predicated region
    $region22: #{mlstm_fcn_forward.1} parent=1 // pred_check
      _
    $region23: #{mlstm_fcn_forward.1} parent=1 // pred_check_branch
      %36 = sbr.rel (0) target = $region25
    $region24: #{mlstm_fcn_forward.1} parent=1 // pred_region
      _
    $region25: #{mlstm_fcn_forward.1} parent=1 // pred_fallthru
      _
    // Predicated region
    $region26: #{mlstm_fcn_forward.1} parent=1 // pred_check
      _
    $region27: #{mlstm_fcn_forward.1} parent=1 // pred_check_branch
      %38 = sbr.rel (0) target = $region29
    $region28: #{mlstm_fcn_forward.1} parent=1 // pred_region
      _
    $region29: #{mlstm_fcn_forward.1} parent=1 // pred_fallthru
      _
    // Predicated region
    $region30: #{mlstm_fcn_forward.1} parent=1 // pred_check
      _
    $region31: #{mlstm_fcn_forward.1} parent=1 // pred_check_branch
      %40 = sbr.rel (0) target = $region33
    $region32: #{mlstm_fcn_forward.1} parent=1 // pred_region
      _
    $region33: #{mlstm_fcn_forward.1} parent=1 // pred_fallthru
      _
    // Predicated region
    $region34: #{mlstm_fcn_forward.1} parent=1 // pred_check
      _
    $region35: #{mlstm_fcn_forward.1} parent=1 // pred_check_branch
      %42 = sbr.rel (0) target = $region37
    $region36: #{mlstm_fcn_forward.1} parent=1 // pred_region
      _
    $region37: #{mlstm_fcn_forward.1} parent=1 // pred_fallthru
      _
    // Predicated region
    $region38: #{mlstm_fcn_forward.1} parent=1 // pred_check
      _
    $region39: #{mlstm_fcn_forward.1} parent=1 // pred_check_branch
      %44 = sbr.rel (0) target = $region41
    $region40: #{mlstm_fcn_forward.1} parent=1 // pred_region
      _
    $region41: #{mlstm_fcn_forward.1} parent=1 // pred_fallthru
      _
    // Predicated region
    $region42: #{mlstm_fcn_forward.1} parent=1 // pred_check
      _
    $region43: #{mlstm_fcn_forward.1} parent=1 // pred_check_branch
      %46 = sbr.rel (0) target = $region45
    $region44: #{mlstm_fcn_forward.1} parent=1 // pred_region
      _
    $region45: #{mlstm_fcn_forward.1} parent=1 // pred_fallthru
      _
    // Predicated region
    $region46: #{mlstm_fcn_forward.1} parent=1 // pred_check
      _
    $region47: #{mlstm_fcn_forward.1} parent=1 // pred_check_branch
      %48 = sbr.rel (0) target = $region49
    $region48: #{mlstm_fcn_forward.1} parent=1 // pred_region
      _
    $region49: #{mlstm_fcn_forward.1} parent=1 // pred_fallthru
      _
    // Predicated region
    $region50: #{mlstm_fcn_forward.1} parent=1 // pred_check
      _
    $region51: #{mlstm_fcn_forward.1} parent=1 // pred_check_branch
      %50 = sbr.rel (0) target = $region53
    $region52: #{mlstm_fcn_forward.1} parent=1 // pred_region
      _
    $region53: #{mlstm_fcn_forward.1} parent=1 // pred_fallthru
      _
    // Predicated region
    $region54: #{mlstm_fcn_forward.1} parent=1 // pred_check
      _
    $region55: #{mlstm_fcn_forward.1} parent=1 // pred_check_branch
      %52 = sbr.rel (0) target = $region57
    $region56: #{mlstm_fcn_forward.1} parent=1 // pred_region
      _
    $region57: #{mlstm_fcn_forward.1} parent=1 // pred_fallthru
      _
    // Predicated region
    $region58: #{mlstm_fcn_forward.1} parent=1 // pred_check
      _
    $region59: #{mlstm_fcn_forward.1} parent=1 // pred_check_branch
      %54 = sbr.rel (0) target = $region61
    $region60: #{mlstm_fcn_forward.1} parent=1 // pred_region
      _
    $region61: #{mlstm_fcn_forward.1} parent=1 // pred_fallthru
      _
    // Predicated region
    $region62: #{mlstm_fcn_forward.1} parent=1 // pred_check
      _
    $region63: #{mlstm_fcn_forward.1} parent=1 // pred_check_branch
      %56 = sbr.rel (0) target = $region65
    $region64: #{mlstm_fcn_forward.1} parent=1 // pred_region
      _
    $region65: #{mlstm_fcn_forward.1} parent=1 // pred_fallthru
      _
    // Predicated region
    $region66: #{mlstm_fcn_forward.1} parent=1 // pred_check
      _
    $region67: #{mlstm_fcn_forward.1} parent=1 // pred_check_branch
      %58 = sbr.rel (0) target = $region69
    $region68: #{mlstm_fcn_forward.1} parent=1 // pred_region
      _
    $region69: #{mlstm_fcn_forward.1} parent=1 // pred_fallthru
      _
    // Predicated region
    $region70: #{mlstm_fcn_forward.1} parent=1 // pred_check
      _
    $region71: #{mlstm_fcn_forward.1} parent=1 // pred_check_branch
      %60 = sbr.rel (0) target = $region73
    $region72: #{mlstm_fcn_forward.1} parent=1 // pred_region
      _
    $region73: #{mlstm_fcn_forward.1} parent=1 // pred_fallthru
      _
    // Predicated region
    $region74: #{mlstm_fcn_forward.1} parent=1 // pred_check
      _
    $region75: #{mlstm_fcn_forward.1} parent=1 // pred_check_branch
      %62 = sbr.rel (0) target = $region77
    $region76: #{mlstm_fcn_forward.1} parent=1 // pred_region
      _
    $region77: #{mlstm_fcn_forward.1} parent=1 // pred_fallthru
      _
    %v63 = vld [vmem:[%s1] sm:$0x3]
    %v64 = vld [vmem:[%s1 + $0x2] sm:$0x3]
    %v65 = vld [vmem:[%s1 + $0x4] sm:$0x3]
    %v66 = vld [vmem:[%s1 + $0x6] sm:$0x3]
    %v67 = vld [vmem:[%s1 + $0x8] sm:$0x3]
    %v68 = vld [vmem:[%s1 + $0xa] sm:$0x3]
    %v69 = vld [vmem:[%s1 + $0xc] sm:$0x3]
    %v70 = vld [vmem:[%s1 + $0xe] sm:$0x3]
    %v71 = vld [vmem:[%s1 + $0x10] sm:$0x3]
    %v72 = vld [vmem:[%s1 + $0x12] sm:$0x3]
    %v73 = vld [vmem:[%s1 + $0x14] sm:$0x3]
    %v74 = vld [vmem:[%s1 + $0x16] sm:$0x3]
    %v75 = vld [vmem:[%s1 + $0x18] sm:$0x3]
    %v76 = vld [vmem:[%s1 + $0x1a] sm:$0x3]
    %v77 = vld [vmem:[%s1 + $0x1c] sm:$0x3]
    %v78 = vld [vmem:[%s1 + $0x1e] sm:$0x3]
    %v79 = vld [vmem:[%s3] sm:$0xf]
    %v80 = vld [vmem:[%s5] sm:$0x1]
    %v82 = vperm.slane %v80, 0
    %99 = vst [vmem:[#allocation1] ss:$4 sm:$0xff] %v63
    %s100 = scalar_lea.vmem [#allocation1], 1
    %101 = vst [vmem:[%s100] ss:$4 sm:$0xff] %v64
    %s102 = scalar_lea.vmem [#allocation1], 2
    %103 = vst [vmem:[%s102] ss:$4 sm:$0xff] %v65
    %s104 = scalar_lea.vmem [#allocation1], 3
    %105 = vst [vmem:[%s104] ss:$4 sm:$0xff] %v66
    %s106 = scalar_lea.vmem [#allocation1], 32
    %107 = vst [vmem:[%s106] ss:$4 sm:$0xff] %v67
    %s108 = scalar_lea.vmem [#allocation1], 33
    %109 = vst [vmem:[%s108] ss:$4 sm:$0xff] %v68
    %s110 = scalar_lea.vmem [#allocation1], 34
    %111 = vst [vmem:[%s110] ss:$4 sm:$0xff] %v69
    %s112 = scalar_lea.vmem [#allocation1], 35
    %113 = vst [vmem:[%s112] ss:$4 sm:$0xff] %v70
    %v114 = vld.sshfl [vmem:[#allocation1] sm:$0xff pattern:$0x73625140]
    %v115 = vld.sshfl [vmem:[#allocation1 + $0x20] sm:$0xff pattern:$0x73625140]
    %116 = vst [vmem:[#allocation1] ss:$4 sm:$0xff] %v71
    %117 = vst [vmem:[%s100] ss:$4 sm:$0xff] %v72
    %118 = vst [vmem:[%s102] ss:$4 sm:$0xff] %v73
    %119 = vst [vmem:[%s104] ss:$4 sm:$0xff] %v74
    %120 = vst [vmem:[%s106] ss:$4 sm:$0xff] %v75
    %121 = vst [vmem:[%s108] ss:$4 sm:$0xff] %v76
    %122 = vst [vmem:[%s110] ss:$4 sm:$0xff] %v77
    %123 = vst [vmem:[%s112] ss:$4 sm:$0xff] %v78
    %v124 = vld.sshfl [vmem:[#allocation1] sm:$0xff pattern:$0x73625140]
    %v125 = vld.sshfl [vmem:[#allocation1 + $0x20] sm:$0xff pattern:$0x73625140]
    %126 = vst [vmem:[#allocation1] ss:$4 sm:$0xff] %v82
    %s127 = scalar_lea.vmem [#allocation1], 1
    %128 = vst [vmem:[%s127] ss:$4 sm:$0xff] %v82
    %s129 = scalar_lea.vmem [#allocation1], 2
    %130 = vst [vmem:[%s129] ss:$4 sm:$0xff] %v82
    %s131 = scalar_lea.vmem [#allocation1], 3
    %132 = vst [vmem:[%s131] ss:$4 sm:$0xff] %v82
    %s133 = scalar_lea.vmem [#allocation1], 32
    %134 = vst [vmem:[%s133] ss:$4 sm:$0xff] %v82
    %s135 = scalar_lea.vmem [#allocation1], 33
    %136 = vst [vmem:[%s135] ss:$4 sm:$0xff] %v82
    %s137 = scalar_lea.vmem [#allocation1], 34
    %138 = vst [vmem:[%s137] ss:$4 sm:$0xff] %v82
    %s139 = scalar_lea.vmem [#allocation1], 35
    %140 = vst [vmem:[%s139] ss:$4 sm:$0xff] %v82
    %v141 = vld.sshfl [vmem:[#allocation1] sm:$0xff pattern:$0x73625140]
    %v142 = vld.sshfl [vmem:[#allocation1 + $0x20] sm:$0xff pattern:$0x73625140]
    %143 = vst [vmem:[#allocation1] ss:$4 sm:$0xff] %v82
    %144 = vst [vmem:[%s127] ss:$4 sm:$0xff] %v82
    %145 = vst [vmem:[%s129] ss:$4 sm:$0xff] %v82
    %146 = vst [vmem:[%s131] ss:$4 sm:$0xff] %v82
    %147 = vst [vmem:[%s133] ss:$4 sm:$0xff] %v82
    %148 = vst [vmem:[%s135] ss:$4 sm:$0xff] %v82
    %149 = vst [vmem:[%s137] ss:$4 sm:$0xff] %v82
    %150 = vst [vmem:[%s139] ss:$4 sm:$0xff] %v82
    %v151 = vld.sshfl [vmem:[#allocation1] sm:$0xff pattern:$0x73625140]
    %v152 = vld.sshfl [vmem:[#allocation1 + $0x20] sm:$0xff pattern:$0x73625140]
    %vm157 = vcmask 31744
    %v158 = vsel %vm157, %v114, 0
    %v160 = vsel %vm157, %v115, 0
    %v162 = vsel %vm157, %v124, 0
    %v164 = vsel %vm157, %v125, 0
    %vm166 = vcmask 1043456
    %v168 = vsel %vm166, %v79, 0
    %170 = vmatpush.msra.mxu0 0.0
    %171 = vmatpush.msra.mxu0 0.0
    %172 = vmatpush.msra.mxu0 0.0
    %173 = vmatpush.msra.mxu0 0.0
    %174 = vmatpush.msra.mxu0 0.0
    %175 = vmatpush.msra.mxu0 0.0
    %176 = vmatpush.msra.mxu0 0.0
    %177 = vmatpush.msra.mxu0 0.0
    %178 = vmatpush.msra.mxu0 0.0
    %179 = vmatpush.msra.mxu0 0.0
    %180 = vmatpush.msra.mxu0 0.0
    %181 = vmatpush.msra.mxu0 0.0
    %182 = vmatpush.msra.mxu0 0.0
    %183 = vmatpush.msra.mxu0 0.0
    %184 = vmatpush.msra.mxu0 0.0
    %185 = vmatpush.msra.mxu0 %v168
    %186 = vmatmul.f32.gmra.mxu0 %v158
    %v187 = vpop.f32.mrf.mxu0
    %v188 = vadd.f32 %v141, %v187
    %189 = vmatmul.f32.gmra.mxu0 %v160
    %v190 = vpop.f32.mrf.mxu0
    %v191 = vadd.f32 %v142, %v190
    %192 = vmatmul.f32.gmra.mxu0 %v162
    %v193 = vpop.f32.mrf.mxu0
    %v194 = vadd.f32 %v151, %v193
    %195 = vmatmul.f32.gmra.mxu0 %v164
    %v196 = vpop.f32.mrf.mxu0
    %v197 = vadd.f32 %v152, %v196
    %198 = vdwg.mxu0
    %v203 = vrot.slane %v188, 2
    %v204 = vrot.slane %v188, 4
    %v205 = vrot.slane %v188, 6
    %v206 = vrot.slane %v191, 2
    %v207 = vrot.slane %v191, 4
    %v208 = vrot.slane %v191, 6
    %v209 = vrot.slane %v194, 2
    %v210 = vrot.slane %v194, 4
    %v211 = vrot.slane %v194, 6
    %v212 = vrot.slane %v197, 2
    %v213 = vrot.slane %v197, 4
    %v214 = vrot.slane %v197, 6
    %v227 = vld [vmem:[%s4] sm:$0xff]
    %v228 = vld [vmem:[%s4 + $0x8] sm:$0xff]
    %v229 = vld [vmem:[%s4 + $0x10] sm:$0xff]
    %v230 = vld [vmem:[%s4 + $0x18] sm:$0xff]
    %v231 = vld [vmem:[%s0] sm:$0x3]
    %232 = vset.pattern.permute.xlu0 0
    %233 = vperm.xlu0 %232, %v231
    %v234 = vpop.permute.xlu0 %233
    %vm235 = vcmp.gt.s32.totalorder %v234, 0
    %vm236 = vcmp.gt.s32.totalorder %v234, 1
    %vm237 = vcmp.gt.s32.totalorder %v234, 2
    %vm238 = vcmp.gt.s32.totalorder %v234, 3
    %vm239 = vcmp.gt.s32.totalorder %v234, 4
    %vm240 = vcmp.gt.s32.totalorder %v234, 5
    %vm241 = vcmp.gt.s32.totalorder %v234, 6
    %vm242 = vcmp.gt.s32.totalorder %v234, 7
    %vm243 = vcmp.gt.s32.totalorder %v234, 8
    %vm244 = vcmp.gt.s32.totalorder %v234, 9
    %vm245 = vcmp.gt.s32.totalorder %v234, 10
    %vm246 = vcmp.gt.s32.totalorder %v234, 11
    %vm247 = vcmp.gt.s32.totalorder %v234, 12
    %vm248 = vcmp.gt.s32.totalorder %v234, 13
    %vm249 = vcmp.gt.s32.totalorder %v234, 14
    %vm250 = vcmp.gt.s32.totalorder %v234, 15
    %v251 = vlaneseq
    %v252 = vand.u32 %v251, 127
    %vm253 = vcmp.ge.s32.totalorder %v252, 64
    %vm254 = vcmp.lt.s32.totalorder %v252, 96
    %vm255 = vmand %vm253, %vm254
    %v256 = vsel %vm255, 2.0, 1.0
    %v257 = vsel %vm255, -1.0, 0.0
    %vm258 = vcmask 261120
    %v260 = vsel %vm258, 0.0, 0
    %262 = vmatpush.msra.mxu0 0.0
    %263 = vmatpush.msra.mxu0 0.0
    %264 = vmatpush.msra.mxu0 0.0
    %265 = vmatpush.msra.mxu0 0.0
    %266 = vmatpush.msra.mxu0 0.0
    %267 = vmatpush.msra.mxu0 0.0
    %268 = vmatpush.msra.mxu0 0.0
    %269 = vmatpush.msra.mxu0 0.0
    %270 = vmatpush.msra.mxu0 0.0
    %271 = vmatpush.msra.mxu0 0.0
    %272 = vmatpush.msra.mxu0 0.0
    %273 = vmatpush.msra.mxu0 0.0
    %274 = vmatpush.msra.mxu0 %v230
    %275 = vmatpush.msra.mxu0 %v229
    %276 = vmatpush.msra.mxu0 %v228
    %277 = vmatpush.msra.mxu0 %v227
    %278 = vmatmul.f32.gmra.mxu0 %v260
    %v279 = vpop.f32.mrf.mxu0
    %v280 = vadd.f32 0.0, %v279
    %281 = vdwg.mxu0
    %v282 = vadd.f32 %v188, %v280
    %v283 = vmul.f32 %v282, %v256
    %v284 = vxor.u32 %v283, 2147483648
    %v285 = vmul.f32 %v284, 1.442695
    %v286 = vpow.pop %v285
    %v287 = vadd.f32 %v286, 1.0
    %v288 = vrcp.pop %v287
    %v289 = vmul.f32 %v287, %v288
    %v290 = vsub.f32 1.0, %v289
    %v291 = vmul.f32 %v288, %v290
    %v292 = vadd.f32 %v288, %v291
    %vm293 = vweird.f32 %v287
    %vm294 = vweird.f32 %v288
    %vm295 = vmor %vm293, %vm294
    %v296 = vsel %vm295, %v288, %v292
    %v297 = vand.u32 2147483647, %v287
    %vm298 = vcmp.eq.f32.partialorder %v297, 8.507059e+37
    %v299 = vand.u32 %v287, 2147483648
    %v300 = vor.u32 1.1754944e-38, %v299
    %v301 = vsel %vm298, %v300, %v296
    %v302 = vmul.f32 1.0, %v301
    %v303 = vmul.f32 %v302, %v256
    %v304 = vadd.f32 %v303, %v257
    %v305 = vmul.f32 %v304, 0.0
    %307 = vrot.lane.b32.xlu0 %v304, 64
    %v308 = vpop.permute.xlu0 %307
    %v310 = vmul.f32 %v304, %v308
    %312 = vrot.lane.b32.xlu0 %v310, 32
    %v313 = vpop.permute.xlu0 %312
    %v315 = vadd.f32 %v305, %v313
    %v316 = vtanh.pop %v315
    %318 = vrot.lane.b32.xlu0 %v316, 64
    %v319 = vpop.permute.xlu0 %318
    %v321 = vmul.f32 %v304, %v319
    %323 = vst [vmem:[#allocation1] ss:$4 sm:$0xff] %v321
    %v324 = vld.sshfl [vmem:[#allocation1] sm:$0xff pattern:$0x73625140]
    %325 = vrot.lane.b32.xlu0 %v324, 32
    %v326 = vpop.permute.xlu0 %325
    %v328 = vsel %vm235, %v326, 0.0
    %330 = vst [vmem:[#allocation1] ss:$4 sm:$0xff] %v315
    %v331 = vld.sshfl [vmem:[#allocation1] sm:$0xff pattern:$0x73625140]
    %332 = vrot.lane.b32.xlu0 %v331, 96
    %v333 = vpop.permute.xlu0 %332
    %v335 = vsel %vm235, %v333, 0.0
    %v337 = vsel %vm258, %v328, 0
    %339 = vmatpush.msra.mxu0 0.0
    %340 = vmatpush.msra.mxu0 0.0
    %341 = vmatpush.msra.mxu0 0.0
    %342 = vmatpush.msra.mxu0 0.0
    %343 = vmatpush.msra.mxu0 0.0
    %344 = vmatpush.msra.mxu0 0.0
    %345 = vmatpush.msra.mxu0 0.0
    %346 = vmatpush.msra.mxu0 0.0
    %347 = vmatpush.msra.mxu0 0.0
    %348 = vmatpush.msra.mxu0 0.0
    %349 = vmatpush.msra.mxu0 0.0
    %350 = vmatpush.msra.mxu0 0.0
    %351 = vmatpush.msra.mxu0 %v230
    %352 = vmatpush.msra.mxu0 %v229
    %353 = vmatpush.msra.mxu0 %v228
    %354 = vmatpush.msra.mxu0 %v227
    %355 = vmatmul.f32.gmra.mxu0 %v337
    %v356 = vpop.f32.mrf.mxu0
    %v357 = vadd.f32 0.0, %v356
    %358 = vdwg.mxu0
    %v359 = vadd.f32 %v203, %v357
    %v360 = vmul.f32 %v359, %v256
    %v361 = vxor.u32 %v360, 2147483648
    %v362 = vmul.f32 %v361, 1.442695
    %v363 = vpow.pop %v362
    %v364 = vadd.f32 %v363, 1.0
    %v365 = vrcp.pop %v364
    %v366 = vmul.f32 %v364, %v365
    %v367 = vsub.f32 1.0, %v366
    %v368 = vmul.f32 %v365, %v367
    %v369 = vadd.f32 %v365, %v368
    %vm370 = vweird.f32 %v364
    %vm371 = vweird.f32 %v365
    %vm372 = vmor %vm370, %vm371
    %v373 = vsel %vm372, %v365, %v369
    %v374 = vand.u32 2147483647, %v364
    %vm375 = vcmp.eq.f32.partialorder %v374, 8.507059e+37
    %v376 = vand.u32 %v364, 2147483648
    %v377 = vor.u32 1.1754944e-38, %v376
    %v378 = vsel %vm375, %v377, %v373
    %v379 = vmul.f32 1.0, %v378
    %v380 = vmul.f32 %v379, %v256
    %v381 = vadd.f32 %v380, %v257
    %383 = vrot.lane.b32.xlu0 %v335, 32
    %v384 = vpop.permute.xlu0 %383
    %v386 = vmul.f32 %v381, %v384
    %388 = vrot.lane.b32.xlu0 %v381, 64
    %v389 = vpop.permute.xlu0 %388
    %v391 = vmul.f32 %v381, %v389
    %393 = vrot.lane.b32.xlu0 %v391, 32
    %v394 = vpop.permute.xlu0 %393
    %v396 = vadd.f32 %v386, %v394
    %v397 = vtanh.pop %v396
    %399 = vrot.lane.b32.xlu0 %v397, 64
    %v400 = vpop.permute.xlu0 %399
    %v402 = vmul.f32 %v381, %v400
    %404 = vst [vmem:[#allocation1] ss:$4 sm:$0xff] %v402
    %v405 = vld.sshfl [vmem:[#allocation1] sm:$0xff pattern:$0x73625140]
    %406 = vrot.lane.b32.xlu0 %v405, 32
    %v407 = vpop.permute.xlu0 %406
    %v409 = vsel %vm236, %v407, %v328
    %411 = vst [vmem:[#allocation1] ss:$4 sm:$0xff] %v396
    %v412 = vld.sshfl [vmem:[#allocation1] sm:$0xff pattern:$0x73625140]
    %413 = vrot.lane.b32.xlu0 %v412, 96
    %v414 = vpop.permute.xlu0 %413
    %v416 = vsel %vm236, %v414, %v335
    %v418 = vsel %vm258, %v409, 0
    %420 = vmatpush.msra.mxu0 0.0
    %421 = vmatpush.msra.mxu0 0.0
    %422 = vmatpush.msra.mxu0 0.0
    %423 = vmatpush.msra.mxu0 0.0
    %424 = vmatpush.msra.mxu0 0.0
    %425 = vmatpush.msra.mxu0 0.0
    %426 = vmatpush.msra.mxu0 0.0
    %427 = vmatpush.msra.mxu0 0.0
    %428 = vmatpush.msra.mxu0 0.0
    %429 = vmatpush.msra.mxu0 0.0
    %430 = vmatpush.msra.mxu0 0.0
    %431 = vmatpush.msra.mxu0 0.0
    %432 = vmatpush.msra.mxu0 %v230
    %433 = vmatpush.msra.mxu0 %v229
    %434 = vmatpush.msra.mxu0 %v228
    %435 = vmatpush.msra.mxu0 %v227
    %436 = vmatmul.f32.gmra.mxu0 %v418
    %v437 = vpop.f32.mrf.mxu0
    %v438 = vadd.f32 0.0, %v437
    %439 = vdwg.mxu0
    %v440 = vadd.f32 %v204, %v438
    %v441 = vmul.f32 %v440, %v256
    %v442 = vxor.u32 %v441, 2147483648
    %v443 = vmul.f32 %v442, 1.442695
    %v444 = vpow.pop %v443
    %v445 = vadd.f32 %v444, 1.0
    %v446 = vrcp.pop %v445
    %v447 = vmul.f32 %v445, %v446
    %v448 = vsub.f32 1.0, %v447
    %v449 = vmul.f32 %v446, %v448
    %v450 = vadd.f32 %v446, %v449
    %vm451 = vweird.f32 %v445
    %vm452 = vweird.f32 %v446
    %vm453 = vmor %vm451, %vm452
    %v454 = vsel %vm453, %v446, %v450
    %v455 = vand.u32 2147483647, %v445
    %vm456 = vcmp.eq.f32.partialorder %v455, 8.507059e+37
    %v457 = vand.u32 %v445, 2147483648
    %v458 = vor.u32 1.1754944e-38, %v457
    %v459 = vsel %vm456, %v458, %v454
    %v460 = vmul.f32 1.0, %v459
    %v461 = vmul.f32 %v460, %v256
    %v462 = vadd.f32 %v461, %v257
    %464 = vrot.lane.b32.xlu0 %v416, 32
    %v465 = vpop.permute.xlu0 %464
    %v467 = vmul.f32 %v462, %v465
    %469 = vrot.lane.b32.xlu0 %v462, 64
    %v470 = vpop.permute.xlu0 %469
    %v472 = vmul.f32 %v462, %v470
    %474 = vrot.lane.b32.xlu0 %v472, 32
    %v475 = vpop.permute.xlu0 %474
    %v477 = vadd.f32 %v467, %v475
    %v478 = vtanh.pop %v477
    %480 = vrot.lane.b32.xlu0 %v478, 64
    %v481 = vpop.permute.xlu0 %480
    %v483 = vmul.f32 %v462, %v481
    %485 = vst [vmem:[#allocation1] ss:$4 sm:$0xff] %v483
    %v486 = vld.sshfl [vmem:[#allocation1] sm:$0xff pattern:$0x73625140]
    %487 = vrot.lane.b32.xlu0 %v486, 32
    %v488 = vpop.permute.xlu0 %487
    %v490 = vsel %vm237, %v488, %v409
    %492 = vst [vmem:[#allocation1] ss:$4 sm:$0xff] %v477
    %v493 = vld.sshfl [vmem:[#allocation1] sm:$0xff pattern:$0x73625140]
    %494 = vrot.lane.b32.xlu0 %v493, 96
    %v495 = vpop.permute.xlu0 %494
    %v497 = vsel %vm237, %v495, %v416
    %v499 = vsel %vm258, %v490, 0
    %501 = vmatpush.msra.mxu0 0.0
    %502 = vmatpush.msra.mxu0 0.0
    %503 = vmatpush.msra.mxu0 0.0
    %504 = vmatpush.msra.mxu0 0.0
    %505 = vmatpush.msra.mxu0 0.0
    %506 = vmatpush.msra.mxu0 0.0
    %507 = vmatpush.msra.mxu0 0.0
    %508 = vmatpush.msra.mxu0 0.0
    %509 = vmatpush.msra.mxu0 0.0
    %510 = vmatpush.msra.mxu0 0.0
    %511 = vmatpush.msra.mxu0 0.0
    %512 = vmatpush.msra.mxu0 0.0
    %513 = vmatpush.msra.mxu0 %v230
    %514 = vmatpush.msra.mxu0 %v229
    %515 = vmatpush.msra.mxu0 %v228
    %516 = vmatpush.msra.mxu0 %v227
    %517 = vmatmul.f32.gmra.mxu0 %v499
    %v518 = vpop.f32.mrf.mxu0
    %v519 = vadd.f32 0.0, %v518
    %520 = vdwg.mxu0
    %v521 = vadd.f32 %v205, %v519
    %v522 = vmul.f32 %v521, %v256
    %v523 = vxor.u32 %v522, 2147483648
    %v524 = vmul.f32 %v523, 1.442695
    %v525 = vpow.pop %v524
    %v526 = vadd.f32 %v525, 1.0
    %v527 = vrcp.pop %v526
    %v528 = vmul.f32 %v526, %v527
    %v529 = vsub.f32 1.0, %v528
    %v530 = vmul.f32 %v527, %v529
    %v531 = vadd.f32 %v527, %v530
    %vm532 = vweird.f32 %v526
    %vm533 = vweird.f32 %v527
    %vm534 = vmor %vm532, %vm533
    %v535 = vsel %vm534, %v527, %v531
    %v536 = vand.u32 2147483647, %v526
    %vm537 = vcmp.eq.f32.partialorder %v536, 8.507059e+37
    %v538 = vand.u32 %v526, 2147483648
    %v539 = vor.u32 1.1754944e-38, %v538
    %v540 = vsel %vm537, %v539, %v535
    %v541 = vmul.f32 1.0, %v540
    %v542 = vmul.f32 %v541, %v256
    %v543 = vadd.f32 %v542, %v257
    %545 = vrot.lane.b32.xlu0 %v497, 32
    %v546 = vpop.permute.xlu0 %545
    %v548 = vmul.f32 %v543, %v546
    %550 = vrot.lane.b32.xlu0 %v543, 64
    %v551 = vpop.permute.xlu0 %550
    %v553 = vmul.f32 %v543, %v551
    %555 = vrot.lane.b32.xlu0 %v553, 32
    %v556 = vpop.permute.xlu0 %555
    %v558 = vadd.f32 %v548, %v556
    %v559 = vtanh.pop %v558
    %561 = vrot.lane.b32.xlu0 %v559, 64
    %v562 = vpop.permute.xlu0 %561
    %v564 = vmul.f32 %v543, %v562
    %566 = vst [vmem:[#allocation1] ss:$4 sm:$0xff] %v564
    %v567 = vld.sshfl [vmem:[#allocation1] sm:$0xff pattern:$0x73625140]
    %568 = vrot.lane.b32.xlu0 %v567, 32
    %v569 = vpop.permute.xlu0 %568
    %v571 = vsel %vm238, %v569, %v490
    %573 = vst [vmem:[#allocation1] ss:$4 sm:$0xff] %v558
    %v574 = vld.sshfl [vmem:[#allocation1] sm:$0xff pattern:$0x73625140]
    %575 = vrot.lane.b32.xlu0 %v574, 96
    %v576 = vpop.permute.xlu0 %575
    %v578 = vsel %vm238, %v576, %v497
    %v580 = vsel %vm258, %v571, 0
    %582 = vmatpush.msra.mxu0 0.0
    %583 = vmatpush.msra.mxu0 0.0
    %584 = vmatpush.msra.mxu0 0.0
    %585 = vmatpush.msra.mxu0 0.0
    %586 = vmatpush.msra.mxu0 0.0
    %587 = vmatpush.msra.mxu0 0.0
    %588 = vmatpush.msra.mxu0 0.0
    %589 = vmatpush.msra.mxu0 0.0
    %590 = vmatpush.msra.mxu0 0.0
    %591 = vmatpush.msra.mxu0 0.0
    %592 = vmatpush.msra.mxu0 0.0
    %593 = vmatpush.msra.mxu0 0.0
    %594 = vmatpush.msra.mxu0 %v230
    %595 = vmatpush.msra.mxu0 %v229
    %596 = vmatpush.msra.mxu0 %v228
    %597 = vmatpush.msra.mxu0 %v227
    %598 = vmatmul.f32.gmra.mxu0 %v580
    %v599 = vpop.f32.mrf.mxu0
    %v600 = vadd.f32 0.0, %v599
    %601 = vdwg.mxu0
    %v602 = vadd.f32 %v191, %v600
    %v603 = vmul.f32 %v602, %v256
    %v604 = vxor.u32 %v603, 2147483648
    %v605 = vmul.f32 %v604, 1.442695
    %v606 = vpow.pop %v605
    %v607 = vadd.f32 %v606, 1.0
    %v608 = vrcp.pop %v607
    %v609 = vmul.f32 %v607, %v608
    %v610 = vsub.f32 1.0, %v609
    %v611 = vmul.f32 %v608, %v610
    %v612 = vadd.f32 %v608, %v611
    %vm613 = vweird.f32 %v607
    %vm614 = vweird.f32 %v608
    %vm615 = vmor %vm613, %vm614
    %v616 = vsel %vm615, %v608, %v612
    %v617 = vand.u32 2147483647, %v607
    %vm618 = vcmp.eq.f32.partialorder %v617, 8.507059e+37
    %v619 = vand.u32 %v607, 2147483648
    %v620 = vor.u32 1.1754944e-38, %v619
    %v621 = vsel %vm618, %v620, %v616
    %v622 = vmul.f32 1.0, %v621
    %v623 = vmul.f32 %v622, %v256
    %v624 = vadd.f32 %v623, %v257
    %626 = vrot.lane.b32.xlu0 %v578, 32
    %v627 = vpop.permute.xlu0 %626
    %v629 = vmul.f32 %v624, %v627
    %631 = vrot.lane.b32.xlu0 %v624, 64
    %v632 = vpop.permute.xlu0 %631
    %v634 = vmul.f32 %v624, %v632
    %636 = vrot.lane.b32.xlu0 %v634, 32
    %v637 = vpop.permute.xlu0 %636
    %v639 = vadd.f32 %v629, %v637
    %v640 = vtanh.pop %v639
    %642 = vrot.lane.b32.xlu0 %v640, 64
    %v643 = vpop.permute.xlu0 %642
    %v645 = vmul.f32 %v624, %v643
    %647 = vst [vmem:[#allocation1] ss:$4 sm:$0xff] %v645
    %v648 = vld.sshfl [vmem:[#allocation1] sm:$0xff pattern:$0x73625140]
    %649 = vrot.lane.b32.xlu0 %v648, 32
    %v650 = vpop.permute.xlu0 %649
    %v652 = vsel %vm239, %v650, %v571
    %654 = vst [vmem:[#allocation1] ss:$4 sm:$0xff] %v639
    %v655 = vld.sshfl [vmem:[#allocation1] sm:$0xff pattern:$0x73625140]
    %656 = vrot.lane.b32.xlu0 %v655, 96
    %v657 = vpop.permute.xlu0 %656
    %v659 = vsel %vm239, %v657, %v578
    %v661 = vsel %vm258, %v652, 0
    %663 = vmatpush.msra.mxu0 0.0
    %664 = vmatpush.msra.mxu0 0.0
    %665 = vmatpush.msra.mxu0 0.0
    %666 = vmatpush.msra.mxu0 0.0
    %667 = vmatpush.msra.mxu0 0.0
    %668 = vmatpush.msra.mxu0 0.0
    %669 = vmatpush.msra.mxu0 0.0
    %670 = vmatpush.msra.mxu0 0.0
    %671 = vmatpush.msra.mxu0 0.0
    %672 = vmatpush.msra.mxu0 0.0
    %673 = vmatpush.msra.mxu0 0.0
    %674 = vmatpush.msra.mxu0 0.0
    %675 = vmatpush.msra.mxu0 %v230
    %676 = vmatpush.msra.mxu0 %v229
    %677 = vmatpush.msra.mxu0 %v228
    %678 = vmatpush.msra.mxu0 %v227
    %679 = vmatmul.f32.gmra.mxu0 %v661
    %v680 = vpop.f32.mrf.mxu0
    %v681 = vadd.f32 0.0, %v680
    %682 = vdwg.mxu0
    %v683 = vadd.f32 %v206, %v681
    %v684 = vmul.f32 %v683, %v256
    %v685 = vxor.u32 %v684, 2147483648
    %v686 = vmul.f32 %v685, 1.442695
    %v687 = vpow.pop %v686
    %v688 = vadd.f32 %v687, 1.0
    %v689 = vrcp.pop %v688
    %v690 = vmul.f32 %v688, %v689
    %v691 = vsub.f32 1.0, %v690
    %v692 = vmul.f32 %v689, %v691
    %v693 = vadd.f32 %v689, %v692
    %vm694 = vweird.f32 %v688
    %vm695 = vweird.f32 %v689
    %vm696 = vmor %vm694, %vm695
    %v697 = vsel %vm696, %v689, %v693
    %v698 = vand.u32 2147483647, %v688
    %vm699 = vcmp.eq.f32.partialorder %v698, 8.507059e+37
    %v700 = vand.u32 %v688, 2147483648
    %v701 = vor.u32 1.1754944e-38, %v700
    %v702 = vsel %vm699, %v701, %v697
    %v703 = vmul.f32 1.0, %v702
    %v704 = vmul.f32 %v703, %v256
    %v705 = vadd.f32 %v704, %v257
    %707 = vrot.lane.b32.xlu0 %v659, 32
    %v708 = vpop.permute.xlu0 %707
    %v710 = vmul.f32 %v705, %v708
    %712 = vrot.lane.b32.xlu0 %v705, 64
    %v713 = vpop.permute.xlu0 %712
    %v715 = vmul.f32 %v705, %v713
    %717 = vrot.lane.b32.xlu0 %v715, 32
    %v718 = vpop.permute.xlu0 %717
    %v720 = vadd.f32 %v710, %v718
    %v721 = vtanh.pop %v720
    %723 = vrot.lane.b32.xlu0 %v721, 64
    %v724 = vpop.permute.xlu0 %723
    %v726 = vmul.f32 %v705, %v724
    %728 = vst [vmem:[#allocation1] ss:$4 sm:$0xff] %v726
    %v729 = vld.sshfl [vmem:[#allocation1] sm:$0xff pattern:$0x73625140]
    %730 = vrot.lane.b32.xlu0 %v729, 32
    %v731 = vpop.permute.xlu0 %730
    %v733 = vsel %vm240, %v731, %v652
    %735 = vst [vmem:[#allocation1] ss:$4 sm:$0xff] %v720
    %v736 = vld.sshfl [vmem:[#allocation1] sm:$0xff pattern:$0x73625140]
    %737 = vrot.lane.b32.xlu0 %v736, 96
    %v738 = vpop.permute.xlu0 %737
    %v740 = vsel %vm240, %v738, %v659
    %v742 = vsel %vm258, %v733, 0
    %744 = vmatpush.msra.mxu0 0.0
    %745 = vmatpush.msra.mxu0 0.0
    %746 = vmatpush.msra.mxu0 0.0
    %747 = vmatpush.msra.mxu0 0.0
    %748 = vmatpush.msra.mxu0 0.0
    %749 = vmatpush.msra.mxu0 0.0
    %750 = vmatpush.msra.mxu0 0.0
    %751 = vmatpush.msra.mxu0 0.0
    %752 = vmatpush.msra.mxu0 0.0
    %753 = vmatpush.msra.mxu0 0.0
    %754 = vmatpush.msra.mxu0 0.0
    %755 = vmatpush.msra.mxu0 0.0
    %756 = vmatpush.msra.mxu0 %v230
    %757 = vmatpush.msra.mxu0 %v229
    %758 = vmatpush.msra.mxu0 %v228
    %759 = vmatpush.msra.mxu0 %v227
    %760 = vmatmul.f32.gmra.mxu0 %v742
    %v761 = vpop.f32.mrf.mxu0
    %v762 = vadd.f32 0.0, %v761
    %763 = vdwg.mxu0
    %v764 = vadd.f32 %v207, %v762
    %v765 = vmul.f32 %v764, %v256
    %v766 = vxor.u32 %v765, 2147483648
    %v767 = vmul.f32 %v766, 1.442695
    %v768 = vpow.pop %v767
    %v769 = vadd.f32 %v768, 1.0
    %v770 = vrcp.pop %v769
    %v771 = vmul.f32 %v769, %v770
    %v772 = vsub.f32 1.0, %v771
    %v773 = vmul.f32 %v770, %v772
    %v774 = vadd.f32 %v770, %v773
    %vm775 = vweird.f32 %v769
    %vm776 = vweird.f32 %v770
    %vm777 = vmor %vm775, %vm776
    %v778 = vsel %vm777, %v770, %v774
    %v779 = vand.u32 2147483647, %v769
    %vm780 = vcmp.eq.f32.partialorder %v779, 8.507059e+37
    %v781 = vand.u32 %v769, 2147483648
    %v782 = vor.u32 1.1754944e-38, %v781
    %v783 = vsel %vm780, %v782, %v778
    %v784 = vmul.f32 1.0, %v783
    %v785 = vmul.f32 %v784, %v256
    %v786 = vadd.f32 %v785, %v257
    %788 = vrot.lane.b32.xlu0 %v740, 32
    %v789 = vpop.permute.xlu0 %788
    %v791 = vmul.f32 %v786, %v789
    %793 = vrot.lane.b32.xlu0 %v786, 64
    %v794 = vpop.permute.xlu0 %793
    %v796 = vmul.f32 %v786, %v794
    %798 = vrot.lane.b32.xlu0 %v796, 32
    %v799 = vpop.permute.xlu0 %798
    %v801 = vadd.f32 %v791, %v799
    %v802 = vtanh.pop %v801
    %804 = vrot.lane.b32.xlu0 %v802, 64
    %v805 = vpop.permute.xlu0 %804
    %v807 = vmul.f32 %v786, %v805
    %809 = vst [vmem:[#allocation1] ss:$4 sm:$0xff] %v807
    %v810 = vld.sshfl [vmem:[#allocation1] sm:$0xff pattern:$0x73625140]
    %811 = vrot.lane.b32.xlu0 %v810, 32
    %v812 = vpop.permute.xlu0 %811
    %v814 = vsel %vm241, %v812, %v733
    %816 = vst [vmem:[#allocation1] ss:$4 sm:$0xff] %v801
    %v817 = vld.sshfl [vmem:[#allocation1] sm:$0xff pattern:$0x73625140]
    %818 = vrot.lane.b32.xlu0 %v817, 96
    %v819 = vpop.permute.xlu0 %818
    %v821 = vsel %vm241, %v819, %v740
    %v823 = vsel %vm258, %v814, 0
    %825 = vmatpush.msra.mxu0 0.0
    %826 = vmatpush.msra.mxu0 0.0
    %827 = vmatpush.msra.mxu0 0.0
    %828 = vmatpush.msra.mxu0 0.0
    %829 = vmatpush.msra.mxu0 0.0
    %830 = vmatpush.msra.mxu0 0.0
    %831 = vmatpush.msra.mxu0 0.0
    %832 = vmatpush.msra.mxu0 0.0
    %833 = vmatpush.msra.mxu0 0.0
    %834 = vmatpush.msra.mxu0 0.0
    %835 = vmatpush.msra.mxu0 0.0
    %836 = vmatpush.msra.mxu0 0.0
    %837 = vmatpush.msra.mxu0 %v230
    %838 = vmatpush.msra.mxu0 %v229
    %839 = vmatpush.msra.mxu0 %v228
    %840 = vmatpush.msra.mxu0 %v227
    %841 = vmatmul.f32.gmra.mxu0 %v823
    %v842 = vpop.f32.mrf.mxu0
    %v843 = vadd.f32 0.0, %v842
    %844 = vdwg.mxu0
    %v845 = vadd.f32 %v208, %v843
    %v846 = vmul.f32 %v845, %v256
    %v847 = vxor.u32 %v846, 2147483648
    %v848 = vmul.f32 %v847, 1.442695
    %v849 = vpow.pop %v848
    %v850 = vadd.f32 %v849, 1.0
    %v851 = vrcp.pop %v850
    %v852 = vmul.f32 %v850, %v851
    %v853 = vsub.f32 1.0, %v852
    %v854 = vmul.f32 %v851, %v853
    %v855 = vadd.f32 %v851, %v854
    %vm856 = vweird.f32 %v850
    %vm857 = vweird.f32 %v851
    %vm858 = vmor %vm856, %vm857
    %v859 = vsel %vm858, %v851, %v855
    %v860 = vand.u32 2147483647, %v850
    %vm861 = vcmp.eq.f32.partialorder %v860, 8.507059e+37
    %v862 = vand.u32 %v850, 2147483648
    %v863 = vor.u32 1.1754944e-38, %v862
    %v864 = vsel %vm861, %v863, %v859
    %v865 = vmul.f32 1.0, %v864
    %v866 = vmul.f32 %v865, %v256
    %v867 = vadd.f32 %v866, %v257
    %869 = vrot.lane.b32.xlu0 %v821, 32
    %v870 = vpop.permute.xlu0 %869
    %v872 = vmul.f32 %v867, %v870
    %874 = vrot.lane.b32.xlu0 %v867, 64
    %v875 = vpop.permute.xlu0 %874
    %v877 = vmul.f32 %v867, %v875
    %879 = vrot.lane.b32.xlu0 %v877, 32
    %v880 = vpop.permute.xlu0 %879
    %v882 = vadd.f32 %v872, %v880
    %v883 = vtanh.pop %v882
    %885 = vrot.lane.b32.xlu0 %v883, 64
    %v886 = vpop.permute.xlu0 %885
    %v888 = vmul.f32 %v867, %v886
    %890 = vst [vmem:[#allocation1] ss:$4 sm:$0xff] %v888
    %v891 = vld.sshfl [vmem:[#allocation1] sm:$0xff pattern:$0x73625140]
    %892 = vrot.lane.b32.xlu0 %v891, 32
    %v893 = vpop.permute.xlu0 %892
    %v895 = vsel %vm242, %v893, %v814
    %897 = vst [vmem:[#allocation1] ss:$4 sm:$0xff] %v882
    %v898 = vld.sshfl [vmem:[#allocation1] sm:$0xff pattern:$0x73625140]
    %899 = vrot.lane.b32.xlu0 %v898, 96
    %v900 = vpop.permute.xlu0 %899
    %v902 = vsel %vm242, %v900, %v821
    %v904 = vsel %vm258, %v895, 0
    %906 = vmatpush.msra.mxu0 0.0
    %907 = vmatpush.msra.mxu0 0.0
    %908 = vmatpush.msra.mxu0 0.0
    %909 = vmatpush.msra.mxu0 0.0
    %910 = vmatpush.msra.mxu0 0.0
    %911 = vmatpush.msra.mxu0 0.0
    %912 = vmatpush.msra.mxu0 0.0
    %913 = vmatpush.msra.mxu0 0.0
    %914 = vmatpush.msra.mxu0 0.0
    %915 = vmatpush.msra.mxu0 0.0
    %916 = vmatpush.msra.mxu0 0.0
    %917 = vmatpush.msra.mxu0 0.0
    %918 = vmatpush.msra.mxu0 %v230
    %919 = vmatpush.msra.mxu0 %v229
    %920 = vmatpush.msra.mxu0 %v228
    %921 = vmatpush.msra.mxu0 %v227
    %922 = vmatmul.f32.gmra.mxu0 %v904
    %v923 = vpop.f32.mrf.mxu0
    %v924 = vadd.f32 0.0, %v923
    %925 = vdwg.mxu0
    %v926 = vadd.f32 %v194, %v924
    %v927 = vmul.f32 %v926, %v256
    %v928 = vxor.u32 %v927, 2147483648
    %v929 = vmul.f32 %v928, 1.442695
    %v930 = vpow.pop %v929
    %v931 = vadd.f32 %v930, 1.0
    %v932 = vrcp.pop %v931
    %v933 = vmul.f32 %v931, %v932
    %v934 = vsub.f32 1.0, %v933
    %v935 = vmul.f32 %v932, %v934
    %v936 = vadd.f32 %v932, %v935
    %vm937 = vweird.f32 %v931
    %vm938 = vweird.f32 %v932
    %vm939 = vmor %vm937, %vm938
    %v940 = vsel %vm939, %v932, %v936
    %v941 = vand.u32 2147483647, %v931
    %vm942 = vcmp.eq.f32.partialorder %v941, 8.507059e+37
    %v943 = vand.u32 %v931, 2147483648
    %v944 = vor.u32 1.1754944e-38, %v943
    %v945 = vsel %vm942, %v944, %v940
    %v946 = vmul.f32 1.0, %v945
    %v947 = vmul.f32 %v946, %v256
    %v948 = vadd.f32 %v947, %v257
    %950 = vrot.lane.b32.xlu0 %v902, 32
    %v951 = vpop.permute.xlu0 %950
    %v953 = vmul.f32 %v948, %v951
    %955 = vrot.lane.b32.xlu0 %v948, 64
    %v956 = vpop.permute.xlu0 %955
    %v958 = vmul.f32 %v948, %v956
    %960 = vrot.lane.b32.xlu0 %v958, 32
    %v961 = vpop.permute.xlu0 %960
    %v963 = vadd.f32 %v953, %v961
    %v964 = vtanh.pop %v963
    %966 = vrot.lane.b32.xlu0 %v964, 64
    %v967 = vpop.permute.xlu0 %966
    %v969 = vmul.f32 %v948, %v967
    %971 = vst [vmem:[#allocation1] ss:$4 sm:$0xff] %v969
    %v972 = vld.sshfl [vmem:[#allocation1] sm:$0xff pattern:$0x73625140]
    %973 = vrot.lane.b32.xlu0 %v972, 32
    %v974 = vpop.permute.xlu0 %973
    %v976 = vsel %vm243, %v974, %v895
    %978 = vst [vmem:[#allocation1] ss:$4 sm:$0xff] %v963
    %v979 = vld.sshfl [vmem:[#allocation1] sm:$0xff pattern:$0x73625140]
    %980 = vrot.lane.b32.xlu0 %v979, 96
    %v981 = vpop.permute.xlu0 %980
    %v983 = vsel %vm243, %v981, %v902
    %v985 = vsel %vm258, %v976, 0
    %987 = vmatpush.msra.mxu0 0.0
    %988 = vmatpush.msra.mxu0 0.0
    %989 = vmatpush.msra.mxu0 0.0
    %990 = vmatpush.msra.mxu0 0.0
    %991 = vmatpush.msra.mxu0 0.0
    %992 = vmatpush.msra.mxu0 0.0
    %993 = vmatpush.msra.mxu0 0.0
    %994 = vmatpush.msra.mxu0 0.0
    %995 = vmatpush.msra.mxu0 0.0
    %996 = vmatpush.msra.mxu0 0.0
    %997 = vmatpush.msra.mxu0 0.0
    %998 = vmatpush.msra.mxu0 0.0
    %999 = vmatpush.msra.mxu0 %v230
    %1000 = vmatpush.msra.mxu0 %v229
    %1001 = vmatpush.msra.mxu0 %v228
    %1002 = vmatpush.msra.mxu0 %v227
    %1003 = vmatmul.f32.gmra.mxu0 %v985
    %v1004 = vpop.f32.mrf.mxu0
    %v1005 = vadd.f32 0.0, %v1004
    %1006 = vdwg.mxu0
    %v1007 = vadd.f32 %v209, %v1005
    %v1008 = vmul.f32 %v1007, %v256
    %v1009 = vxor.u32 %v1008, 2147483648
    %v1010 = vmul.f32 %v1009, 1.442695
    %v1011 = vpow.pop %v1010
    %v1012 = vadd.f32 %v1011, 1.0
    %v1013 = vrcp.pop %v1012
    %v1014 = vmul.f32 %v1012, %v1013
    %v1015 = vsub.f32 1.0, %v1014
    %v1016 = vmul.f32 %v1013, %v1015
    %v1017 = vadd.f32 %v1013, %v1016
    %vm1018 = vweird.f32 %v1012
    %vm1019 = vweird.f32 %v1013
    %vm1020 = vmor %vm1018, %vm1019
    %v1021 = vsel %vm1020, %v1013, %v1017
    %v1022 = vand.u32 2147483647, %v1012
    %vm1023 = vcmp.eq.f32.partialorder %v1022, 8.507059e+37
    %v1024 = vand.u32 %v1012, 2147483648
    %v1025 = vor.u32 1.1754944e-38, %v1024
    %v1026 = vsel %vm1023, %v1025, %v1021
    %v1027 = vmul.f32 1.0, %v1026
    %v1028 = vmul.f32 %v1027, %v256
    %v1029 = vadd.f32 %v1028, %v257
    %1031 = vrot.lane.b32.xlu0 %v983, 32
    %v1032 = vpop.permute.xlu0 %1031
    %v1034 = vmul.f32 %v1029, %v1032
    %1036 = vrot.lane.b32.xlu0 %v1029, 64
    %v1037 = vpop.permute.xlu0 %1036
    %v1039 = vmul.f32 %v1029, %v1037
    %1041 = vrot.lane.b32.xlu0 %v1039, 32
    %v1042 = vpop.permute.xlu0 %1041
    %v1044 = vadd.f32 %v1034, %v1042
    %v1045 = vtanh.pop %v1044
    %1047 = vrot.lane.b32.xlu0 %v1045, 64
    %v1048 = vpop.permute.xlu0 %1047
    %v1050 = vmul.f32 %v1029, %v1048
    %1052 = vst [vmem:[#allocation1] ss:$4 sm:$0xff] %v1050
    %v1053 = vld.sshfl [vmem:[#allocation1] sm:$0xff pattern:$0x73625140]
    %1054 = vrot.lane.b32.xlu0 %v1053, 32
    %v1055 = vpop.permute.xlu0 %1054
    %v1057 = vsel %vm244, %v1055, %v976
    %1059 = vst [vmem:[#allocation1] ss:$4 sm:$0xff] %v1044
    %v1060 = vld.sshfl [vmem:[#allocation1] sm:$0xff pattern:$0x73625140]
    %1061 = vrot.lane.b32.xlu0 %v1060, 96
    %v1062 = vpop.permute.xlu0 %1061
    %v1064 = vsel %vm244, %v1062, %v983
    %v1066 = vsel %vm258, %v1057, 0
    %1068 = vmatpush.msra.mxu0 0.0
    %1069 = vmatpush.msra.mxu0 0.0
    %1070 = vmatpush.msra.mxu0 0.0
    %1071 = vmatpush.msra.mxu0 0.0
    %1072 = vmatpush.msra.mxu0 0.0
    %1073 = vmatpush.msra.mxu0 0.0
    %1074 = vmatpush.msra.mxu0 0.0
    %1075 = vmatpush.msra.mxu0 0.0
    %1076 = vmatpush.msra.mxu0 0.0
    %1077 = vmatpush.msra.mxu0 0.0
    %1078 = vmatpush.msra.mxu0 0.0
    %1079 = vmatpush.msra.mxu0 0.0
    %1080 = vmatpush.msra.mxu0 %v230
    %1081 = vmatpush.msra.mxu0 %v229
    %1082 = vmatpush.msra.mxu0 %v228
    %1083 = vmatpush.msra.mxu0 %v227
    %1084 = vmatmul.f32.gmra.mxu0 %v1066
    %v1085 = vpop.f32.mrf.mxu0
    %v1086 = vadd.f32 0.0, %v1085
    %1087 = vdwg.mxu0
    %v1088 = vadd.f32 %v210, %v1086
    %v1089 = vmul.f32 %v1088, %v256
    %v1090 = vxor.u32 %v1089, 2147483648
    %v1091 = vmul.f32 %v1090, 1.442695
    %v1092 = vpow.pop %v1091
    %v1093 = vadd.f32 %v1092, 1.0
    %v1094 = vrcp.pop %v1093
    %v1095 = vmul.f32 %v1093, %v1094
    %v1096 = vsub.f32 1.0, %v1095
    %v1097 = vmul.f32 %v1094, %v1096
    %v1098 = vadd.f32 %v1094, %v1097
    %vm1099 = vweird.f32 %v1093
    %vm1100 = vweird.f32 %v1094
    %vm1101 = vmor %vm1099, %vm1100
    %v1102 = vsel %vm1101, %v1094, %v1098
    %v1103 = vand.u32 2147483647, %v1093
    %vm1104 = vcmp.eq.f32.partialorder %v1103, 8.507059e+37
    %v1105 = vand.u32 %v1093, 2147483648
    %v1106 = vor.u32 1.1754944e-38, %v1105
    %v1107 = vsel %vm1104, %v1106, %v1102
    %v1108 = vmul.f32 1.0, %v1107
    %v1109 = vmul.f32 %v1108, %v256
    %v1110 = vadd.f32 %v1109, %v257
    %1112 = vrot.lane.b32.xlu0 %v1064, 32
    %v1113 = vpop.permute.xlu0 %1112
    %v1115 = vmul.f32 %v1110, %v1113
    %1117 = vrot.lane.b32.xlu0 %v1110, 64
    %v1118 = vpop.permute.xlu0 %1117
    %v1120 = vmul.f32 %v1110, %v1118
    %1122 = vrot.lane.b32.xlu0 %v1120, 32
    %v1123 = vpop.permute.xlu0 %1122
    %v1125 = vadd.f32 %v1115, %v1123
    %v1126 = vtanh.pop %v1125
    %1128 = vrot.lane.b32.xlu0 %v1126, 64
    %v1129 = vpop.permute.xlu0 %1128
    %v1131 = vmul.f32 %v1110, %v1129
    %1133 = vst [vmem:[#allocation1] ss:$4 sm:$0xff] %v1131
    %v1134 = vld.sshfl [vmem:[#allocation1] sm:$0xff pattern:$0x73625140]
    %1135 = vrot.lane.b32.xlu0 %v1134, 32
    %v1136 = vpop.permute.xlu0 %1135
    %v1138 = vsel %vm245, %v1136, %v1057
    %1140 = vst [vmem:[#allocation1] ss:$4 sm:$0xff] %v1125
    %v1141 = vld.sshfl [vmem:[#allocation1] sm:$0xff pattern:$0x73625140]
    %1142 = vrot.lane.b32.xlu0 %v1141, 96
    %v1143 = vpop.permute.xlu0 %1142
    %v1145 = vsel %vm245, %v1143, %v1064
    %v1147 = vsel %vm258, %v1138, 0
    %1149 = vmatpush.msra.mxu0 0.0
    %1150 = vmatpush.msra.mxu0 0.0
    %1151 = vmatpush.msra.mxu0 0.0
    %1152 = vmatpush.msra.mxu0 0.0
    %1153 = vmatpush.msra.mxu0 0.0
    %1154 = vmatpush.msra.mxu0 0.0
    %1155 = vmatpush.msra.mxu0 0.0
    %1156 = vmatpush.msra.mxu0 0.0
    %1157 = vmatpush.msra.mxu0 0.0
    %1158 = vmatpush.msra.mxu0 0.0
    %1159 = vmatpush.msra.mxu0 0.0
    %1160 = vmatpush.msra.mxu0 0.0
    %1161 = vmatpush.msra.mxu0 %v230
    %1162 = vmatpush.msra.mxu0 %v229
    %1163 = vmatpush.msra.mxu0 %v228
    %1164 = vmatpush.msra.mxu0 %v227
    %1165 = vmatmul.f32.gmra.mxu0 %v1147
    %v1166 = vpop.f32.mrf.mxu0
    %v1167 = vadd.f32 0.0, %v1166
    %1168 = vdwg.mxu0
    %v1169 = vadd.f32 %v211, %v1167
    %v1170 = vmul.f32 %v1169, %v256
    %v1171 = vxor.u32 %v1170, 2147483648
    %v1172 = vmul.f32 %v1171, 1.442695
    %v1173 = vpow.pop %v1172
    %v1174 = vadd.f32 %v1173, 1.0
    %v1175 = vrcp.pop %v1174
    %v1176 = vmul.f32 %v1174, %v1175
    %v1177 = vsub.f32 1.0, %v1176
    %v1178 = vmul.f32 %v1175, %v1177
    %v1179 = vadd.f32 %v1175, %v1178
    %vm1180 = vweird.f32 %v1174
    %vm1181 = vweird.f32 %v1175
    %vm1182 = vmor %vm1180, %vm1181
    %v1183 = vsel %vm1182, %v1175, %v1179
    %v1184 = vand.u32 2147483647, %v1174
    %vm1185 = vcmp.eq.f32.partialorder %v1184, 8.507059e+37
    %v1186 = vand.u32 %v1174, 2147483648
    %v1187 = vor.u32 1.1754944e-38, %v1186
    %v1188 = vsel %vm1185, %v1187, %v1183
    %v1189 = vmul.f32 1.0, %v1188
    %v1190 = vmul.f32 %v1189, %v256
    %v1191 = vadd.f32 %v1190, %v257
    %1193 = vrot.lane.b32.xlu0 %v1145, 32
    %v1194 = vpop.permute.xlu0 %1193
    %v1196 = vmul.f32 %v1191, %v1194
    %1198 = vrot.lane.b32.xlu0 %v1191, 64
    %v1199 = vpop.permute.xlu0 %1198
    %v1201 = vmul.f32 %v1191, %v1199
    %1203 = vrot.lane.b32.xlu0 %v1201, 32
    %v1204 = vpop.permute.xlu0 %1203
    %v1206 = vadd.f32 %v1196, %v1204
    %v1207 = vtanh.pop %v1206
    %1209 = vrot.lane.b32.xlu0 %v1207, 64
    %v1210 = vpop.permute.xlu0 %1209
    %v1212 = vmul.f32 %v1191, %v1210
    %1214 = vst [vmem:[#allocation1] ss:$4 sm:$0xff] %v1212
    %v1215 = vld.sshfl [vmem:[#allocation1] sm:$0xff pattern:$0x73625140]
    %1216 = vrot.lane.b32.xlu0 %v1215, 32
    %v1217 = vpop.permute.xlu0 %1216
    %v1219 = vsel %vm246, %v1217, %v1138
    %1221 = vst [vmem:[#allocation1] ss:$4 sm:$0xff] %v1206
    %v1222 = vld.sshfl [vmem:[#allocation1] sm:$0xff pattern:$0x73625140]
    %1223 = vrot.lane.b32.xlu0 %v1222, 96
    %v1224 = vpop.permute.xlu0 %1223
    %v1226 = vsel %vm246, %v1224, %v1145
    %v1228 = vsel %vm258, %v1219, 0
    %1230 = vmatpush.msra.mxu0 0.0
    %1231 = vmatpush.msra.mxu0 0.0
    %1232 = vmatpush.msra.mxu0 0.0
    %1233 = vmatpush.msra.mxu0 0.0
    %1234 = vmatpush.msra.mxu0 0.0
    %1235 = vmatpush.msra.mxu0 0.0
    %1236 = vmatpush.msra.mxu0 0.0
    %1237 = vmatpush.msra.mxu0 0.0
    %1238 = vmatpush.msra.mxu0 0.0
    %1239 = vmatpush.msra.mxu0 0.0
    %1240 = vmatpush.msra.mxu0 0.0
    %1241 = vmatpush.msra.mxu0 0.0
    %1242 = vmatpush.msra.mxu0 %v230
    %1243 = vmatpush.msra.mxu0 %v229
    %1244 = vmatpush.msra.mxu0 %v228
    %1245 = vmatpush.msra.mxu0 %v227
    %1246 = vmatmul.f32.gmra.mxu0 %v1228
    %v1247 = vpop.f32.mrf.mxu0
    %v1248 = vadd.f32 0.0, %v1247
    %1249 = vdwg.mxu0
    %v1250 = vadd.f32 %v197, %v1248
    %v1251 = vmul.f32 %v1250, %v256
    %v1252 = vxor.u32 %v1251, 2147483648
    %v1253 = vmul.f32 %v1252, 1.442695
    %v1254 = vpow.pop %v1253
    %v1255 = vadd.f32 %v1254, 1.0
    %v1256 = vrcp.pop %v1255
    %v1257 = vmul.f32 %v1255, %v1256
    %v1258 = vsub.f32 1.0, %v1257
    %v1259 = vmul.f32 %v1256, %v1258
    %v1260 = vadd.f32 %v1256, %v1259
    %vm1261 = vweird.f32 %v1255
    %vm1262 = vweird.f32 %v1256
    %vm1263 = vmor %vm1261, %vm1262
    %v1264 = vsel %vm1263, %v1256, %v1260
    %v1265 = vand.u32 2147483647, %v1255
    %vm1266 = vcmp.eq.f32.partialorder %v1265, 8.507059e+37
    %v1267 = vand.u32 %v1255, 2147483648
    %v1268 = vor.u32 1.1754944e-38, %v1267
    %v1269 = vsel %vm1266, %v1268, %v1264
    %v1270 = vmul.f32 1.0, %v1269
    %v1271 = vmul.f32 %v1270, %v256
    %v1272 = vadd.f32 %v1271, %v257
    %1274 = vrot.lane.b32.xlu0 %v1226, 32
    %v1275 = vpop.permute.xlu0 %1274
    %v1277 = vmul.f32 %v1272, %v1275
    %1279 = vrot.lane.b32.xlu0 %v1272, 64
    %v1280 = vpop.permute.xlu0 %1279
    %v1282 = vmul.f32 %v1272, %v1280
    %1284 = vrot.lane.b32.xlu0 %v1282, 32
    %v1285 = vpop.permute.xlu0 %1284
    %v1287 = vadd.f32 %v1277, %v1285
    %v1288 = vtanh.pop %v1287
    %1290 = vrot.lane.b32.xlu0 %v1288, 64
    %v1291 = vpop.permute.xlu0 %1290
    %v1293 = vmul.f32 %v1272, %v1291
    %1295 = vst [vmem:[#allocation1] ss:$4 sm:$0xff] %v1293
    %v1296 = vld.sshfl [vmem:[#allocation1] sm:$0xff pattern:$0x73625140]
    %1297 = vrot.lane.b32.xlu0 %v1296, 32
    %v1298 = vpop.permute.xlu0 %1297
    %v1300 = vsel %vm247, %v1298, %v1219
    %1302 = vst [vmem:[#allocation1] ss:$4 sm:$0xff] %v1287
    %v1303 = vld.sshfl [vmem:[#allocation1] sm:$0xff pattern:$0x73625140]
    %1304 = vrot.lane.b32.xlu0 %v1303, 96
    %v1305 = vpop.permute.xlu0 %1304
    %v1307 = vsel %vm247, %v1305, %v1226
    %v1309 = vsel %vm258, %v1300, 0
    %1311 = vmatpush.msra.mxu0 0.0
    %1312 = vmatpush.msra.mxu0 0.0
    %1313 = vmatpush.msra.mxu0 0.0
    %1314 = vmatpush.msra.mxu0 0.0
    %1315 = vmatpush.msra.mxu0 0.0
    %1316 = vmatpush.msra.mxu0 0.0
    %1317 = vmatpush.msra.mxu0 0.0
    %1318 = vmatpush.msra.mxu0 0.0
    %1319 = vmatpush.msra.mxu0 0.0
    %1320 = vmatpush.msra.mxu0 0.0
    %1321 = vmatpush.msra.mxu0 0.0
    %1322 = vmatpush.msra.mxu0 0.0
    %1323 = vmatpush.msra.mxu0 %v230
    %1324 = vmatpush.msra.mxu0 %v229
    %1325 = vmatpush.msra.mxu0 %v228
    %1326 = vmatpush.msra.mxu0 %v227
    %1327 = vmatmul.f32.gmra.mxu0 %v1309
    %v1328 = vpop.f32.mrf.mxu0
    %v1329 = vadd.f32 0.0, %v1328
    %1330 = vdwg.mxu0
    %v1331 = vadd.f32 %v212, %v1329
    %v1332 = vmul.f32 %v1331, %v256
    %v1333 = vxor.u32 %v1332, 2147483648
    %v1334 = vmul.f32 %v1333, 1.442695
    %v1335 = vpow.pop %v1334
    %v1336 = vadd.f32 %v1335, 1.0
    %v1337 = vrcp.pop %v1336
    %v1338 = vmul.f32 %v1336, %v1337
    %v1339 = vsub.f32 1.0, %v1338
    %v1340 = vmul.f32 %v1337, %v1339
    %v1341 = vadd.f32 %v1337, %v1340
    %vm1342 = vweird.f32 %v1336
    %vm1343 = vweird.f32 %v1337
    %vm1344 = vmor %vm1342, %vm1343
    %v1345 = vsel %vm1344, %v1337, %v1341
    %v1346 = vand.u32 2147483647, %v1336
    %vm1347 = vcmp.eq.f32.partialorder %v1346, 8.507059e+37
    %v1348 = vand.u32 %v1336, 2147483648
    %v1349 = vor.u32 1.1754944e-38, %v1348
    %v1350 = vsel %vm1347, %v1349, %v1345
    %v1351 = vmul.f32 1.0, %v1350
    %v1352 = vmul.f32 %v1351, %v256
    %v1353 = vadd.f32 %v1352, %v257
    %1355 = vrot.lane.b32.xlu0 %v1307, 32
    %v1356 = vpop.permute.xlu0 %1355
    %v1358 = vmul.f32 %v1353, %v1356
    %1360 = vrot.lane.b32.xlu0 %v1353, 64
    %v1361 = vpop.permute.xlu0 %1360
    %v1363 = vmul.f32 %v1353, %v1361
    %1365 = vrot.lane.b32.xlu0 %v1363, 32
    %v1366 = vpop.permute.xlu0 %1365
    %v1368 = vadd.f32 %v1358, %v1366
    %v1369 = vtanh.pop %v1368
    %1371 = vrot.lane.b32.xlu0 %v1369, 64
    %v1372 = vpop.permute.xlu0 %1371
    %v1374 = vmul.f32 %v1353, %v1372
    %1376 = vst [vmem:[#allocation1] ss:$4 sm:$0xff] %v1374
    %v1377 = vld.sshfl [vmem:[#allocation1] sm:$0xff pattern:$0x73625140]
    %1378 = vrot.lane.b32.xlu0 %v1377, 32
    %v1379 = vpop.permute.xlu0 %1378
    %v1381 = vsel %vm248, %v1379, %v1300
    %1383 = vst [vmem:[#allocation1] ss:$4 sm:$0xff] %v1368
    %v1384 = vld.sshfl [vmem:[#allocation1] sm:$0xff pattern:$0x73625140]
    %1385 = vrot.lane.b32.xlu0 %v1384, 96
    %v1386 = vpop.permute.xlu0 %1385
    %v1388 = vsel %vm248, %v1386, %v1307
    %v1390 = vsel %vm258, %v1381, 0
    %1392 = vmatpush.msra.mxu0 0.0
    %1393 = vmatpush.msra.mxu0 0.0
    %1394 = vmatpush.msra.mxu0 0.0
    %1395 = vmatpush.msra.mxu0 0.0
    %1396 = vmatpush.msra.mxu0 0.0
    %1397 = vmatpush.msra.mxu0 0.0
    %1398 = vmatpush.msra.mxu0 0.0
    %1399 = vmatpush.msra.mxu0 0.0
    %1400 = vmatpush.msra.mxu0 0.0
    %1401 = vmatpush.msra.mxu0 0.0
    %1402 = vmatpush.msra.mxu0 0.0
    %1403 = vmatpush.msra.mxu0 0.0
    %1404 = vmatpush.msra.mxu0 %v230
    %1405 = vmatpush.msra.mxu0 %v229
    %1406 = vmatpush.msra.mxu0 %v228
    %1407 = vmatpush.msra.mxu0 %v227
    %1408 = vmatmul.f32.gmra.mxu0 %v1390
    %v1409 = vpop.f32.mrf.mxu0
    %v1410 = vadd.f32 0.0, %v1409
    %1411 = vdwg.mxu0
    %v1412 = vadd.f32 %v213, %v1410
    %v1413 = vmul.f32 %v1412, %v256
    %v1414 = vxor.u32 %v1413, 2147483648
    %v1415 = vmul.f32 %v1414, 1.442695
    %v1416 = vpow.pop %v1415
    %v1417 = vadd.f32 %v1416, 1.0
    %v1418 = vrcp.pop %v1417
    %v1419 = vmul.f32 %v1417, %v1418
    %v1420 = vsub.f32 1.0, %v1419
    %v1421 = vmul.f32 %v1418, %v1420
    %v1422 = vadd.f32 %v1418, %v1421
    %vm1423 = vweird.f32 %v1417
    %vm1424 = vweird.f32 %v1418
    %vm1425 = vmor %vm1423, %vm1424
    %v1426 = vsel %vm1425, %v1418, %v1422
    %v1427 = vand.u32 2147483647, %v1417
    %vm1428 = vcmp.eq.f32.partialorder %v1427, 8.507059e+37
    %v1429 = vand.u32 %v1417, 2147483648
    %v1430 = vor.u32 1.1754944e-38, %v1429
    %v1431 = vsel %vm1428, %v1430, %v1426
    %v1432 = vmul.f32 1.0, %v1431
    %v1433 = vmul.f32 %v1432, %v256
    %v1434 = vadd.f32 %v1433, %v257
    %1436 = vrot.lane.b32.xlu0 %v1388, 32
    %v1437 = vpop.permute.xlu0 %1436
    %v1439 = vmul.f32 %v1434, %v1437
    %1441 = vrot.lane.b32.xlu0 %v1434, 64
    %v1442 = vpop.permute.xlu0 %1441
    %v1444 = vmul.f32 %v1434, %v1442
    %1446 = vrot.lane.b32.xlu0 %v1444, 32
    %v1447 = vpop.permute.xlu0 %1446
    %v1449 = vadd.f32 %v1439, %v1447
    %v1450 = vtanh.pop %v1449
    %1452 = vrot.lane.b32.xlu0 %v1450, 64
    %v1453 = vpop.permute.xlu0 %1452
    %v1455 = vmul.f32 %v1434, %v1453
    %1457 = vst [vmem:[#allocation1] ss:$4 sm:$0xff] %v1455
    %v1458 = vld.sshfl [vmem:[#allocation1] sm:$0xff pattern:$0x73625140]
    %1459 = vrot.lane.b32.xlu0 %v1458, 32
    %v1460 = vpop.permute.xlu0 %1459
    %v1462 = vsel %vm249, %v1460, %v1381
    %1464 = vst [vmem:[#allocation1] ss:$4 sm:$0xff] %v1449
    %v1465 = vld.sshfl [vmem:[#allocation1] sm:$0xff pattern:$0x73625140]
    %1466 = vrot.lane.b32.xlu0 %v1465, 96
    %v1467 = vpop.permute.xlu0 %1466
    %v1469 = vsel %vm249, %v1467, %v1388
    %v1471 = vsel %vm258, %v1462, 0
    %1473 = vmatpush.msra.mxu0 0.0
    %1474 = vmatpush.msra.mxu0 0.0
    %1475 = vmatpush.msra.mxu0 0.0
    %1476 = vmatpush.msra.mxu0 0.0
    %1477 = vmatpush.msra.mxu0 0.0
    %1478 = vmatpush.msra.mxu0 0.0
    %1479 = vmatpush.msra.mxu0 0.0
    %1480 = vmatpush.msra.mxu0 0.0
    %1481 = vmatpush.msra.mxu0 0.0
    %1482 = vmatpush.msra.mxu0 0.0
    %1483 = vmatpush.msra.mxu0 0.0
    %1484 = vmatpush.msra.mxu0 0.0
    %1485 = vmatpush.msra.mxu0 %v230
    %1486 = vmatpush.msra.mxu0 %v229
    %1487 = vmatpush.msra.mxu0 %v228
    %1488 = vmatpush.msra.mxu0 %v227
    %1489 = vmatmul.f32.gmra.mxu0 %v1471
    %v1490 = vpop.f32.mrf.mxu0
    %v1491 = vadd.f32 0.0, %v1490
    %1492 = vdwg.mxu0
    %v1493 = vadd.f32 %v214, %v1491
    %v1494 = vmul.f32 %v1493, %v256
    %v1495 = vxor.u32 %v1494, 2147483648
    %v1496 = vmul.f32 %v1495, 1.442695
    %v1497 = vpow.pop %v1496
    %v1498 = vadd.f32 %v1497, 1.0
    %v1499 = vrcp.pop %v1498
    %v1500 = vmul.f32 %v1498, %v1499
    %v1501 = vsub.f32 1.0, %v1500
    %v1502 = vmul.f32 %v1499, %v1501
    %v1503 = vadd.f32 %v1499, %v1502
    %vm1504 = vweird.f32 %v1498
    %vm1505 = vweird.f32 %v1499
    %vm1506 = vmor %vm1504, %vm1505
    %v1507 = vsel %vm1506, %v1499, %v1503
    %v1508 = vand.u32 2147483647, %v1498
    %vm1509 = vcmp.eq.f32.partialorder %v1508, 8.507059e+37
    %v1510 = vand.u32 %v1498, 2147483648
    %v1511 = vor.u32 1.1754944e-38, %v1510
    %v1512 = vsel %vm1509, %v1511, %v1507
    %v1513 = vmul.f32 1.0, %v1512
    %v1514 = vmul.f32 %v1513, %v256
    %v1515 = vadd.f32 %v1514, %v257
    %1517 = vrot.lane.b32.xlu0 %v1469, 32
    %v1518 = vpop.permute.xlu0 %1517
    %v1520 = vmul.f32 %v1515, %v1518
    %1522 = vrot.lane.b32.xlu0 %v1515, 64
    %v1523 = vpop.permute.xlu0 %1522
    %v1525 = vmul.f32 %v1515, %v1523
    %1527 = vrot.lane.b32.xlu0 %v1525, 32
    %v1528 = vpop.permute.xlu0 %1527
    %v1530 = vadd.f32 %v1520, %v1528
    %v1531 = vtanh.pop %v1530
    %1533 = vrot.lane.b32.xlu0 %v1531, 64
    %v1534 = vpop.permute.xlu0 %1533
    %v1536 = vmul.f32 %v1515, %v1534
    %1538 = vst [vmem:[#allocation1] ss:$4 sm:$0xff] %v1536
    %v1539 = vld.sshfl [vmem:[#allocation1] sm:$0xff pattern:$0x73625140]
    %1540 = vrot.lane.b32.xlu0 %v1539, 32
    %v1541 = vpop.permute.xlu0 %1540
    %v1543 = vsel %vm250, %v1541, %v1462
    %v1544 = vld [vmem:[%s2] sm:$0xff]
    %v1545 = vld [vmem:[%s2 + $0x8] sm:$0x1]
    %v1546 = vld [vmem:[%s2 + $0x10] sm:$0xff]
    %v1547 = vld [vmem:[%s2 + $0x18] sm:$0x1]
    %v1548 = vld [vmem:[%s6] sm:$0xff]
    %v1549 = vld [vmem:[%s6 + $0x8] sm:$0xff]
    %v1550 = vld [vmem:[%s6 + $0x10] sm:$0xff]
    %v1551 = vld [vmem:[%s6 + $0x18] sm:$0xff]
    %v1552 = vld [vmem:[%s7] sm:$0x1]
    %v1554 = vperm.slane %v1552, 0
    %v1559 = vrot.slane %v1544, 1
    %v1560 = vrot.slane %v1544, 2
    %v1561 = vrot.slane %v1544, 3
    %v1562 = vrot.slane %v1544, 4
    %v1563 = vrot.slane %v1544, 5
    %v1564 = vrot.slane %v1544, 6
    %v1565 = vrot.slane %v1544, 7
    %v1566 = vrot.slane %v1546, 1
    %v1567 = vrot.slane %v1546, 2
    %v1568 = vrot.slane %v1546, 3
    %v1569 = vrot.slane %v1546, 4
    %v1570 = vrot.slane %v1546, 5
    %v1571 = vrot.slane %v1546, 6
    %v1572 = vrot.slane %v1546, 7
    %v1573 = vrot.slane %v1554, 1
    %v1574 = vrot.slane %v1554, 2
    %v1575 = vrot.slane %v1554, 3
    %v1576 = vrot.slane %v1554, 4
    %v1577 = vrot.slane %v1554, 5
    %v1578 = vrot.slane %v1554, 6
    %v1579 = vrot.slane %v1554, 7
    %1580 = vst [vmem:[#allocation1] ss:$9 sm:$0xff] %v1544
    %s1581 = scalar_lea.vmem [#allocation1], 1
    %1582 = vst [vmem:[%s1581] ss:$9 sm:$0xff] %v1559
    %s1583 = scalar_lea.vmem [#allocation1], 2
    %1584 = vst [vmem:[%s1583] ss:$9 sm:$0xff] %v1560
    %s1585 = scalar_lea.vmem [#allocation1], 3
    %1586 = vst [vmem:[%s1585] ss:$9 sm:$0xff] %v1561
    %s1587 = scalar_lea.vmem [#allocation1], 4
    %1588 = vst [vmem:[%s1587] ss:$9 sm:$0xff] %v1562
    %s1589 = scalar_lea.vmem [#allocation1], 5
    %1590 = vst [vmem:[%s1589] ss:$9 sm:$0xff] %v1563
    %s1591 = scalar_lea.vmem [#allocation1], 6
    %1592 = vst [vmem:[%s1591] ss:$9 sm:$0xff] %v1564
    %s1593 = scalar_lea.vmem [#allocation1], 7
    %1594 = vst [vmem:[%s1593] ss:$9 sm:$0xff] %v1565
    %v1595 = vld [vmem:[#allocation1] sm:$0xff]
    %1596 = vst [vmem:[#allocation1] ss:$9 sm:$0xff] %v1545
    %1597 = vst [vmem:[%s1581] ss:$9 sm:$0xff] %v1546
    %1598 = vst [vmem:[%s1583] ss:$9 sm:$0xff] %v1566
    %1599 = vst [vmem:[%s1585] ss:$9 sm:$0xff] %v1567
    %1600 = vst [vmem:[%s1587] ss:$9 sm:$0xff] %v1568
    %1601 = vst [vmem:[%s1589] ss:$9 sm:$0xff] %v1569
    %1602 = vst [vmem:[%s1591] ss:$9 sm:$0xff] %v1570
    %1603 = vst [vmem:[%s1593] ss:$9 sm:$0xff] %v1571
    %v1604 = vld [vmem:[#allocation1] sm:$0xff]
    %1605 = vst [vmem:[#allocation1] ss:$9 sm:$0xff] %v1572
    %1606 = vst [vmem:[%s1581] ss:$9 sm:$0xff] %v1547
    %v1607 = vld [vmem:[#allocation1] sm:$0xff]
    %1608 = vst [vmem:[#allocation1] ss:$9 sm:$0xff] %v1554
    %s1609 = scalar_lea.vmem [#allocation1], 1
    %1610 = vst [vmem:[%s1609] ss:$9 sm:$0xff] %v1573
    %s1611 = scalar_lea.vmem [#allocation1], 2
    %1612 = vst [vmem:[%s1611] ss:$9 sm:$0xff] %v1574
    %s1613 = scalar_lea.vmem [#allocation1], 3
    %1614 = vst [vmem:[%s1613] ss:$9 sm:$0xff] %v1575
    %s1615 = scalar_lea.vmem [#allocation1], 4
    %1616 = vst [vmem:[%s1615] ss:$9 sm:$0xff] %v1576
    %s1617 = scalar_lea.vmem [#allocation1], 5
    %1618 = vst [vmem:[%s1617] ss:$9 sm:$0xff] %v1577
    %s1619 = scalar_lea.vmem [#allocation1], 6
    %1620 = vst [vmem:[%s1619] ss:$9 sm:$0xff] %v1578
    %s1621 = scalar_lea.vmem [#allocation1], 7
    %1622 = vst [vmem:[%s1621] ss:$9 sm:$0xff] %v1579
    %v1623 = vld [vmem:[#allocation1] sm:$0xff]
    %1624 = vst [vmem:[#allocation1] ss:$9 sm:$0xff] %v1554
    %1625 = vst [vmem:[%s1609] ss:$9 sm:$0xff] %v1554
    %1626 = vst [vmem:[%s1611] ss:$9 sm:$0xff] %v1573
    %1627 = vst [vmem:[%s1613] ss:$9 sm:$0xff] %v1574
    %1628 = vst [vmem:[%s1615] ss:$9 sm:$0xff] %v1575
    %1629 = vst [vmem:[%s1617] ss:$9 sm:$0xff] %v1576
    %1630 = vst [vmem:[%s1619] ss:$9 sm:$0xff] %v1577
    %1631 = vst [vmem:[%s1621] ss:$9 sm:$0xff] %v1578
    %v1632 = vld [vmem:[#allocation1] sm:$0xff]
    %1633 = vst [vmem:[#allocation1] ss:$9 sm:$0xff] %v1579
    %1634 = vst [vmem:[%s1609] ss:$9 sm:$0xff] %v1554
    %v1635 = vld [vmem:[#allocation1] sm:$0xff]
    %v1639 = vsel %vm258, %v1595, 0
    %v1641 = vsel %vm258, %v1604, 0
    %v1643 = vsel %vm258, %v1607, 0
    %1645 = vmatpush.msra.mxu0 0.0
    %1646 = vmatpush.msra.mxu0 0.0
    %1647 = vmatpush.msra.mxu0 0.0
    %1648 = vmatpush.msra.mxu0 0.0
    %1649 = vmatpush.msra.mxu0 0.0
    %1650 = vmatpush.msra.mxu0 0.0
    %1651 = vmatpush.msra.mxu0 0.0
    %1652 = vmatpush.msra.mxu0 0.0
    %1653 = vmatpush.msra.mxu0 0.0
    %1654 = vmatpush.msra.mxu0 0.0
    %1655 = vmatpush.msra.mxu0 0.0
    %1656 = vmatpush.msra.mxu0 0.0
    %1657 = vmatpush.msra.mxu0 %v1551
    %1658 = vmatpush.msra.mxu0 %v1550
    %1659 = vmatpush.msra.mxu0 %v1549
    %1660 = vmatpush.msra.mxu0 %v1548
    %1661 = vmatmul.f32.gmra.mxu0 %v1639
    %v1662 = vpop.f32.mrf.mxu0
    %v1663 = vadd.f32 %v1623, %v1662
    %1664 = vmatmul.f32.gmra.mxu0 %v1641
    %v1665 = vpop.f32.mrf.mxu0
    %v1666 = vadd.f32 %v1632, %v1665
    %1667 = vmatmul.f32.gmra.mxu0 %v1643
    %v1668 = vpop.f32.mrf.mxu0
    %v1669 = vadd.f32 %v1635, %v1668
    %1670 = vdwg.mxu0
    %v1674 = vrot.slane %v1663, 1
    %v1675 = vrot.slane %v1663, 2
    %v1676 = vrot.slane %v1663, 3
    %v1677 = vrot.slane %v1663, 4
    %v1678 = vrot.slane %v1663, 5
    %v1679 = vrot.slane %v1663, 6
    %v1680 = vrot.slane %v1663, 7
    %v1681 = vrot.slane %v1666, 1
    %v1682 = vrot.slane %v1666, 2
    %v1683 = vrot.slane %v1666, 3
    %v1684 = vrot.slane %v1666, 4
    %v1685 = vrot.slane %v1666, 5
    %v1686 = vrot.slane %v1666, 6
    %v1687 = vrot.slane %v1666, 7
    %v1688 = vrot.slane %v1669, 1
    %v1704 = vmax.f32 %v1663, 0.0
    %v1705 = vmax.f32 %v1674, 0.0
    %v1706 = vmax.f32 %v1675, 0.0
    %v1707 = vmax.f32 %v1676, 0.0
    %v1708 = vmax.f32 %v1677, 0.0
    %v1709 = vmax.f32 %v1678, 0.0
    %v1710 = vmax.f32 %v1679, 0.0
    %v1711 = vmax.f32 %v1680, 0.0
    %v1712 = vmax.f32 %v1666, 0.0
    %v1713 = vmax.f32 %v1681, 0.0
    %v1714 = vmax.f32 %v1682, 0.0
    %v1715 = vmax.f32 %v1683, 0.0
    %v1716 = vmax.f32 %v1684, 0.0
    %v1717 = vmax.f32 %v1685, 0.0
    %v1718 = vmax.f32 %v1686, 0.0
    %v1719 = vmax.f32 %v1687, 0.0
    %v1720 = vmax.f32 %v1669, 0.0
    %v1721 = vmax.f32 %v1688, 0.0
    %1740 = vst [vmem:[#allocation1] ss:$9 sm:$0xff] %v1704
    %s1741 = scalar_lea.vmem [#allocation1], 1
    %1742 = vst [vmem:[%s1741] ss:$9 sm:$0xff] %v1705
    %s1743 = scalar_lea.vmem [#allocation1], 2
    %1744 = vst [vmem:[%s1743] ss:$9 sm:$0xff] %v1706
    %s1745 = scalar_lea.vmem [#allocation1], 3
    %1746 = vst [vmem:[%s1745] ss:$9 sm:$0xff] %v1707
    %s1747 = scalar_lea.vmem [#allocation1], 4
    %1748 = vst [vmem:[%s1747] ss:$9 sm:$0xff] %v1708
    %s1749 = scalar_lea.vmem [#allocation1], 5
    %1750 = vst [vmem:[%s1749] ss:$9 sm:$0xff] %v1709
    %s1751 = scalar_lea.vmem [#allocation1], 6
    %1752 = vst [vmem:[%s1751] ss:$9 sm:$0xff] %v1710
    %s1753 = scalar_lea.vmem [#allocation1], 7
    %1754 = vst [vmem:[%s1753] ss:$9 sm:$0xff] %v1711
    %v1755 = vld [vmem:[#allocation1] sm:$0xff]
    %1756 = vst [vmem:[#allocation1] ss:$9 sm:$0xff] %v1712
    %v1757 = vld [vmem:[#allocation1] sm:$0xff]
    %1758 = vst [vmem:[#allocation1] ss:$9 sm:$0xff] %v1713
    %1759 = vst [vmem:[%s1741] ss:$9 sm:$0xff] %v1714
    %1760 = vst [vmem:[%s1743] ss:$9 sm:$0xff] %v1715
    %1761 = vst [vmem:[%s1745] ss:$9 sm:$0xff] %v1716
    %1762 = vst [vmem:[%s1747] ss:$9 sm:$0xff] %v1717
    %1763 = vst [vmem:[%s1749] ss:$9 sm:$0xff] %v1718
    %1764 = vst [vmem:[%s1751] ss:$9 sm:$0xff] %v1719
    %1765 = vst [vmem:[%s1753] ss:$9 sm:$0xff] %v1720
    %v1766 = vld [vmem:[#allocation1] sm:$0xff]
    %1767 = vst [vmem:[#allocation1] ss:$9 sm:$0xff] %v1721
    %v1768 = vld [vmem:[#allocation1] sm:$0xff]
    %v1773 = vsel %vm258, %v1755, 0.0
    %vm1774 = vcmask 253952
    %v1775 = vsel %vm1774, %v1757, 0.0
    %v1776 = vadd.f32 %v1773, %v1775
    %v1777 = vrot.slane %v1776, 4
    %v1778 = vadd.f32 %v1776, %v1777
    %v1779 = vrot.slane %v1778, 2
    %v1780 = vadd.f32 %v1778, %v1779
    %v1781 = vrot.slane %v1780, 1
    %v1782 = vadd.f32 %v1780, %v1781
    %v1783 = vsel %vm258, %v1766, 0.0
    %v1784 = vsel %vm1774, %v1768, 0.0
    %v1785 = vadd.f32 %v1783, %v1784
    %v1786 = vrot.slane %v1785, 4
    %v1787 = vadd.f32 %v1785, %v1786
    %v1788 = vrot.slane %v1787, 2
    %v1789 = vadd.f32 %v1787, %v1788
    %v1790 = vrot.slane %v1789, 1
    %v1791 = vadd.f32 %v1789, %v1790
    %v1792 = vrcp.pop 9.0
    %v1793 = vmul.f32 9.0, %v1792
    %v1794 = vsub.f32 1.0, %v1793
    %v1795 = vmul.f32 %v1792, %v1794
    %v1796 = vadd.f32 %v1792, %v1795
    %vm1797 = vweird.f32 %v1792
    %v1798 = vsel %vm1797, %v1792, %v1796
    %v1799 = vmul.f32 %v1782, %v1798
    %v1800 = vmul.f32 %v1791, %v1798
    %v1801 = vld [vmem:[%s12] sm:$0xff]
    %v1802 = vld [vmem:[%s12 + $0x8] sm:$0xff]
    %v1803 = vld [vmem:[%s12 + $0x10] sm:$0xff]
    %v1804 = vld [vmem:[%s12 + $0x18] sm:$0xff]
    %vm1807 = vcmask 1041409
    %v1808 = vsel %vm1807, %v1800, %v1799
    %v1809 = vsel %vm258, %v1808, 0
    %1811 = vmatpush.msra.mxu0 0.0
    %1812 = vmatpush.msra.mxu0 0.0
    %1813 = vmatpush.msra.mxu0 0.0
    %1814 = vmatpush.msra.mxu0 0.0
    %1815 = vmatpush.msra.mxu0 0.0
    %1816 = vmatpush.msra.mxu0 0.0
    %1817 = vmatpush.msra.mxu0 0.0
    %1818 = vmatpush.msra.mxu0 0.0
    %1819 = vmatpush.msra.mxu0 0.0
    %1820 = vmatpush.msra.mxu0 0.0
    %1821 = vmatpush.msra.mxu0 0.0
    %1822 = vmatpush.msra.mxu0 0.0
    %1823 = vmatpush.msra.mxu0 %v1804
    %1824 = vmatpush.msra.mxu0 %v1803
    %1825 = vmatpush.msra.mxu0 %v1802
    %1826 = vmatpush.msra.mxu0 %v1801
    %1827 = vmatmul.f32.gmra.mxu0 %v1809
    %v1828 = vpop.f32.mrf.mxu0
    %v1829 = vadd.f32 0.0, %v1828
    %1830 = vdwg.mxu0
    %v1831 = vmax.f32 %v1829, 0.0
    %v1832 = vld [vmem:[%s13] sm:$0x3]
    %vm1833 = vcmask 15360
    %v1835 = vsel %vm1833, %v1831, 0
    %vm1837 = vcmask 1041408
    %v1839 = vsel %vm1837, %v1832, 0
    %1841 = vmatpush.msra.mxu0 0.0
    %1842 = vmatpush.msra.mxu0 0.0
    %1843 = vmatpush.msra.mxu0 0.0
    %1844 = vmatpush.msra.mxu0 0.0
    %1845 = vmatpush.msra.mxu0 0.0
    %1846 = vmatpush.msra.mxu0 0.0
    %1847 = vmatpush.msra.mxu0 0.0
    %1848 = vmatpush.msra.mxu0 0.0
    %1849 = vmatpush.msra.mxu0 0.0
    %1850 = vmatpush.msra.mxu0 0.0
    %1851 = vmatpush.msra.mxu0 0.0
    %1852 = vmatpush.msra.mxu0 0.0
    %1853 = vmatpush.msra.mxu0 0.0
    %1854 = vmatpush.msra.mxu0 0.0
    %1855 = vmatpush.msra.mxu0 0.0
    %1856 = vmatpush.msra.mxu0 %v1839
    %1857 = vmatmul.f32.gmra.mxu0 %v1835
    %v1858 = vpop.f32.mrf.mxu0
    %v1859 = vadd.f32 0.0, %v1858
    %1860 = vdwg.mxu0
    %v1861 = vxor.u32 %v1859, 2147483648
    %v1862 = vmul.f32 %v1861, 1.442695
    %v1863 = vpow.pop %v1862
    %v1864 = vadd.f32 %v1863, 1.0
    %v1865 = vrcp.pop %v1864
    %v1866 = vmul.f32 %v1864, %v1865
    %v1867 = vsub.f32 1.0, %v1866
    %v1868 = vmul.f32 %v1865, %v1867
    %v1869 = vadd.f32 %v1865, %v1868
    %vm1870 = vweird.f32 %v1864
    %vm1871 = vweird.f32 %v1865
    %vm1872 = vmor %vm1870, %vm1871
    %v1873 = vsel %vm1872, %v1865, %v1869
    %v1874 = vand.u32 2147483647, %v1864
    %vm1875 = vcmp.eq.f32.partialorder %v1874, 8.507059e+37
    %v1876 = vand.u32 %v1864, 2147483648
    %v1877 = vor.u32 1.1754944e-38, %v1876
    %v1878 = vsel %vm1875, %v1877, %v1873
    %v1879 = vmul.f32 1.0, %v1878
    %v1881 = vrot.slane %v1879, 1
    %v1882 = vperm.slane %v1879, 0
    %v1883 = vperm.slane %v1881, 0
    %v1886 = vrot.slane %v1882, 1
    %v1887 = vrot.slane %v1882, 2
    %v1888 = vrot.slane %v1882, 3
    %v1889 = vrot.slane %v1882, 4
    %v1890 = vrot.slane %v1882, 5
    %v1891 = vrot.slane %v1882, 6
    %v1892 = vrot.slane %v1882, 7
    %v1893 = vrot.slane %v1883, 1
    %v1894 = vrot.slane %v1883, 2
    %v1895 = vrot.slane %v1883, 3
    %v1896 = vrot.slane %v1883, 4
    %v1897 = vrot.slane %v1883, 5
    %v1898 = vrot.slane %v1883, 6
    %v1899 = vrot.slane %v1883, 7
    %v1914 = vmul.f32 %v1704, %v1882
    %v1915 = vmul.f32 %v1705, %v1886
    %v1916 = vmul.f32 %v1706, %v1887
    %v1917 = vmul.f32 %v1707, %v1888
    %v1918 = vmul.f32 %v1708, %v1889
    %v1919 = vmul.f32 %v1709, %v1890
    %v1920 = vmul.f32 %v1710, %v1891
    %v1921 = vmul.f32 %v1711, %v1892
    %v1922 = vmul.f32 %v1712, %v1882
    %v1923 = vmul.f32 %v1713, %v1883
    %v1924 = vmul.f32 %v1714, %v1893
    %v1925 = vmul.f32 %v1715, %v1894
    %v1926 = vmul.f32 %v1716, %v1895
    %v1927 = vmul.f32 %v1717, %v1896
    %v1928 = vmul.f32 %v1718, %v1897
    %v1929 = vmul.f32 %v1719, %v1898
    %v1930 = vmul.f32 %v1720, %v1899
    %v1931 = vmul.f32 %v1721, %v1883
    %v1932 = vld [vmem:[%s8] sm:$0xff]
    %v1933 = vld [vmem:[%s8 + $0x8] sm:$0xff]
    %v1934 = vld [vmem:[%s8 + $0x10] sm:$0xff]
    %v1935 = vld [vmem:[%s8 + $0x18] sm:$0xff]
    %v1936 = vld [vmem:[%s8 + $0x20] sm:$0xff]
    %v1937 = vld [vmem:[%s8 + $0x28] sm:$0xff]
    %v1938 = vld [vmem:[%s8 + $0x30] sm:$0xff]
    %v1939 = vld [vmem:[%s8 + $0x38] sm:$0xff]
    %v1940 = vld [vmem:[%s8 + $0x40] sm:$0xff]
    %v1941 = vld [vmem:[%s8 + $0x48] sm:$0xff]
    %v1942 = vld [vmem:[%s8 + $0x50] sm:$0xff]
    %v1943 = vld [vmem:[%s8 + $0x58] sm:$0xff]
    %v1944 = vld [vmem:[%s8 + $0x60] sm:$0xff]
    %v1945 = vld [vmem:[%s8 + $0x68] sm:$0xff]
    %v1946 = vld [vmem:[%s8 + $0x70] sm:$0xff]
    %v1947 = vld [vmem:[%s8 + $0x78] sm:$0xff]
    %v1948 = vld [vmem:[%s8 + $0x80] sm:$0xff]
    %v1949 = vld [vmem:[%s8 + $0x88] sm:$0xff]
    %v1950 = vld [vmem:[%s8 + $0x90] sm:$0xff]
    %v1951 = vld [vmem:[%s8 + $0x98] sm:$0xff]
    %1962 = vst [vmem:[#allocation1] ss:$9 sm:$0xff] %v1915
    %s1963 = scalar_lea.vmem [#allocation1], 1
    %1964 = vst [vmem:[%s1963] ss:$9 sm:$0xff] %v1916
    %s1965 = scalar_lea.vmem [#allocation1], 2
    %1966 = vst [vmem:[%s1965] ss:$9 sm:$0xff] %v1917
    %s1967 = scalar_lea.vmem [#allocation1], 3
    %1968 = vst [vmem:[%s1967] ss:$9 sm:$0xff] %v1918
    %s1969 = scalar_lea.vmem [#allocation1], 4
    %1970 = vst [vmem:[%s1969] ss:$9 sm:$0xff] %v1919
    %s1971 = scalar_lea.vmem [#allocation1], 5
    %1972 = vst [vmem:[%s1971] ss:$9 sm:$0xff] %v1924
    %s1973 = scalar_lea.vmem [#allocation1], 6
    %1974 = vst [vmem:[%s1973] ss:$9 sm:$0xff] %v1925
    %s1975 = scalar_lea.vmem [#allocation1], 7
    %1976 = vst [vmem:[%s1975] ss:$9 sm:$0xff] %v1926
    %v1977 = vld [vmem:[#allocation1] sm:$0xff]
    %1978 = vst [vmem:[#allocation1] ss:$9 sm:$0xff] %v1927
    %1979 = vst [vmem:[%s1963] ss:$9 sm:$0xff] %v1928
    %v1980 = vld [vmem:[#allocation1] sm:$0xff]
    %v1981 = vsel %vm258, %v1977, 0
    %v1983 = vsel %vm258, %v1980, 0
    %1985 = vmatpush.msra.mxu0 0.0
    %1986 = vmatpush.msra.mxu0 0.0
    %1987 = vmatpush.msra.mxu0 0.0
    %1988 = vmatpush.msra.mxu0 0.0
    %1989 = vmatpush.msra.mxu0 0.0
    %1990 = vmatpush.msra.mxu0 0.0
    %1991 = vmatpush.msra.mxu0 0.0
    %1992 = vmatpush.msra.mxu0 0.0
    %1993 = vmatpush.msra.mxu0 0.0
    %1994 = vmatpush.msra.mxu0 0.0
    %1995 = vmatpush.msra.mxu0 0.0
    %1996 = vmatpush.msra.mxu0 0.0
    %1997 = vmatpush.msra.mxu0 %v1939
    %1998 = vmatpush.msra.mxu0 %v1938
    %1999 = vmatpush.msra.mxu0 %v1937
    %2000 = vmatpush.msra.mxu0 %v1936
    %2001 = vmatmul.f32.gmra.mxu0 %v1981
    %v2002 = vpop.f32.mrf.mxu0
    %v2003 = vadd.f32 0.0, %v2002
    %2004 = vmatmul.f32.gmra.mxu0 %v1983
    %v2005 = vpop.f32.mrf.mxu0
    %v2006 = vadd.f32 0.0, %v2005
    %2007 = vdwg.mxu0
    %2010 = vst [vmem:[#allocation1] ss:$9 sm:$0xff] %v1914
    %s2011 = scalar_lea.vmem [#allocation1], 1
    %2012 = vst [vmem:[%s2011] ss:$9 sm:$0xff] %v1915
    %s2013 = scalar_lea.vmem [#allocation1], 2
    %2014 = vst [vmem:[%s2013] ss:$9 sm:$0xff] %v1916
    %s2015 = scalar_lea.vmem [#allocation1], 3
    %2016 = vst [vmem:[%s2015] ss:$9 sm:$0xff] %v1917
    %s2017 = scalar_lea.vmem [#allocation1], 4
    %2018 = vst [vmem:[%s2017] ss:$9 sm:$0xff] %v1918
    %s2019 = scalar_lea.vmem [#allocation1], 5
    %2020 = vst [vmem:[%s2019] ss:$9 sm:$0xff] %v1923
    %s2021 = scalar_lea.vmem [#allocation1], 6
    %2022 = vst [vmem:[%s2021] ss:$9 sm:$0xff] %v1924
    %s2023 = scalar_lea.vmem [#allocation1], 7
    %2024 = vst [vmem:[%s2023] ss:$9 sm:$0xff] %v1925
    %v2025 = vld [vmem:[#allocation1] sm:$0xff]
    %2026 = vst [vmem:[#allocation1] ss:$9 sm:$0xff] %v1926
    %2027 = vst [vmem:[%s2011] ss:$9 sm:$0xff] %v1927
    %v2028 = vld [vmem:[#allocation1] sm:$0xff]
    %v2029 = vsel %vm258, %v2025, 0
    %v2031 = vsel %vm258, %v2028, 0
    %2033 = vmatpush.msra.mxu0 0.0
    %2034 = vmatpush.msra.mxu0 0.0
    %2035 = vmatpush.msra.mxu0 0.0
    %2036 = vmatpush.msra.mxu0 0.0
    %2037 = vmatpush.msra.mxu0 0.0
    %2038 = vmatpush.msra.mxu0 0.0
    %2039 = vmatpush.msra.mxu0 0.0
    %2040 = vmatpush.msra.mxu0 0.0
    %2041 = vmatpush.msra.mxu0 0.0
    %2042 = vmatpush.msra.mxu0 0.0
    %2043 = vmatpush.msra.mxu0 0.0
    %2044 = vmatpush.msra.mxu0 0.0
    %2045 = vmatpush.msra.mxu0 %v1935
    %2046 = vmatpush.msra.mxu0 %v1934
    %2047 = vmatpush.msra.mxu0 %v1933
    %2048 = vmatpush.msra.mxu0 %v1932
    %2049 = vmatmul.f32.gmra.mxu0 %v2029
    %v2050 = vpop.f32.mrf.mxu0
    %v2051 = vadd.f32 %v2003, %v2050
    %2052 = vmatmul.f32.gmra.mxu0 %v2031
    %v2053 = vpop.f32.mrf.mxu0
    %v2054 = vadd.f32 %v2006, %v2053
    %2055 = vdwg.mxu0
    %v2058 = vrot.slane %v2051, 1
    %v2059 = vrot.slane %v2051, 2
    %v2060 = vrot.slane %v2051, 3
    %v2061 = vrot.slane %v2051, 4
    %v2062 = vrot.slane %v2051, 5
    %v2063 = vrot.slane %v2051, 6
    %v2064 = vrot.slane %v2051, 7
    %v2065 = vrot.slane %v2054, 1
    %2076 = vst [vmem:[#allocation1] ss:$9 sm:$0xff] %v1916
    %s2077 = scalar_lea.vmem [#allocation1], 1
    %2078 = vst [vmem:[%s2077] ss:$9 sm:$0xff] %v1917
    %s2079 = scalar_lea.vmem [#allocation1], 2
    %2080 = vst [vmem:[%s2079] ss:$9 sm:$0xff] %v1918
    %s2081 = scalar_lea.vmem [#allocation1], 3
    %2082 = vst [vmem:[%s2081] ss:$9 sm:$0xff] %v1919
    %s2083 = scalar_lea.vmem [#allocation1], 4
    %2084 = vst [vmem:[%s2083] ss:$9 sm:$0xff] %v1920
    %s2085 = scalar_lea.vmem [#allocation1], 5
    %2086 = vst [vmem:[%s2085] ss:$9 sm:$0xff] %v1925
    %s2087 = scalar_lea.vmem [#allocation1], 6
    %2088 = vst [vmem:[%s2087] ss:$9 sm:$0xff] %v1926
    %s2089 = scalar_lea.vmem [#allocation1], 7
    %2090 = vst [vmem:[%s2089] ss:$9 sm:$0xff] %v1927
    %v2091 = vld [vmem:[#allocation1] sm:$0xff]
    %2092 = vst [vmem:[#allocation1] ss:$9 sm:$0xff] %v1928
    %2093 = vst [vmem:[%s2077] ss:$9 sm:$0xff] %v1929
    %v2094 = vld [vmem:[#allocation1] sm:$0xff]
    %v2095 = vsel %vm258, %v2091, 0
    %v2097 = vsel %vm258, %v2094, 0
    %2099 = vmatpush.msra.mxu0 0.0
    %2100 = vmatpush.msra.mxu0 0.0
    %2101 = vmatpush.msra.mxu0 0.0
    %2102 = vmatpush.msra.mxu0 0.0
    %2103 = vmatpush.msra.mxu0 0.0
    %2104 = vmatpush.msra.mxu0 0.0
    %2105 = vmatpush.msra.mxu0 0.0
    %2106 = vmatpush.msra.mxu0 0.0
    %2107 = vmatpush.msra.mxu0 0.0
    %2108 = vmatpush.msra.mxu0 0.0
    %2109 = vmatpush.msra.mxu0 0.0
    %2110 = vmatpush.msra.mxu0 0.0
    %2111 = vmatpush.msra.mxu0 %v1943
    %2112 = vmatpush.msra.mxu0 %v1942
    %2113 = vmatpush.msra.mxu0 %v1941
    %2114 = vmatpush.msra.mxu0 %v1940
    %2115 = vmatmul.f32.gmra.mxu0 %v2095
    %v2116 = vpop.f32.mrf.mxu0
    %v2117 = vadd.f32 0.0, %v2116
    %2118 = vmatmul.f32.gmra.mxu0 %v2097
    %v2119 = vpop.f32.mrf.mxu0
    %v2120 = vadd.f32 0.0, %v2119
    %2121 = vdwg.mxu0
    %v2124 = vrot.slane %v2117, 1
    %v2125 = vrot.slane %v2117, 2
    %v2126 = vrot.slane %v2117, 3
    %v2127 = vrot.slane %v2117, 4
    %v2128 = vrot.slane %v2117, 5
    %v2129 = vrot.slane %v2117, 6
    %v2130 = vrot.slane %v2117, 7
    %v2131 = vrot.slane %v2120, 1
    %v2140 = vadd.f32 %v2051, %v2117
    %v2141 = vadd.f32 %v2058, %v2124
    %v2142 = vadd.f32 %v2059, %v2125
    %v2143 = vadd.f32 %v2060, %v2126
    %v2144 = vadd.f32 %v2061, %v2127
    %v2145 = vadd.f32 %v2062, %v2128
    %v2146 = vadd.f32 %v2063, %v2129
    %v2147 = vadd.f32 %v2064, %v2130
    %v2148 = vadd.f32 %v2054, %v2120
    %v2149 = vadd.f32 %v2065, %v2131
    %2152 = vst [vmem:[#allocation1] ss:$9 sm:$0xff] %v1917
    %s2153 = scalar_lea.vmem [#allocation1], 1
    %2154 = vst [vmem:[%s2153] ss:$9 sm:$0xff] %v1918
    %s2155 = scalar_lea.vmem [#allocation1], 2
    %2156 = vst [vmem:[%s2155] ss:$9 sm:$0xff] %v1919
    %s2157 = scalar_lea.vmem [#allocation1], 3
    %2158 = vst [vmem:[%s2157] ss:$9 sm:$0xff] %v1920
    %s2159 = scalar_lea.vmem [#allocation1], 4
    %2160 = vst [vmem:[%s2159] ss:$9 sm:$0xff] %v1921
    %s2161 = scalar_lea.vmem [#allocation1], 5
    %2162 = vst [vmem:[%s2161] ss:$9 sm:$0xff] %v1926
    %s2163 = scalar_lea.vmem [#allocation1], 6
    %2164 = vst [vmem:[%s2163] ss:$9 sm:$0xff] %v1927
    %s2165 = scalar_lea.vmem [#allocation1], 7
    %2166 = vst [vmem:[%s2165] ss:$9 sm:$0xff] %v1928
    %v2167 = vld [vmem:[#allocation1] sm:$0xff]
    %2168 = vst [vmem:[#allocation1] ss:$9 sm:$0xff] %v1929
    %2169 = vst [vmem:[%s2153] ss:$9 sm:$0xff] %v1930
    %v2170 = vld [vmem:[#allocation1] sm:$0xff]
    %v2171 = vsel %vm258, %v2167, 0
    %v2173 = vsel %vm258, %v2170, 0
    %2175 = vmatpush.msra.mxu0 0.0
    %2176 = vmatpush.msra.mxu0 0.0
    %2177 = vmatpush.msra.mxu0 0.0
    %2178 = vmatpush.msra.mxu0 0.0
    %2179 = vmatpush.msra.mxu0 0.0
    %2180 = vmatpush.msra.mxu0 0.0
    %2181 = vmatpush.msra.mxu0 0.0
    %2182 = vmatpush.msra.mxu0 0.0
    %2183 = vmatpush.msra.mxu0 0.0
    %2184 = vmatpush.msra.mxu0 0.0
    %2185 = vmatpush.msra.mxu0 0.0
    %2186 = vmatpush.msra.mxu0 0.0
    %2187 = vmatpush.msra.mxu0 %v1947
    %2188 = vmatpush.msra.mxu0 %v1946
    %2189 = vmatpush.msra.mxu0 %v1945
    %2190 = vmatpush.msra.mxu0 %v1944
    %2191 = vmatmul.f32.gmra.mxu0 %v2171
    %v2192 = vpop.f32.mrf.mxu0
    %v2193 = vadd.f32 0.0, %v2192
    %2194 = vmatmul.f32.gmra.mxu0 %v2173
    %v2195 = vpop.f32.mrf.mxu0
    %v2196 = vadd.f32 0.0, %v2195
    %2197 = vdwg.mxu0
    %v2200 = vrot.slane %v2193, 1
    %v2201 = vrot.slane %v2193, 2
    %v2202 = vrot.slane %v2193, 3
    %v2203 = vrot.slane %v2193, 4
    %v2204 = vrot.slane %v2193, 5
    %v2205 = vrot.slane %v2193, 6
    %v2206 = vrot.slane %v2193, 7
    %v2207 = vrot.slane %v2196, 1
    %v2216 = vadd.f32 %v2140, %v2193
    %v2217 = vadd.f32 %v2141, %v2200
    %v2218 = vadd.f32 %v2142, %v2201
    %v2219 = vadd.f32 %v2143, %v2202
    %v2220 = vadd.f32 %v2144, %v2203
    %v2221 = vadd.f32 %v2145, %v2204
    %v2222 = vadd.f32 %v2146, %v2205
    %v2223 = vadd.f32 %v2147, %v2206
    %v2224 = vadd.f32 %v2148, %v2196
    %v2225 = vadd.f32 %v2149, %v2207
    %2228 = vst [vmem:[#allocation1] ss:$9 sm:$0xff] %v1918
    %s2229 = scalar_lea.vmem [#allocation1], 1
    %2230 = vst [vmem:[%s2229] ss:$9 sm:$0xff] %v1919
    %s2231 = scalar_lea.vmem [#allocation1], 2
    %2232 = vst [vmem:[%s2231] ss:$9 sm:$0xff] %v1920
    %s2233 = scalar_lea.vmem [#allocation1], 3
    %2234 = vst [vmem:[%s2233] ss:$9 sm:$0xff] %v1921
    %s2235 = scalar_lea.vmem [#allocation1], 4
    %2236 = vst [vmem:[%s2235] ss:$9 sm:$0xff] %v1922
    %s2237 = scalar_lea.vmem [#allocation1], 5
    %2238 = vst [vmem:[%s2237] ss:$9 sm:$0xff] %v1927
    %s2239 = scalar_lea.vmem [#allocation1], 6
    %2240 = vst [vmem:[%s2239] ss:$9 sm:$0xff] %v1928
    %s2241 = scalar_lea.vmem [#allocation1], 7
    %2242 = vst [vmem:[%s2241] ss:$9 sm:$0xff] %v1929
    %v2243 = vld [vmem:[#allocation1] sm:$0xff]
    %2244 = vst [vmem:[#allocation1] ss:$9 sm:$0xff] %v1930
    %2245 = vst [vmem:[%s2229] ss:$9 sm:$0xff] %v1931
    %v2246 = vld [vmem:[#allocation1] sm:$0xff]
    %v2247 = vsel %vm258, %v2243, 0
    %v2249 = vsel %vm258, %v2246, 0
    %2251 = vmatpush.msra.mxu0 0.0
    %2252 = vmatpush.msra.mxu0 0.0
    %2253 = vmatpush.msra.mxu0 0.0
    %2254 = vmatpush.msra.mxu0 0.0
    %2255 = vmatpush.msra.mxu0 0.0
    %2256 = vmatpush.msra.mxu0 0.0
    %2257 = vmatpush.msra.mxu0 0.0
    %2258 = vmatpush.msra.mxu0 0.0
    %2259 = vmatpush.msra.mxu0 0.0
    %2260 = vmatpush.msra.mxu0 0.0
    %2261 = vmatpush.msra.mxu0 0.0
    %2262 = vmatpush.msra.mxu0 0.0
    %2263 = vmatpush.msra.mxu0 %v1951
    %2264 = vmatpush.msra.mxu0 %v1950
    %2265 = vmatpush.msra.mxu0 %v1949
    %2266 = vmatpush.msra.mxu0 %v1948
    %2267 = vmatmul.f32.gmra.mxu0 %v2247
    %v2268 = vpop.f32.mrf.mxu0
    %v2269 = vadd.f32 0.0, %v2268
    %2270 = vmatmul.f32.gmra.mxu0 %v2249
    %v2271 = vpop.f32.mrf.mxu0
    %v2272 = vadd.f32 0.0, %v2271
    %2273 = vdwg.mxu0
    %v2276 = vrot.slane %v2269, 1
    %v2277 = vrot.slane %v2269, 2
    %v2278 = vrot.slane %v2269, 3
    %v2279 = vrot.slane %v2269, 4
    %v2280 = vrot.slane %v2269, 5
    %v2281 = vrot.slane %v2269, 6
    %v2282 = vrot.slane %v2269, 7
    %v2283 = vrot.slane %v2272, 1
    %v2292 = vadd.f32 %v2216, %v2269
    %v2293 = vadd.f32 %v2217, %v2276
    %v2294 = vadd.f32 %v2218, %v2277
    %v2295 = vadd.f32 %v2219, %v2278
    %v2296 = vadd.f32 %v2220, %v2279
    %v2297 = vadd.f32 %v2221, %v2280
    %v2298 = vadd.f32 %v2222, %v2281
    %v2299 = vadd.f32 %v2223, %v2282
    %v2300 = vadd.f32 %v2224, %v2272
    %v2301 = vadd.f32 %v2225, %v2283
    %v2302 = vld [vmem:[%s9] sm:$0x1]
    %v2304 = vperm.slane %v2302, 0
    %v2306 = vrot.slane %v2304, 1
    %v2307 = vrot.slane %v2304, 2
    %v2308 = vrot.slane %v2304, 3
    %v2309 = vrot.slane %v2304, 4
    %v2314 = vadd.f32 %v2292, %v2304
    %v2315 = vadd.f32 %v2293, %v2306
    %v2316 = vadd.f32 %v2294, %v2307
    %v2317 = vadd.f32 %v2295, %v2308
    %v2318 = vadd.f32 %v2296, %v2309
    %v2319 = vadd.f32 %v2297, %v2304
    %v2320 = vadd.f32 %v2298, %v2306
    %v2321 = vadd.f32 %v2299, %v2307
    %v2322 = vadd.f32 %v2300, %v2308
    %v2323 = vadd.f32 %v2301, %v2309
    %v2324 = vmax.f32 %v2314, 0.0
    %v2325 = vmax.f32 %v2315, 0.0
    %v2326 = vmax.f32 %v2316, 0.0
    %v2327 = vmax.f32 %v2317, 0.0
    %v2328 = vmax.f32 %v2318, 0.0
    %v2329 = vmax.f32 %v2319, 0.0
    %v2330 = vmax.f32 %v2320, 0.0
    %v2331 = vmax.f32 %v2321, 0.0
    %v2332 = vmax.f32 %v2322, 0.0
    %v2333 = vmax.f32 %v2323, 0.0
    %2344 = vst [vmem:[#allocation1] ss:$9 sm:$0xff] %v2324
    %s2345 = scalar_lea.vmem [#allocation1], 1
    %2346 = vst [vmem:[%s2345] ss:$9 sm:$0xff] %v2325
    %s2347 = scalar_lea.vmem [#allocation1], 2
    %2348 = vst [vmem:[%s2347] ss:$9 sm:$0xff] %v2326
    %s2349 = scalar_lea.vmem [#allocation1], 3
    %2350 = vst [vmem:[%s2349] ss:$9 sm:$0xff] %v2327
    %s2351 = scalar_lea.vmem [#allocation1], 4
    %2352 = vst [vmem:[%s2351] ss:$9 sm:$0xff] %v2328
    %v2353 = vld [vmem:[#allocation1] sm:$0xff]
    %2354 = vst [vmem:[#allocation1] ss:$9 sm:$0xff] %v2329
    %2355 = vst [vmem:[%s2345] ss:$9 sm:$0xff] %v2330
    %2356 = vst [vmem:[%s2347] ss:$9 sm:$0xff] %v2331
    %2357 = vst [vmem:[%s2349] ss:$9 sm:$0xff] %v2332
    %2358 = vst [vmem:[%s2351] ss:$9 sm:$0xff] %v2333
    %v2359 = vld [vmem:[#allocation1] sm:$0xff]
    %vm2362 = vcmask 258048
    %v2363 = vsel %vm2362, %v2353, 0.0
    %v2364 = vrot.slane %v2363, 4
    %v2365 = vadd.f32 %v2363, %v2364
    %v2366 = vrot.slane %v2365, 2
    %v2367 = vadd.f32 %v2365, %v2366
    %v2368 = vrot.slane %v2367, 1
    %v2369 = vadd.f32 %v2367, %v2368
    %v2370 = vsel %vm2362, %v2359, 0.0
    %v2371 = vrot.slane %v2370, 4
    %v2372 = vadd.f32 %v2370, %v2371
    %v2373 = vrot.slane %v2372, 2
    %v2374 = vadd.f32 %v2372, %v2373
    %v2375 = vrot.slane %v2374, 1
    %v2376 = vadd.f32 %v2374, %v2375
    %v2377 = vrcp.pop 5.0
    %v2378 = vmul.f32 5.0, %v2377
    %v2379 = vsub.f32 1.0, %v2378
    %v2380 = vmul.f32 %v2377, %v2379
    %v2381 = vadd.f32 %v2377, %v2380
    %vm2382 = vweird.f32 %v2377
    %v2383 = vsel %vm2382, %v2377, %v2381
    %v2384 = vmul.f32 %v2369, %v2383
    %v2385 = vmul.f32 %v2376, %v2383
    %v2386 = vld [vmem:[%s14] sm:$0xff]
    %v2387 = vld [vmem:[%s14 + $0x8] sm:$0xff]
    %v2388 = vld [vmem:[%s14 + $0x10] sm:$0xff]
    %v2389 = vld [vmem:[%s14 + $0x18] sm:$0xff]
    %v2392 = vsel %vm1807, %v2385, %v2384
    %v2393 = vsel %vm258, %v2392, 0
    %2395 = vmatpush.msra.mxu0 0.0
    %2396 = vmatpush.msra.mxu0 0.0
    %2397 = vmatpush.msra.mxu0 0.0
    %2398 = vmatpush.msra.mxu0 0.0
    %2399 = vmatpush.msra.mxu0 0.0
    %2400 = vmatpush.msra.mxu0 0.0
    %2401 = vmatpush.msra.mxu0 0.0
    %2402 = vmatpush.msra.mxu0 0.0
    %2403 = vmatpush.msra.mxu0 0.0
    %2404 = vmatpush.msra.mxu0 0.0
    %2405 = vmatpush.msra.mxu0 0.0
    %2406 = vmatpush.msra.mxu0 0.0
    %2407 = vmatpush.msra.mxu0 %v2389
    %2408 = vmatpush.msra.mxu0 %v2388
    %2409 = vmatpush.msra.mxu0 %v2387
    %2410 = vmatpush.msra.mxu0 %v2386
    %2411 = vmatmul.f32.gmra.mxu0 %v2393
    %v2412 = vpop.f32.mrf.mxu0
    %v2413 = vadd.f32 0.0, %v2412
    %2414 = vdwg.mxu0
    %v2415 = vmax.f32 %v2413, 0.0
    %v2416 = vld [vmem:[%s15] sm:$0x3]
    %v2418 = vsel %vm1833, %v2415, 0
    %v2421 = vsel %vm1837, %v2416, 0
    %2423 = vmatpush.msra.mxu0 0.0
    %2424 = vmatpush.msra.mxu0 0.0
    %2425 = vmatpush.msra.mxu0 0.0
    %2426 = vmatpush.msra.mxu0 0.0
    %2427 = vmatpush.msra.mxu0 0.0
    %2428 = vmatpush.msra.mxu0 0.0
    %2429 = vmatpush.msra.mxu0 0.0
    %2430 = vmatpush.msra.mxu0 0.0
    %2431 = vmatpush.msra.mxu0 0.0
    %2432 = vmatpush.msra.mxu0 0.0
    %2433 = vmatpush.msra.mxu0 0.0
    %2434 = vmatpush.msra.mxu0 0.0
    %2435 = vmatpush.msra.mxu0 0.0
    %2436 = vmatpush.msra.mxu0 0.0
    %2437 = vmatpush.msra.mxu0 0.0
    %2438 = vmatpush.msra.mxu0 %v2421
    %2439 = vmatmul.f32.gmra.mxu0 %v2418
    %v2440 = vpop.f32.mrf.mxu0
    %v2441 = vadd.f32 0.0, %v2440
    %2442 = vdwg.mxu0
    %v2443 = vxor.u32 %v2441, 2147483648
    %v2444 = vmul.f32 %v2443, 1.442695
    %v2445 = vpow.pop %v2444
    %v2446 = vadd.f32 %v2445, 1.0
    %v2447 = vrcp.pop %v2446
    %v2448 = vmul.f32 %v2446, %v2447
    %v2449 = vsub.f32 1.0, %v2448
    %v2450 = vmul.f32 %v2447, %v2449
    %v2451 = vadd.f32 %v2447, %v2450
    %vm2452 = vweird.f32 %v2446
    %vm2453 = vweird.f32 %v2447
    %vm2454 = vmor %vm2452, %vm2453
    %v2455 = vsel %vm2454, %v2447, %v2451
    %v2456 = vand.u32 2147483647, %v2446
    %vm2457 = vcmp.eq.f32.partialorder %v2456, 8.507059e+37
    %v2458 = vand.u32 %v2446, 2147483648
    %v2459 = vor.u32 1.1754944e-38, %v2458
    %v2460 = vsel %vm2457, %v2459, %v2455
    %v2461 = vmul.f32 1.0, %v2460
    %v2463 = vrot.slane %v2461, 1
    %v2464 = vperm.slane %v2461, 0
    %v2465 = vperm.slane %v2463, 0
    %v2468 = vrot.slane %v2464, 1
    %v2469 = vrot.slane %v2464, 2
    %v2470 = vrot.slane %v2464, 3
    %v2471 = vrot.slane %v2464, 4
    %v2472 = vrot.slane %v2465, 1
    %v2473 = vrot.slane %v2465, 2
    %v2474 = vrot.slane %v2465, 3
    %v2475 = vrot.slane %v2465, 4
    %v2484 = vmul.f32 %v2324, %v2464
    %v2485 = vmul.f32 %v2325, %v2468
    %v2486 = vmul.f32 %v2326, %v2469
    %v2487 = vmul.f32 %v2327, %v2470
    %v2488 = vmul.f32 %v2328, %v2471
    %v2489 = vmul.f32 %v2329, %v2465
    %v2490 = vmul.f32 %v2330, %v2472
    %v2491 = vmul.f32 %v2331, %v2473
    %v2492 = vmul.f32 %v2332, %v2474
    %v2493 = vmul.f32 %v2333, %v2475
    %v2494 = vld [vmem:[%s10] sm:$0xff]
    %v2495 = vld [vmem:[%s10 + $0x8] sm:$0xff]
    %v2496 = vld [vmem:[%s10 + $0x10] sm:$0xff]
    %v2497 = vld [vmem:[%s10 + $0x18] sm:$0xff]
    %v2498 = vld [vmem:[%s10 + $0x20] sm:$0xff]
    %v2499 = vld [vmem:[%s10 + $0x28] sm:$0xff]
    %v2500 = vld [vmem:[%s10 + $0x30] sm:$0xff]
    %v2501 = vld [vmem:[%s10 + $0x38] sm:$0xff]
    %v2502 = vld [vmem:[%s10 + $0x40] sm:$0xff]
    %v2503 = vld [vmem:[%s10 + $0x48] sm:$0xff]
    %v2504 = vld [vmem:[%s10 + $0x50] sm:$0xff]
    %v2505 = vld [vmem:[%s10 + $0x58] sm:$0xff]
    %2512 = vst [vmem:[#allocation1] ss:$9 sm:$0xff] %v2485
    %s2513 = scalar_lea.vmem [#allocation1], 1
    %2514 = vst [vmem:[%s2513] ss:$9 sm:$0xff] %v2486
    %s2515 = scalar_lea.vmem [#allocation1], 2
    %2516 = vst [vmem:[%s2515] ss:$9 sm:$0xff] %v2487
    %s2517 = scalar_lea.vmem [#allocation1], 3
    %2518 = vst [vmem:[%s2517] ss:$9 sm:$0xff] %v2490
    %s2519 = scalar_lea.vmem [#allocation1], 4
    %2520 = vst [vmem:[%s2519] ss:$9 sm:$0xff] %v2491
    %s2521 = scalar_lea.vmem [#allocation1], 5
    %2522 = vst [vmem:[%s2521] ss:$9 sm:$0xff] %v2492
    %v2523 = vld [vmem:[#allocation1] sm:$0xff]
    %v2524 = vsel %vm258, %v2523, 0
    %2526 = vmatpush.msra.mxu0 0.0
    %2527 = vmatpush.msra.mxu0 0.0
    %2528 = vmatpush.msra.mxu0 0.0
    %2529 = vmatpush.msra.mxu0 0.0
    %2530 = vmatpush.msra.mxu0 0.0
    %2531 = vmatpush.msra.mxu0 0.0
    %2532 = vmatpush.msra.mxu0 0.0
    %2533 = vmatpush.msra.mxu0 0.0
    %2534 = vmatpush.msra.mxu0 0.0
    %2535 = vmatpush.msra.mxu0 0.0
    %2536 = vmatpush.msra.mxu0 0.0
    %2537 = vmatpush.msra.mxu0 0.0
    %2538 = vmatpush.msra.mxu0 %v2501
    %2539 = vmatpush.msra.mxu0 %v2500
    %2540 = vmatpush.msra.mxu0 %v2499
    %2541 = vmatpush.msra.mxu0 %v2498
    %2542 = vmatmul.f32.gmra.mxu0 %v2524
    %v2543 = vpop.f32.mrf.mxu0
    %v2544 = vadd.f32 0.0, %v2543
    %2545 = vdwg.mxu0
    %2548 = vst [vmem:[#allocation1] ss:$9 sm:$0xff] %v2484
    %s2549 = scalar_lea.vmem [#allocation1], 1
    %2550 = vst [vmem:[%s2549] ss:$9 sm:$0xff] %v2485
    %s2551 = scalar_lea.vmem [#allocation1], 2
    %2552 = vst [vmem:[%s2551] ss:$9 sm:$0xff] %v2486
    %s2553 = scalar_lea.vmem [#allocation1], 3
    %2554 = vst [vmem:[%s2553] ss:$9 sm:$0xff] %v2489
    %s2555 = scalar_lea.vmem [#allocation1], 4
    %2556 = vst [vmem:[%s2555] ss:$9 sm:$0xff] %v2490
    %s2557 = scalar_lea.vmem [#allocation1], 5
    %2558 = vst [vmem:[%s2557] ss:$9 sm:$0xff] %v2491
    %v2559 = vld [vmem:[#allocation1] sm:$0xff]
    %v2560 = vsel %vm258, %v2559, 0
    %2562 = vmatpush.msra.mxu0 0.0
    %2563 = vmatpush.msra.mxu0 0.0
    %2564 = vmatpush.msra.mxu0 0.0
    %2565 = vmatpush.msra.mxu0 0.0
    %2566 = vmatpush.msra.mxu0 0.0
    %2567 = vmatpush.msra.mxu0 0.0
    %2568 = vmatpush.msra.mxu0 0.0
    %2569 = vmatpush.msra.mxu0 0.0
    %2570 = vmatpush.msra.mxu0 0.0
    %2571 = vmatpush.msra.mxu0 0.0
    %2572 = vmatpush.msra.mxu0 0.0
    %2573 = vmatpush.msra.mxu0 0.0
    %2574 = vmatpush.msra.mxu0 %v2497
    %2575 = vmatpush.msra.mxu0 %v2496
    %2576 = vmatpush.msra.mxu0 %v2495
    %2577 = vmatpush.msra.mxu0 %v2494
    %2578 = vmatmul.f32.gmra.mxu0 %v2560
    %v2579 = vpop.f32.mrf.mxu0
    %v2580 = vadd.f32 %v2544, %v2579
    %2581 = vdwg.mxu0
    %v2583 = vrot.slane %v2580, 1
    %v2584 = vrot.slane %v2580, 2
    %v2585 = vrot.slane %v2580, 3
    %v2586 = vrot.slane %v2580, 4
    %v2587 = vrot.slane %v2580, 5
    %2595 = vst [vmem:[#allocation1] ss:$9 sm:$0xff] %v2486
    %s2596 = scalar_lea.vmem [#allocation1], 1
    %2597 = vst [vmem:[%s2596] ss:$9 sm:$0xff] %v2487
    %s2598 = scalar_lea.vmem [#allocation1], 2
    %2599 = vst [vmem:[%s2598] ss:$9 sm:$0xff] %v2488
    %s2600 = scalar_lea.vmem [#allocation1], 3
    %2601 = vst [vmem:[%s2600] ss:$9 sm:$0xff] %v2491
    %s2602 = scalar_lea.vmem [#allocation1], 4
    %2603 = vst [vmem:[%s2602] ss:$9 sm:$0xff] %v2492
    %s2604 = scalar_lea.vmem [#allocation1], 5
    %2605 = vst [vmem:[%s2604] ss:$9 sm:$0xff] %v2493
    %v2606 = vld [vmem:[#allocation1] sm:$0xff]
    %v2607 = vsel %vm258, %v2606, 0
    %2609 = vmatpush.msra.mxu0 0.0
    %2610 = vmatpush.msra.mxu0 0.0
    %2611 = vmatpush.msra.mxu0 0.0
    %2612 = vmatpush.msra.mxu0 0.0
    %2613 = vmatpush.msra.mxu0 0.0
    %2614 = vmatpush.msra.mxu0 0.0
    %2615 = vmatpush.msra.mxu0 0.0
    %2616 = vmatpush.msra.mxu0 0.0
    %2617 = vmatpush.msra.mxu0 0.0
    %2618 = vmatpush.msra.mxu0 0.0
    %2619 = vmatpush.msra.mxu0 0.0
    %2620 = vmatpush.msra.mxu0 0.0
    %2621 = vmatpush.msra.mxu0 %v2505
    %2622 = vmatpush.msra.mxu0 %v2504
    %2623 = vmatpush.msra.mxu0 %v2503
    %2624 = vmatpush.msra.mxu0 %v2502
    %2625 = vmatmul.f32.gmra.mxu0 %v2607
    %v2626 = vpop.f32.mrf.mxu0
    %v2627 = vadd.f32 0.0, %v2626
    %2628 = vdwg.mxu0
    %v2630 = vrot.slane %v2627, 1
    %v2631 = vrot.slane %v2627, 2
    %v2632 = vrot.slane %v2627, 3
    %v2633 = vrot.slane %v2627, 4
    %v2634 = vrot.slane %v2627, 5
    %v2640 = vadd.f32 %v2580, %v2627
    %v2641 = vadd.f32 %v2583, %v2630
    %v2642 = vadd.f32 %v2584, %v2631
    %v2643 = vadd.f32 %v2585, %v2632
    %v2644 = vadd.f32 %v2586, %v2633
    %v2645 = vadd.f32 %v2587, %v2634
    %v2646 = vld [vmem:[%s11] sm:$0x1]
    %v2648 = vperm.slane %v2646, 0
    %v2650 = vrot.slane %v2648, 1
    %v2651 = vrot.slane %v2648, 2
    %v2654 = vadd.f32 %v2640, %v2648
    %v2655 = vadd.f32 %v2641, %v2650
    %v2656 = vadd.f32 %v2642, %v2651
    %v2657 = vadd.f32 %v2643, %v2648
    %v2658 = vadd.f32 %v2644, %v2650
    %v2659 = vadd.f32 %v2645, %v2651
    %v2660 = vmax.f32 %v2654, 0.0
    %v2661 = vmax.f32 %v2655, 0.0
    %v2662 = vmax.f32 %v2656, 0.0
    %v2663 = vmax.f32 %v2657, 0.0
    %v2664 = vmax.f32 %v2658, 0.0
    %v2665 = vmax.f32 %v2659, 0.0
    %2672 = vst [vmem:[#allocation1] ss:$9 sm:$0xff] %v2660
    %s2673 = scalar_lea.vmem [#allocation1], 1
    %2674 = vst [vmem:[%s2673] ss:$9 sm:$0xff] %v2661
    %s2675 = scalar_lea.vmem [#allocation1], 2
    %2676 = vst [vmem:[%s2675] ss:$9 sm:$0xff] %v2662
    %v2677 = vld [vmem:[#allocation1] sm:$0xff]
    %2678 = vst [vmem:[#allocation1] ss:$9 sm:$0xff] %v2663
    %2679 = vst [vmem:[%s2673] ss:$9 sm:$0xff] %v2664
    %2680 = vst [vmem:[%s2675] ss:$9 sm:$0xff] %v2665
    %v2681 = vld [vmem:[#allocation1] sm:$0xff]
    %vm2684 = vcmask 256000
    %v2685 = vsel %vm2684, %v2677, 0.0
    %v2686 = vrot.slane %v2685, 4
    %v2687 = vadd.f32 %v2685, %v2686
    %v2688 = vrot.slane %v2687, 2
    %v2689 = vadd.f32 %v2687, %v2688
    %v2690 = vrot.slane %v2689, 1
    %v2691 = vadd.f32 %v2689, %v2690
    %v2692 = vsel %vm2684, %v2681, 0.0
    %v2693 = vrot.slane %v2692, 4
    %v2694 = vadd.f32 %v2692, %v2693
    %v2695 = vrot.slane %v2694, 2
    %v2696 = vadd.f32 %v2694, %v2695
    %v2697 = vrot.slane %v2696, 1
    %v2698 = vadd.f32 %v2696, %v2697
    %v2699 = vrcp.pop 3.0
    %v2700 = vmul.f32 3.0, %v2699
    %v2701 = vsub.f32 1.0, %v2700
    %v2702 = vmul.f32 %v2699, %v2701
    %v2703 = vadd.f32 %v2699, %v2702
    %vm2704 = vweird.f32 %v2699
    %v2705 = vsel %vm2704, %v2699, %v2703
    %v2706 = vmul.f32 %v2691, %v2705
    %v2707 = vmul.f32 %v2698, %v2705
    %v2708 = vld [vmem:[%s16] sm:$0xff]
    %v2709 = vld [vmem:[%s16 + $0x8] sm:$0xff]
    %v2710 = vld [vmem:[%s16 + $0x10] sm:$0xff]
    %v2711 = vld [vmem:[%s16 + $0x18] sm:$0xff]
    %v2712 = vld [vmem:[%s17] sm:$0xff]
    %v2713 = vld [vmem:[%s17 + $0x8] sm:$0xff]
    %v2714 = vld [vmem:[%s17 + $0x10] sm:$0xff]
    %v2715 = vld [vmem:[%s17 + $0x18] sm:$0xff]
    %v2718 = vsel %vm1807, %v2707, %v2706
    %v2719 = vsel %vm258, %v2718, 0
    %2721 = vmatpush.msra.mxu0 0.0
    %2722 = vmatpush.msra.mxu0 0.0
    %2723 = vmatpush.msra.mxu0 0.0
    %2724 = vmatpush.msra.mxu0 0.0
    %2725 = vmatpush.msra.mxu0 0.0
    %2726 = vmatpush.msra.mxu0 0.0
    %2727 = vmatpush.msra.mxu0 0.0
    %2728 = vmatpush.msra.mxu0 0.0
    %2729 = vmatpush.msra.mxu0 0.0
    %2730 = vmatpush.msra.mxu0 0.0
    %2731 = vmatpush.msra.mxu0 0.0
    %2732 = vmatpush.msra.mxu0 0.0
    %2733 = vmatpush.msra.mxu0 %v2715
    %2734 = vmatpush.msra.mxu0 %v2714
    %2735 = vmatpush.msra.mxu0 %v2713
    %2736 = vmatpush.msra.mxu0 %v2712
    %2737 = vmatmul.f32.gmra.mxu0 %v2719
    %v2738 = vpop.f32.mrf.mxu0
    %v2739 = vadd.f32 0.0, %v2738
    %2740 = vdwg.mxu0
    %v2742 = vsel %vm258, %v1543, 0
    %2744 = vmatpush.msra.mxu0 0.0
    %2745 = vmatpush.msra.mxu0 0.0
    %2746 = vmatpush.msra.mxu0 0.0
    %2747 = vmatpush.msra.mxu0 0.0
    %2748 = vmatpush.msra.mxu0 0.0
    %2749 = vmatpush.msra.mxu0 0.0
    %2750 = vmatpush.msra.mxu0 0.0
    %2751 = vmatpush.msra.mxu0 0.0
    %2752 = vmatpush.msra.mxu0 0.0
    %2753 = vmatpush.msra.mxu0 0.0
    %2754 = vmatpush.msra.mxu0 0.0
    %2755 = vmatpush.msra.mxu0 0.0
    %2756 = vmatpush.msra.mxu0 %v2711
    %2757 = vmatpush.msra.mxu0 %v2710
    %2758 = vmatpush.msra.mxu0 %v2709
    %2759 = vmatpush.msra.mxu0 %v2708
    %2760 = vmatmul.f32.gmra.mxu0 %v2742
    %v2761 = vpop.f32.mrf.mxu0
    %v2762 = vadd.f32 %v2739, %v2761
    %2763 = vdwg.mxu0
    %v2764 = vld [vmem:[%s18] sm:$0x1]
    %v2766 = vperm.slane %v2764, 0
    %v2768 = vadd.f32 %v2762, %v2766
    %vm2769 = vcmask 33792
    %v2770 = vsel %vm2769, %v2768, -inf
    %2771 = vmax.xlane.f32.xlu0 %v2770
    %v2772 = vpop.xlane.xlu0 %2771
    %v2773 = vsub.f32 %v2768, %v2772
    %v2774 = vmul.f32 %v2773, 1.442695
    %v2775 = vpow.pop %v2774
    %v2776 = vsel %vm2769, %v2775, 0.0
    %2777 = vadd.xlane.f32.xlu0 %v2776
    %v2778 = vpop.xlane.xlu0 %2777
    %v2779 = vlog2.pop %v2778
    %v2780 = vmul.f32 %v2779, 0.6931472
    %v2781 = vsub.f32 %v2773, %v2780
    %2782 = vst.msk [vmem:[#allocation2] sm:$0x3] %vm2769, %v2781
    // Predicated region
    $region78: #{mlstm_fcn_forward.1} parent=1 // pred_check
      _
    $region79: #{mlstm_fcn_forward.1} parent=1 // pred_check_branch
      %2784 = sbr.rel (0) target = $region81
    $region80: #{mlstm_fcn_forward.1} parent=1 // pred_region
      %2786 = vsyncadd [#allocation3], 0
      %s2788 = sshll.u32 [#allocation2], 4
      %s2789 = int_to_ptr.vmem [resolvable:$true] %s2788
      %s2790 = sshll.u32 %s19, 4
      %s2791 = int_to_ptr.hbm [resolvable:$true] %s2790
      %2793 = dma.vmem_to_hbm [thread:$0]  %s2789, 32, %s2791, [#allocation3]
    $region81: #{mlstm_fcn_forward.1} parent=1 // pred_fallthru
      _
    // Predicated region
    $region82: #{mlstm_fcn_forward.1} parent=1 // pred_check
      _
    $region83: #{mlstm_fcn_forward.1} parent=1 // pred_check_branch
      %2795 = sbr.rel (0) target = $region85
    $region84: #{mlstm_fcn_forward.1} parent=1 // pred_region
      %2797 = dma.done [#allocation3], 32
    $region85: #{mlstm_fcn_forward.1} parent=1 // pred_fallthru
      _
    %2798 = vsyncpa [#allocation3], 1

</llo_original>
